<compile_context>
chip_gen: v5e
topology: v5e:2x2
jax: 0.10.0
libtpu: 0.0.40
codegen_flags: <defaults>
</compile_context>

<pallas_src>
import functools
import math

import jax
import jax.numpy as jnp
from jax.experimental import pallas as pl
from jax.experimental.pallas import tpu as pltpu


_LPAD = 8  # left pad of the scratch: keeps the interior store sublane-aligned


def _silu_f32(y):
    # y * sigmoid(y); the reciprocal rides the EUP slot (approx vrcp).
    return y * pl.reciprocal(1.0 + jnp.exp(-y), approx=True)


# ---------------------------------------------------------------------------
# Fused Bottleneck kernel
# ---------------------------------------------------------------------------

def _bottleneck_kernel(x_ref, w1_ref, b1_ref, w2_ref, b2_ref, o_ref, pad_ref,
                       *, H, W, C_hidden, C2, add):
    C1 = x_ref.shape[-1]
    W_pad = pad_ref.shape[1]

    x2d = x_ref[0].reshape(H * W, C1)                       # (H*W, C1) f32

    # ---- cv1: 1x1 conv (+ folded BN) + SiLU, bf16 MXU operands -------------
    y1 = jnp.dot(x2d.astype(jnp.bfloat16), w1_ref[...],
                 preferred_element_type=jnp.float32)
    y1 = _silu_f32(y1 + b1_ref[...])                        # f32 (H*W, C_)

    # ---- stage y1 (bf16) in a zero-halo VMEM scratch for the 3x3 conv ------
    # Data occupies rows 1..H, columns _LPAD.._LPAD+W-1 (aligned store).
    # Taps read rows kh..kh+H-1 and columns _LPAD-1+kw.._LPAD-1+kw+W-1, so
    # only rows 0 / H+1 and columns _LPAD-1 / _LPAD+W need zeroing per step
    # (no full-scratch zero pass).
    zrow = jnp.zeros((1, W_pad, C_hidden), pad_ref.dtype)
    pad_ref[0:1, :, :] = zrow
    pad_ref[H + 1:H + 2, :, :] = zrow
    zcol = jnp.zeros((H + 2, 1, C_hidden), pad_ref.dtype)
    pad_ref[:, _LPAD - 1:_LPAD, :] = zcol
    pad_ref[:, _LPAD + W:_LPAD + W + 1, :] = zcol
    pad_ref[1:H + 1, _LPAD:_LPAD + W, :] = (
        y1.astype(pad_ref.dtype).reshape(H, W, C_hidden))

    # ---- cv2: 3x3 conv (+ folded BN) as 3 matmuls of K = 3*C_ ---------------
    # For each kh the three kw taps are concatenated on the channel axis and
    # hit the MXU as one (H*W, 3*C_) @ (3*C_, C2) matmul.
    acc = None
    for kh in range(3):
        taps = jnp.concatenate(
            [pad_ref[kh:kh + H, _LPAD - 1 + kw:_LPAD - 1 + kw + W, :]
             for kw in range(3)],
            axis=-1).reshape(H * W, 3 * C_hidden)
        part = jnp.dot(taps, w2_ref[kh], preferred_element_type=jnp.float32)
        acc = part if acc is None else acc + part

    y2 = _silu_f32(acc + b2_ref[...])                       # f32 (H*W, C2)

    if add:                                                 # static residual flag
        y2 = y2 + x2d

    o_ref[0] = y2.reshape(H, W, C2)


def bottleneck_fused(x_nhwc, w1, b1, w2r, b2, *, add):
    """x: (B,H,W,C1) f32, w1: (C1,C_) bf16, w2r: (3,3*C_,C2) bf16 -> (B,H,W,C2) f32."""
    B, H, W, C1 = x_nhwc.shape
    C_hidden = w1.shape[1]
    C2 = w2r.shape[2]
    # Scratch width: 8-column left pad (aligned store) + W + 1 halo column,
    # rounded up to a multiple of 8 so the (sublane, lane) tiles stay clean.
    W_pad = _LPAD + ((W + 1 + 7) // 8) * 8

    kernel = functools.partial(_bottleneck_kernel, H=H, W=W,
                               C_hidden=C_hidden, C2=C2, add=add)
    return pl.pallas_call(
        kernel,
        out_shape=jax.ShapeDtypeStruct((B, H, W, C2), jnp.float32),
        grid=(B,),
        in_specs=[
            pl.BlockSpec((1, H, W, C1), lambda b: (b, 0, 0, 0)),
            pl.BlockSpec((C1, C_hidden), lambda b: (0, 0)),
            pl.BlockSpec((1, C_hidden), lambda b: (0, 0)),
            pl.BlockSpec((3, 3 * C_hidden, C2), lambda b: (0, 0, 0)),
            pl.BlockSpec((1, C2), lambda b: (0, 0)),
        ],
        out_specs=pl.BlockSpec((1, H, W, C2), lambda b: (b, 0, 0, 0)),
        scratch_shapes=[pltpu.VMEM((H + 2, W_pad, C_hidden), jnp.bfloat16)],
        compiler_params=pltpu.CompilerParams(
            dimension_semantics=("parallel",),
            vmem_limit_bytes=32 * 1024 * 1024),
    )(x_nhwc, w1, b1.reshape(1, C_hidden), w2r, b2.reshape(1, C2))


# ---------------------------------------------------------------------------
# Parameter init: PyTorch-style Conv2d(bias=False) + BatchNorm2d folded
# ---------------------------------------------------------------------------

def _fold_conv_bn(key, cin, cout, k):
    """Deterministic init; BN (eval mode, running stats) folded into the conv."""
    kw, kg, kb, km, kv = jax.random.split(key, 5)
    bound = 1.0 / math.sqrt(cin * k * k)
    w_pt = jax.random.uniform(kw, (cout, cin, k, k), jnp.float32, -bound, bound)
    gamma = jax.random.uniform(kg, (cout,), jnp.float32, 0.5, 1.5)
    beta = jax.random.uniform(kb, (cout,), jnp.float32, -0.1, 0.1)
    mean = jax.random.uniform(km, (cout,), jnp.float32, -0.1, 0.1)
    var = jax.random.uniform(kv, (cout,), jnp.float32, 0.5, 1.5)
    scale = gamma / jnp.sqrt(var + 1e-5)
    w = w_pt * scale[:, None, None, None]
    b = beta - mean * scale
    return jnp.transpose(w, (2, 3, 1, 0)), b       # (k, k, cin, cout), (cout,)


class BottleneckPallas:
    """Pallas port of Bottleneck.forward (inference: BN uses running stats)."""
    # TODO(synk): BatchNorm2d training-mode batch statistics are not modeled;
    #             eval-mode running stats are folded into the conv weights.

    def __init__(self, key, c1, c2, shortcut=True, g=1, e=0.5):
        # TODO(synk): grouped conv (g > 1) not implemented; Bottleneck default g=1.
        assert g == 1, "grouped convolution not implemented"
        c_ = int(c2 * e)
        k1, k2 = jax.random.split(key)
        w1, self.b1 = _fold_conv_bn(k1, c1, c_, 1)              # cv1: 1x1, pad 0
        self.w1 = w1.reshape(c1, c_).astype(jnp.bfloat16)       # MXU-native dtype
        w2, self.b2 = _fold_conv_bn(k2, c_, c2, 3)              # cv2: 3x3, pad 1
        self.w2 = w2.astype(jnp.bfloat16)                       # (3,3,c_,c2) HWIO
        self.w2r = self.w2.reshape(3, 3 * c_, c2)               # kw taps on channels
        self.add = bool(shortcut and c1 == c2)

    def __call__(self, x_nchw):
        # For multi-block models keep activations NHWC end-to-end and pay the
        # layout conversion once at the model boundary; per-call transposes
        # are kept here only to honor the PyTorch NCHW interface.
        x = jnp.transpose(x_nchw, (0, 2, 3, 1))                 # NCHW -> NHWC
        y = bottleneck_fused(x, self.w1, self.b1, self.w2r, self.b2,
                             add=self.add)
        return jnp.transpose(y, (0, 3, 1, 2))                   # NHWC -> NCHW


# ---------------------------------------------------------------------------
# Pure-JAX reference (same bf16 weights, f32 math) for the correctness check
# ---------------------------------------------------------------------------

def _bottleneck_ref_nhwc(x, w1, b1, w2, b2, add):
    c1, c_ = w1.shape
    w1f = w1.astype(jnp.float32)
    w2f = w2.astype(jnp.float32)
    y = jax.lax.conv_general_dilated(
        x, w1f.reshape(1, 1, c1, c_), (1, 1), "VALID",
        dimension_numbers=("NHWC", "HWIO", "NHWC"),
        precision=jax.lax.Precision.HIGHEST) + b1
    y = y * jax.nn.sigmoid(y)
    z = jax.lax.conv_general_dilated(
        y, w2f, (1, 1), ((1, 1), (1, 1)),
        dimension_numbers=("NHWC", "HWIO", "NHWC"),
        precision=jax.lax.Precision.HIGHEST) + b2
    z = z * jax.nn.sigmoid(z)
    return x + z if add else z


if __name__ == "__main__":
    # Small, lane-friendly shapes: c1 == c2 so the shortcut path is exercised.
    B, C1, C2, H, W = 2, 128, 128, 16, 16                   # c_ = 64
    key = jax.random.PRNGKey(0)
    kx, kp = jax.random.split(key)
    x = jax.random.normal(kx, (B, C1, H, W), jnp.float32)   # NCHW (PyTorch layout)

    model = BottleneckPallas(kp, C1, C2, shortcut=True, g=1, e=0.5)
    out = jax.block_until_ready(model(x))
    assert out.shape == (B, C2, H, W), out.shape
    assert bool(jnp.all(jnp.isfinite(out)))

    ref = _bottleneck_ref_nhwc(jnp.transpose(x, (0, 2, 3, 1)),
                               model.w1, model.b1, model.w2, model.b2, model.add)
    ref = jnp.transpose(ref, (0, 3, 1, 2))
    err_max = float(jnp.max(jnp.abs(out - ref)))
    err_mean = float(jnp.mean(jnp.abs(out - ref)))
    # Deliberate tolerance budget: bf16 activations into two MXU matmuls
    # (K=128 and 3x K=192) plus approx-reciprocal SiLU, against an f32
    # reference sharing the same bf16 weights. An all-f32 kernel would be
    # ~1e-4; the bf16 path lands around ~1e-2 max / ~2e-3 mean.
    assert err_max < 4e-2, f"max abs error vs reference = {err_max}"
    assert err_mean < 1e-2, f"mean abs error vs reference = {err_mean}"
    print("KERNEL_OK")
</pallas_src>

<mosaic_0001>
module attributes {stable_mosaic.version = 11 : i64} {
  func.func @_bottleneck_kernel(%arg0: i32, %arg1: memref<1x16x16x128xf32, #tpu.memory_space<vmem>>, %arg2: memref<128x64xbf16, #tpu.memory_space<vmem>>, %arg3: memref<1x64xf32, #tpu.memory_space<vmem>>, %arg4: memref<3x192x128xbf16, #tpu.memory_space<vmem>>, %arg5: memref<1x128xf32, #tpu.memory_space<vmem>>, %arg6: memref<1x16x16x128xf32, #tpu.memory_space<vmem>>, %arg7: memref<18x32x64xbf16, #tpu.memory_space<vmem>>) attributes {dimension_semantics = [#tpu.dimension_semantics<parallel>], iteration_bounds = array<i64: 2>, scalar_prefetch = 0 : i64, scratch_operands = 1 : i64, tpu.core_type = #tpu.core_type<tc>, window_params = [{transform_indices = @transform_0, window_bounds = array<i64: 1, 16, 16, 128>}, {pipeline_mode = #tpu.pipeline_mode<synchronous>, transform_indices = @transform_1, window_bounds = array<i64: 128, 64>}, {pipeline_mode = #tpu.pipeline_mode<synchronous>, transform_indices = @transform_2, window_bounds = array<i64: 1, 64>}, {pipeline_mode = #tpu.pipeline_mode<synchronous>, transform_indices = @transform_3, window_bounds = array<i64: 3, 192, 128>}, {pipeline_mode = #tpu.pipeline_mode<synchronous>, transform_indices = @transform_4, window_bounds = array<i64: 1, 128>}, {transform_indices = @transform_5, window_bounds = array<i64: 1, 16, 16, 128>}]} {
    %c0 = arith.constant 0 : index
    %c0_0 = arith.constant 0 : index
    %c0_1 = arith.constant 0 : index
    %c0_2 = arith.constant 0 : index
    %0 = vector.load %arg1[%c0, %c0_0, %c0_1, %c0_2] : memref<1x16x16x128xf32, #tpu.memory_space<vmem>>, vector<1x16x16x128xf32>
    %1 = vector.shape_cast %0 : vector<1x16x16x128xf32> to vector<16x16x128xf32>
    %2 = vector.shape_cast %1 : vector<16x16x128xf32> to vector<256x128xf32>
    %3 = arith.truncf %2 : vector<256x128xf32> to vector<256x128xbf16>
    %c0_3 = arith.constant 0 : index
    %c0_4 = arith.constant 0 : index
    %4 = vector.load %arg2[%c0_3, %c0_4] : memref<128x64xbf16, #tpu.memory_space<vmem>>, vector<128x64xbf16>
    %cst = arith.constant dense<0.000000e+00> : vector<256x64xf32>
    %5 = tpu.matmul %3, %4, %cst {dimension_numbers = #tpu.dot_dimension_numbers<[1], [0], [0], [1], [0, 0, 1, 1], [], []>} : vector<256x128xbf16>, vector<128x64xbf16>, vector<256x64xf32> -> vector<256x64xf32>
    %c0_5 = arith.constant 0 : index
    %c0_6 = arith.constant 0 : index
    %6 = vector.load %arg3[%c0_5, %c0_6] : memref<1x64xf32, #tpu.memory_space<vmem>>, vector<1x64xf32>
    %7 = vector.broadcast %6 : vector<1x64xf32> to vector<256x64xf32>
    %8 = arith.addf %5, %7 : vector<256x64xf32>
    %cst_7 = arith.constant 0.000000e+00 : f32
    %9 = vector.broadcast %cst_7 : f32 to vector<256x64xf32>
    %10 = arith.subf %9, %8 : vector<256x64xf32>
    %11 = math.exp %10 : vector<256x64xf32>
    %cst_8 = arith.constant 1.000000e+00 : f32
    %12 = vector.broadcast %cst_8 : f32 to vector<256x64xf32>
    %13 = arith.addf %12, %11 : vector<256x64xf32>
    %14 = tpu.reciprocal %13 {approx = true} : vector<256x64xf32> -> vector<256x64xf32>
    %15 = arith.mulf %8, %14 : vector<256x64xf32>
    %cst_9 = arith.constant 0.000000e+00 : bf16
    %16 = vector.broadcast %cst_9 : bf16 to vector<1x32x64xbf16>
    %c0_10 = arith.constant 0 : index
    %c0_11 = arith.constant 0 : index
    %c0_12 = arith.constant 0 : index
    %17 = vector.load %arg7[%c0_10, %c0_11, %c0_12] : memref<18x32x64xbf16, #tpu.memory_space<vmem>>, vector<1x32x64xbf16>
    tpu.vector_store %arg7[%c0_10, %c0_11, %c0_12], %16 {strides = array<i32>} : memref<18x32x64xbf16, #tpu.memory_space<vmem>>, vector<1x32x64xbf16>,
    %c17 = arith.constant 17 : index
    %c0_13 = arith.constant 0 : index
    %c0_14 = arith.constant 0 : index
    %18 = vector.load %arg7[%c17, %c0_13, %c0_14] : memref<18x32x64xbf16, #tpu.memory_space<vmem>>, vector<1x32x64xbf16>
    tpu.vector_store %arg7[%c17, %c0_13, %c0_14], %16 {strides = array<i32>} : memref<18x32x64xbf16, #tpu.memory_space<vmem>>, vector<1x32x64xbf16>,
    %cst_15 = arith.constant 0.000000e+00 : bf16
    %19 = vector.broadcast %cst_15 : bf16 to vector<18x1x64xbf16>
    %c0_16 = arith.constant 0 : index
    %c7 = arith.constant 7 : index
    %c0_17 = arith.constant 0 : index
    %20 = vector.load %arg7[%c0_16, %c7, %c0_17] : memref<18x32x64xbf16, #tpu.memory_space<vmem>>, vector<18x1x64xbf16>
    tpu.vector_store %arg7[%c0_16, %c7, %c0_17], %19 {strides = array<i32>} : memref<18x32x64xbf16, #tpu.memory_space<vmem>>, vector<18x1x64xbf16>,
    %c0_18 = arith.constant 0 : index
    %c24 = arith.constant 24 : index
    %c0_19 = arith.constant 0 : index
    %21 = vector.load %arg7[%c0_18, %c24, %c0_19] : memref<18x32x64xbf16, #tpu.memory_space<vmem>>, vector<18x1x64xbf16>
    tpu.vector_store %arg7[%c0_18, %c24, %c0_19], %19 {strides = array<i32>} : memref<18x32x64xbf16, #tpu.memory_space<vmem>>, vector<18x1x64xbf16>,
    %22 = arith.truncf %15 : vector<256x64xf32> to vector<256x64xbf16>
    %23 = vector.shape_cast %22 : vector<256x64xbf16> to vector<16x16x64xbf16>
    %c1 = arith.constant 1 : index
    %c8 = arith.constant 8 : index
    %c0_20 = arith.constant 0 : index
    %24 = vector.load %arg7[%c1, %c8, %c0_20] : memref<18x32x64xbf16, #tpu.memory_space<vmem>>, vector<16x16x64xbf16>
    tpu.vector_store %arg7[%c1, %c8, %c0_20], %23 {strides = array<i32>} : memref<18x32x64xbf16, #tpu.memory_space<vmem>>, vector<16x16x64xbf16>,
    %c0_21 = arith.constant 0 : index
    %c7_22 = arith.constant 7 : index
    %c0_23 = arith.constant 0 : index
    %25 = vector.load %arg7[%c0_21, %c7_22, %c0_23] : memref<18x32x64xbf16, #tpu.memory_space<vmem>>, vector<16x16x64xbf16>
    %c0_24 = arith.constant 0 : index
    %c8_25 = arith.constant 8 : index
    %c0_26 = arith.constant 0 : index
    %26 = vector.load %arg7[%c0_24, %c8_25, %c0_26] : memref<18x32x64xbf16, #tpu.memory_space<vmem>>, vector<16x16x64xbf16>
    %c0_27 = arith.constant 0 : index
    %c9 = arith.constant 9 : index
    %c0_28 = arith.constant 0 : index
    %27 = vector.load %arg7[%c0_27, %c9, %c0_28] : memref<18x32x64xbf16, #tpu.memory_space<vmem>>, vector<16x16x64xbf16>
    %28 = tpu.concatenate %25, %26, %27 in 2 : vector<16x16x64xbf16>, vector<16x16x64xbf16>, vector<16x16x64xbf16> -> vector<16x16x192xbf16>
    %29 = vector.shape_cast %28 : vector<16x16x192xbf16> to vector<256x192xbf16>
    %c0_29 = arith.constant 0 : index
    %c0_30 = arith.constant 0 : index
    %c0_31 = arith.constant 0 : index
    %30 = vector.load %arg4[%c0_29, %c0_30, %c0_31] : memref<3x192x128xbf16, #tpu.memory_space<vmem>>, vector<1x192x128xbf16>
    %31 = vector.shape_cast %30 : vector<1x192x128xbf16> to vector<192x128xbf16>
    %cst_32 = arith.constant dense<0.000000e+00> : vector<256x128xf32>
    %32 = tpu.matmul %29, %31, %cst_32 {dimension_numbers = #tpu.dot_dimension_numbers<[1], [0], [0], [1], [0, 0, 1, 1], [], []>} : vector<256x192xbf16>, vector<192x128xbf16>, vector<256x128xf32> -> vector<256x128xf32>
    %c1_33 = arith.constant 1 : index
    %c7_34 = arith.constant 7 : index
    %c0_35 = arith.constant 0 : index
    %33 = vector.load %arg7[%c1_33, %c7_34, %c0_35] : memref<18x32x64xbf16, #tpu.memory_space<vmem>>, vector<16x16x64xbf16>
    %c1_36 = arith.constant 1 : index
    %c8_37 = arith.constant 8 : index
    %c0_38 = arith.constant 0 : index
    %34 = vector.load %arg7[%c1_36, %c8_37, %c0_38] : memref<18x32x64xbf16, #tpu.memory_space<vmem>>, vector<16x16x64xbf16>
    %c1_39 = arith.constant 1 : index
    %c9_40 = arith.constant 9 : index
    %c0_41 = arith.constant 0 : index
    %35 = vector.load %arg7[%c1_39, %c9_40, %c0_41] : memref<18x32x64xbf16, #tpu.memory_space<vmem>>, vector<16x16x64xbf16>
    %36 = tpu.concatenate %33, %34, %35 in 2 : vector<16x16x64xbf16>, vector<16x16x64xbf16>, vector<16x16x64xbf16> -> vector<16x16x192xbf16>
    %37 = vector.shape_cast %36 : vector<16x16x192xbf16> to vector<256x192xbf16>
    %c1_42 = arith.constant 1 : index
    %c0_43 = arith.constant 0 : index
    %c0_44 = arith.constant 0 : index
    %38 = vector.load %arg4[%c1_42, %c0_43, %c0_44] : memref<3x192x128xbf16, #tpu.memory_space<vmem>>, vector<1x192x128xbf16>
    %39 = vector.shape_cast %38 : vector<1x192x128xbf16> to vector<192x128xbf16>
    %cst_45 = arith.constant dense<0.000000e+00> : vector<256x128xf32>
    %40 = tpu.matmul %37, %39, %cst_45 {dimension_numbers = #tpu.dot_dimension_numbers<[1], [0], [0], [1], [0, 0, 1, 1], [], []>} : vector<256x192xbf16>, vector<192x128xbf16>, vector<256x128xf32> -> vector<256x128xf32>
    %41 = arith.addf %32, %40 : vector<256x128xf32>
    %c2 = arith.constant 2 : index
    %c7_46 = arith.constant 7 : index
    %c0_47 = arith.constant 0 : index
    %42 = vector.load %arg7[%c2, %c7_46, %c0_47] : memref<18x32x64xbf16, #tpu.memory_space<vmem>>, vector<16x16x64xbf16>
    %c2_48 = arith.constant 2 : index
    %c8_49 = arith.constant 8 : index
    %c0_50 = arith.constant 0 : index
    %43 = vector.load %arg7[%c2_48, %c8_49, %c0_50] : memref<18x32x64xbf16, #tpu.memory_space<vmem>>, vector<16x16x64xbf16>
    %c2_51 = arith.constant 2 : index
    %c9_52 = arith.constant 9 : index
    %c0_53 = arith.constant 0 : index
    %44 = vector.load %arg7[%c2_51, %c9_52, %c0_53] : memref<18x32x64xbf16, #tpu.memory_space<vmem>>, vector<16x16x64xbf16>
    %45 = tpu.concatenate %42, %43, %44 in 2 : vector<16x16x64xbf16>, vector<16x16x64xbf16>, vector<16x16x64xbf16> -> vector<16x16x192xbf16>
    %46 = vector.shape_cast %45 : vector<16x16x192xbf16> to vector<256x192xbf16>
    %c2_54 = arith.constant 2 : index
    %c0_55 = arith.constant 0 : index
    %c0_56 = arith.constant 0 : index
    %47 = vector.load %arg4[%c2_54, %c0_55, %c0_56] : memref<3x192x128xbf16, #tpu.memory_space<vmem>>, vector<1x192x128xbf16>
    %48 = vector.shape_cast %47 : vector<1x192x128xbf16> to vector<192x128xbf16>
    %cst_57 = arith.constant dense<0.000000e+00> : vector<256x128xf32>
    %49 = tpu.matmul %46, %48, %cst_57 {dimension_numbers = #tpu.dot_dimension_numbers<[1], [0], [0], [1], [0, 0, 1, 1], [], []>} : vector<256x192xbf16>, vector<192x128xbf16>, vector<256x128xf32> -> vector<256x128xf32>
    %50 = arith.addf %41, %49 : vector<256x128xf32>
    %c0_58 = arith.constant 0 : index
    %c0_59 = arith.constant 0 : index
    %51 = vector.load %arg5[%c0_58, %c0_59] : memref<1x128xf32, #tpu.memory_space<vmem>>, vector<1x128xf32>
    %52 = vector.broadcast %51 : vector<1x128xf32> to vector<256x128xf32>
    %53 = arith.addf %50, %52 : vector<256x128xf32>
    %cst_60 = arith.constant 0.000000e+00 : f32
    %54 = vector.broadcast %cst_60 : f32 to vector<256x128xf32>
    %55 = arith.subf %54, %53 : vector<256x128xf32>
    %56 = math.exp %55 : vector<256x128xf32>
    %cst_61 = arith.constant 1.000000e+00 : f32
    %57 = vector.broadcast %cst_61 : f32 to vector<256x128xf32>
    %58 = arith.addf %57, %56 : vector<256x128xf32>
    %59 = tpu.reciprocal %58 {approx = true} : vector<256x128xf32> -> vector<256x128xf32>
    %60 = arith.mulf %53, %59 : vector<256x128xf32>
    %61 = arith.addf %60, %2 : vector<256x128xf32>
    %62 = vector.shape_cast %61 : vector<256x128xf32> to vector<16x16x128xf32>
    %c0_62 = arith.constant 0 : index
    %c0_63 = arith.constant 0 : index
    %c0_64 = arith.constant 0 : index
    %c0_65 = arith.constant 0 : index
    %63 = vector.load %arg6[%c0_62, %c0_63, %c0_64, %c0_65] : memref<1x16x16x128xf32, #tpu.memory_space<vmem>>, vector<1x16x16x128xf32>
    %64 = vector.shape_cast %63 : vector<1x16x16x128xf32> to vector<16x16x128xf32>
    %65 = vector.shape_cast %62 : vector<16x16x128xf32> to vector<1x16x16x128xf32>
    tpu.vector_store %arg6[%c0_62, %c0_63, %c0_64, %c0_65], %65 {strides = array<i32>} : memref<1x16x16x128xf32, #tpu.memory_space<vmem>>, vector<1x16x16x128xf32>,
    return
  }
  func.func @transform_0(%arg0: i32) -> (i32, i32, i32, i32) {
    %c0_i32 = arith.constant 0 : i32
    %c0_i32_0 = arith.constant 0 : i32
    %c0_i32_1 = arith.constant 0 : i32
    %c0_i32_2 = arith.constant 0 : i32
    return %arg0, %c0_i32, %c0_i32_0, %c0_i32_1 : i32, i32, i32, i32
  }
  func.func @transform_1(%arg0: i32) -> (i32, i32) {
    %c0_i32 = arith.constant 0 : i32
    %c0_i32_0 = arith.constant 0 : i32
    %c0_i32_1 = arith.constant 0 : i32
    return %c0_i32, %c0_i32_0 : i32, i32
  }
  func.func @transform_2(%arg0: i32) -> (i32, i32) {
    %c0_i32 = arith.constant 0 : i32
    %c0_i32_0 = arith.constant 0 : i32
    %c0_i32_1 = arith.constant 0 : i32
    return %c0_i32, %c0_i32_0 : i32, i32
  }
  func.func @transform_3(%arg0: i32) -> (i32, i32, i32) {
    %c0_i32 = arith.constant 0 : i32
    %c0_i32_0 = arith.constant 0 : i32
    %c0_i32_1 = arith.constant 0 : i32
    %c0_i32_2 = arith.constant 0 : i32
    return %c0_i32, %c0_i32_0, %c0_i32_1 : i32, i32, i32
  }
  func.func @transform_4(%arg0: i32) -> (i32, i32) {
    %c0_i32 = arith.constant 0 : i32
    %c0_i32_0 = arith.constant 0 : i32
    %c0_i32_1 = arith.constant 0 : i32
    return %c0_i32, %c0_i32_0 : i32, i32
  }
  func.func @transform_5(%arg0: i32) -> (i32, i32, i32, i32) {
    %c0_i32 = arith.constant 0 : i32
    %c0_i32_0 = arith.constant 0 : i32
    %c0_i32_1 = arith.constant 0 : i32
    %c0_i32_2 = arith.constant 0 : i32
    return %arg0, %c0_i32, %c0_i32_0, %c0_i32_1 : i32, i32, i32, i32
  }
}

</mosaic_0001>

<llo_original>
// kernel: tpu_custom_call.1
$region0: #{tpu_custom_call.1}
  #allocation0 [shape = 'u32[]', space=smem, size = 0x4, offset = 0x4, fixed_abs, tag = 'smem constant byte address 0x4 - core index']
  #allocation1 [shape = 'u32[72,128]{1,0:T(1,128)}', space=vmem, size = 0x9000, scoped, tag = 'internal scratch']
  #allocation2 [shape = 'bf16[18,32,64]{2,1,0:T(8,128)(2,1)}', space=vmem, size = 0x24000, scoped, tag = 'scratch operand']
  %s0 = inlined_call_operand.hbm [shape: f32[2,16,16,128], index: 0, kind: input, shape index: {}]
  %s1 = inlined_call_operand.vmem [shape: bf16[128,64], index: 1, kind: input, shape index: {}]
  %s2 = inlined_call_operand.vmem [shape: f32[1,64], index: 2, kind: input, shape index: {}]
  %s3 = inlined_call_operand.hbm [shape: bf16[3,192,128], index: 3, kind: input, shape index: {}]
  %s4 = inlined_call_operand.vmem [shape: f32[1,128], index: 4, kind: input, shape index: {}]
  %s5 = inlined_call_operand.hbm [shape: f32[2,16,16,128], index: 5, kind: output, shape index: {}]
  %s6 = sld [smem:[#allocation0]]
  $region61: #{tpu_custom_call.1} parent=0
    _
  %s8 = ssub.s32 1, %s6
  %s9 = scalar_select 0, %s8, %s6
  $region1: #{tpu_custom_call.1} parent=0
    #allocation3 [shape = 'u8[262144]{0}', space=vmem, size = 0x40000, scoped, tag = 'input window, operand 0']
    #allocation4 [shape = 's32[2]{0}', space=sflag, size = 0x8, scoped, tag = 'scoped memory for tpu_custom_call.1']
    #allocation5 [shape = 's32[2]{0}', space=sflag, size = 0x8, scoped, tag = 'scoped memory for tpu_custom_call.1']
    #allocation6 [shape = 'u8[147456]{0}', space=vmem, size = 0x24000, scoped, tag = 'input window, operand 3, single buffered']
    #allocation7 [shape = 's32[1]{0}', space=sflag, size = 0x4, scoped, tag = 'scoped memory for tpu_custom_call.1']
    #allocation8 [shape = 'u8[262144]{0}', space=vmem, size = 0x40000, scoped, tag = 'output window, operand 0']
    %10 = vsyncpa [#allocation4], 0
    %s11 = scalar_lea.sflag [#allocation4], 1
    %12 = vsyncpa %s11, 0
    %13 = vsyncpa [#allocation7], 0
    %14 = vsyncpa [#allocation5], 0
    %s15 = scalar_lea.sflag [#allocation5], 1
    %16 = vsyncpa %s15, 0
    loop: start=0, step=1, limit=4
    $region2: #{tpu_custom_call.1} parent=1 // loop_pre_header
      _
    $region3: #{tpu_custom_call.1} parent=1 // loop_header
      %s18 = sphi 0, %s22
      %p19 = scmp.ge.s32.totalorder %s18, 4
      %s28 = sphi 0, %s30
      %s31 = sphi 0, %s28
      %s32 = sphi 0, %s31
      %s48 = sphi 0, %s32
      %s52 = sphi 0, %s52
      %s54 = sphi 0, %s52
      %s55 = sphi 0, %s54
      %s69 = sphi 0, %s55
      %s73 = sphi 0, %s73
      %s75 = sphi 0, %s73
      %s76 = sphi 0, %s75
      %s90 = sphi 0, %s76
      %s94 = sphi 0, %s94
      %s96 = sphi 0, %s94
      %s97 = sphi 0, %s96
      %s111 = sphi 0, %s97
      %s115 = sphi 0, %s115
      %s117 = sphi 0, %s115
      %s118 = sphi 0, %s117
      %s132 = sphi 0, %s118
      %s138 = sphi 0, %s140
      %s141 = sphi 0, %s138
      %s142 = sphi 0, %s141
      %s158 = sphi 0, %s142
    $region4: #{tpu_custom_call.1} parent=1 // loop_header_branch
      %21 = sbr.rel (%p19) target = $region8
    $region5: #{tpu_custom_call.1} parent=1 // loop_body
      %s23 = ssub.s32 %s18, 1
      %s24 = ssub.s32 %s18, 2
      %s25 = sadd.s32 %s18, 1
      %s26 = ssub.s32 %s18, %s25
      %p27 = scmp.eq.s32.totalorder %s26, 0
      %s29 = sadd.s32 %s28, 1
      %s30 = scalar_select %p27, %s28, %s29
      %p33 = pneg %p27
      %p34 = scmp.eq.s32.totalorder %s18, 1
      %p35 = por %p33, %p34
      %p36 = scmp.ne.s32.totalorder %s28, %s31
      %p37 = scmp.eq.s32.totalorder %s18, 0
      %p38 = por %p36, %p37
      %p39 = scmp.ne.s32.totalorder %s28, %s31
      %p40 = scmp.eq.s32.totalorder %s23, 1
      %p41 = por %p39, %p40
      %p42 = scmp.ne.s32.totalorder %s31, %s32
      %p43 = scmp.eq.s32.totalorder %s23, 0
      %p44 = por %p42, %p43
      %p45 = scmp.ne.s32.totalorder %s31, %s32
      %p46 = scmp.eq.s32.totalorder %s24, 1
      %p47 = por %p45, %p46
      %p49 = scmp.ne.s32.totalorder %s32, %s48
      %p50 = scmp.eq.s32.totalorder %s24, 0
      %p51 = por %p49, %p50
      %s53 = sadd.s32 %s52, 1
      %p56 = scmp.eq.s32.totalorder %s18, 1
      %p57 = scmp.ne.s32.totalorder %s52, %s54
      %p58 = scmp.eq.s32.totalorder %s18, 0
      %p59 = por %p57, %p58
      %p60 = scmp.ne.s32.totalorder %s52, %s54
      %p61 = scmp.eq.s32.totalorder %s23, 1
      %p62 = por %p60, %p61
      %p63 = scmp.ne.s32.totalorder %s54, %s55
      %p64 = scmp.eq.s32.totalorder %s23, 0
      %p65 = por %p63, %p64
      %p66 = scmp.ne.s32.totalorder %s54, %s55
      %p67 = scmp.eq.s32.totalorder %s24, 1
      %p68 = por %p66, %p67
      %p70 = scmp.ne.s32.totalorder %s55, %s69
      %p71 = scmp.eq.s32.totalorder %s24, 0
      %p72 = por %p70, %p71
      %s74 = sadd.s32 %s73, 1
      %p77 = scmp.eq.s32.totalorder %s18, 1
      %p78 = scmp.ne.s32.totalorder %s73, %s75
      %p79 = scmp.eq.s32.totalorder %s18, 0
      %p80 = por %p78, %p79
      %p81 = scmp.ne.s32.totalorder %s73, %s75
      %p82 = scmp.eq.s32.totalorder %s23, 1
      %p83 = por %p81, %p82
      %p84 = scmp.ne.s32.totalorder %s75, %s76
      %p85 = scmp.eq.s32.totalorder %s23, 0
      %p86 = por %p84, %p85
      %p87 = scmp.ne.s32.totalorder %s75, %s76
      %p88 = scmp.eq.s32.totalorder %s24, 1
      %p89 = por %p87, %p88
      %p91 = scmp.ne.s32.totalorder %s76, %s90
      %p92 = scmp.eq.s32.totalorder %s24, 0
      %p93 = por %p91, %p92
      %s95 = sadd.s32 %s94, 1
      %p98 = scmp.eq.s32.totalorder %s18, 1
      %p99 = scmp.ne.s32.totalorder %s94, %s96
      %p100 = scmp.eq.s32.totalorder %s18, 0
      %p101 = por %p99, %p100
      %p102 = scmp.ne.s32.totalorder %s94, %s96
      %p103 = scmp.eq.s32.totalorder %s23, 1
      %p104 = por %p102, %p103
      %p105 = scmp.ne.s32.totalorder %s96, %s97
      %p106 = scmp.eq.s32.totalorder %s23, 0
      %p107 = por %p105, %p106
      %p108 = scmp.ne.s32.totalorder %s96, %s97
      %p109 = scmp.eq.s32.totalorder %s24, 1
      %p110 = por %p108, %p109
      %p112 = scmp.ne.s32.totalorder %s97, %s111
      %p113 = scmp.eq.s32.totalorder %s24, 0
      %p114 = por %p112, %p113
      %s116 = sadd.s32 %s115, 1
      %p119 = scmp.eq.s32.totalorder %s18, 1
      %p120 = scmp.ne.s32.totalorder %s115, %s117
      %p121 = scmp.eq.s32.totalorder %s18, 0
      %p122 = por %p120, %p121
      %p123 = scmp.ne.s32.totalorder %s115, %s117
      %p124 = scmp.eq.s32.totalorder %s23, 1
      %p125 = por %p123, %p124
      %p126 = scmp.ne.s32.totalorder %s117, %s118
      %p127 = scmp.eq.s32.totalorder %s23, 0
      %p128 = por %p126, %p127
      %p129 = scmp.ne.s32.totalorder %s117, %s118
      %p130 = scmp.eq.s32.totalorder %s24, 1
      %p131 = por %p129, %p130
      %p133 = scmp.ne.s32.totalorder %s118, %s132
      %p134 = scmp.eq.s32.totalorder %s24, 0
      %p135 = por %p133, %p134
      %s136 = ssub.s32 %s18, %s25
      %p137 = scmp.eq.s32.totalorder %s136, 0
      %s139 = sadd.s32 %s138, 1
      %s140 = scalar_select %p137, %s138, %s139
      %p143 = pneg %p137
      %p144 = scmp.eq.s32.totalorder %s18, 1
      %p145 = por %p143, %p144
      %p146 = scmp.ne.s32.totalorder %s138, %s141
      %p147 = scmp.eq.s32.totalorder %s18, 0
      %p148 = por %p146, %p147
      %p149 = scmp.ne.s32.totalorder %s138, %s141
      %p150 = scmp.eq.s32.totalorder %s23, 1
      %p151 = por %p149, %p150
      %p152 = scmp.ne.s32.totalorder %s141, %s142
      %p153 = scmp.eq.s32.totalorder %s23, 0
      %p154 = por %p152, %p153
      %p155 = scmp.ne.s32.totalorder %s141, %s142
      %p156 = scmp.eq.s32.totalorder %s24, 1
      %p157 = por %p155, %p156
      %p159 = scmp.ne.s32.totalorder %s142, %s158
      %p160 = scmp.eq.s32.totalorder %s24, 0
      %p161 = por %p159, %p160
      %p162 = scmp.le.s32.totalorder 1, %s18
      %p163 = scmp.lt.s32.totalorder %s18, 3
      %p164 = pnand %p162, %p163
      %p165 = pneg %p164
      // Predicated region
      $region9: #{tpu_custom_call.1} parent=5 // pred_check
        _
      $region10: #{tpu_custom_call.1} parent=5 // pred_check_branch
        %167 = sbr.rel (%p164) target = $region12
      $region11: #{tpu_custom_call.1} parent=5 // pred_region
        %s168 = ssub.s32 %s18, 1
        // Predicated region
        $region13: #{tpu_custom_call.1} parent=11 // pred_check
          %p169 = pneg %p65
        $region14: #{tpu_custom_call.1} parent=11 // pred_check_branch
          %171 = sbr.rel (%p169) target = $region16
        $region15: #{tpu_custom_call.1} parent=11 // pred_region
          _
        $region16: #{tpu_custom_call.1} parent=11 // pred_fallthru
          _
        // Predicated region
        $region17: #{tpu_custom_call.1} parent=11 // pred_check
          %p172 = pneg %p86
        $region18: #{tpu_custom_call.1} parent=11 // pred_check_branch
          %174 = sbr.rel (%p172) target = $region20
        $region19: #{tpu_custom_call.1} parent=11 // pred_region
          _
        $region20: #{tpu_custom_call.1} parent=11 // pred_fallthru
          _
        // Predicated region
        $region21: #{tpu_custom_call.1} parent=11 // pred_check
          %p175 = pneg %p107
        $region22: #{tpu_custom_call.1} parent=11 // pred_check_branch
          %177 = sbr.rel (%p175) target = $region24
        $region23: #{tpu_custom_call.1} parent=11 // pred_region
          %179 = vsyncadd [#allocation7], 0
          %s180 = sshll.u32 %s3, 4
          %s181 = int_to_ptr.hbm [resolvable:$true] %s180
          %s182 = sshll.u32 [#allocation6], 4
          %s183 = int_to_ptr.vmem [resolvable:$true] %s182
          %188 = dma.hbm_to_vmem [thread:$0]  %s181, 4608, %s183, [#allocation7], 64, 64, 4
        $region24: #{tpu_custom_call.1} parent=11 // pred_fallthru
          _
        // Predicated region
        $region25: #{tpu_custom_call.1} parent=11 // pred_check
          %p189 = pneg %p128
        $region26: #{tpu_custom_call.1} parent=11 // pred_check_branch
          %191 = sbr.rel (%p189) target = $region28
        $region27: #{tpu_custom_call.1} parent=11 // pred_region
          _
        $region28: #{tpu_custom_call.1} parent=11 // pred_fallthru
          _
      $region12: #{tpu_custom_call.1} parent=5 // pred_fallthru
        _
      %p192 = scmp.lt.s32.totalorder %s18, 2
      // Predicated region
      $region29: #{tpu_custom_call.1} parent=5 // pred_check
        %p193 = pneg %p192
      $region30: #{tpu_custom_call.1} parent=5 // pred_check_branch
        %195 = sbr.rel (%p193) target = $region32
      $region31: #{tpu_custom_call.1} parent=5 // pred_region
        // Predicated region
        $region33: #{tpu_custom_call.1} parent=31 // pred_check
          %p196 = pneg %p38
        $region34: #{tpu_custom_call.1} parent=31 // pred_check_branch
          %198 = sbr.rel (%p196) target = $region36
        $region35: #{tpu_custom_call.1} parent=31 // pred_region
          %s199 = sand.u32 %s28, 1
          %s200 = scalar_lea.sflag [#allocation4], %s199
          %s201 = sand.u32 %s28, 1
          %s202 = smul.addr %s201, 256
          %s203 = scalar_lea.vmem [#allocation3], %s202
          %205 = vsyncadd %s200, 0
          %s206 = smul.addr %s18, 32
          %s207 = smul.addr %s206, 8
          %s208 = scalar_lea.hbm %s0, %s207
          %s209 = sshll.u32 %s208, 4
          %s210 = int_to_ptr.hbm [resolvable:$true] %s209
          %s211 = sshll.u32 %s203, 4
          %s212 = int_to_ptr.vmem [resolvable:$true] %s211
          %217 = dma.hbm_to_vmem [thread:$0]  %s210, 4096, %s212, %s200, 128, 128, 8
        $region36: #{tpu_custom_call.1} parent=31 // pred_fallthru
          _
      $region32: #{tpu_custom_call.1} parent=5 // pred_fallthru
        _
      %p218 = scmp.le.s32.totalorder 1, %s18
      %p219 = scmp.lt.s32.totalorder %s18, 3
      %p220 = pnand %p218, %p219
      %p221 = pneg %p220
      // Predicated region
      $region37: #{tpu_custom_call.1} parent=5 // pred_check
        _
      $region38: #{tpu_custom_call.1} parent=5 // pred_check_branch
        %223 = sbr.rel (%p220) target = $region40
      $region39: #{tpu_custom_call.1} parent=5 // pred_region
        %s224 = ssub.s32 %s18, 1
        %s225 = sand.u32 %s31, 1
        %s226 = scalar_lea.sflag [#allocation4], %s225
        %s227 = sand.u32 %s31, 1
        %s228 = smul.addr %s227, 256
        %s229 = scalar_lea.vmem [#allocation3], %s228
        // Predicated region
        $region41: #{tpu_custom_call.1} parent=39 // pred_check
          %p230 = pneg %p44
        $region42: #{tpu_custom_call.1} parent=39 // pred_check_branch
          %232 = sbr.rel (%p230) target = $region44
        $region43: #{tpu_custom_call.1} parent=39 // pred_region
          %234 = dma.done %s226, 4096
        $region44: #{tpu_custom_call.1} parent=39 // pred_fallthru
          _
        // Predicated region
        $region45: #{tpu_custom_call.1} parent=39 // pred_check
          %p235 = pneg %p107
        $region46: #{tpu_custom_call.1} parent=39 // pred_check_branch
          %237 = sbr.rel (%p235) target = $region48
        $region47: #{tpu_custom_call.1} parent=39 // pred_region
          %239 = dma.done [#allocation7], 4608
        $region48: #{tpu_custom_call.1} parent=39 // pred_fallthru
          _
        %s240 = sand.u32 %s31, 1
        %s241 = scalar_lea.sflag [#allocation4], %s240
        %s242 = sand.u32 %s31, 1
        %s243 = smul.addr %s242, 256
        %s244 = scalar_lea.vmem [#allocation3], %s243
        %p245 = pneg %p44
        %p246 = pneg %p41
        %p247 = pneg %p65
        %p248 = pneg %p62
        %p249 = pneg %p86
        %p250 = pneg %p83
        %p251 = pneg %p107
        %p252 = pneg %p104
        %p253 = pneg %p128
        %p254 = pneg %p125
        %p255 = pneg %p154
        %p256 = pneg %p151
        %s257 = sand.u32 %s141, 1
        %s258 = scalar_lea.sflag [#allocation5], %s257
        %s259 = sand.u32 %s141, 1
        %s260 = smul.addr %s259, 256
        %s261 = scalar_lea.vmem [#allocation8], %s260
        %v263 = vld [vmem:[%s229] sm:$0xff]
        %v264 = vld [vmem:[%s229 + $0x8] sm:$0xff]
        %v265 = vld [vmem:[%s229 + $0x10] sm:$0xff]
        %v266 = vld [vmem:[%s229 + $0x18] sm:$0xff]
        %v267 = vld [vmem:[%s229 + $0x20] sm:$0xff]
        %v268 = vld [vmem:[%s229 + $0x28] sm:$0xff]
        %v269 = vld [vmem:[%s229 + $0x30] sm:$0xff]
        %v270 = vld [vmem:[%s229 + $0x38] sm:$0xff]
        %v271 = vld [vmem:[%s229 + $0x40] sm:$0xff]
        %v272 = vld [vmem:[%s229 + $0x48] sm:$0xff]
        %v273 = vld [vmem:[%s229 + $0x50] sm:$0xff]
        %v274 = vld [vmem:[%s229 + $0x58] sm:$0xff]
        %v275 = vld [vmem:[%s229 + $0x60] sm:$0xff]
        %v276 = vld [vmem:[%s229 + $0x68] sm:$0xff]
        %v277 = vld [vmem:[%s229 + $0x70] sm:$0xff]
        %v278 = vld [vmem:[%s229 + $0x78] sm:$0xff]
        %v279 = vld [vmem:[%s229 + $0x80] sm:$0xff]
        %v280 = vld [vmem:[%s229 + $0x88] sm:$0xff]
        %v281 = vld [vmem:[%s229 + $0x90] sm:$0xff]
        %v282 = vld [vmem:[%s229 + $0x98] sm:$0xff]
        %v283 = vld [vmem:[%s229 + $0xa0] sm:$0xff]
        %v284 = vld [vmem:[%s229 + $0xa8] sm:$0xff]
        %v285 = vld [vmem:[%s229 + $0xb0] sm:$0xff]
        %v286 = vld [vmem:[%s229 + $0xb8] sm:$0xff]
        %v287 = vld [vmem:[%s229 + $0xc0] sm:$0xff]
        %v288 = vld [vmem:[%s229 + $0xc8] sm:$0xff]
        %v289 = vld [vmem:[%s229 + $0xd0] sm:$0xff]
        %v290 = vld [vmem:[%s229 + $0xd8] sm:$0xff]
        %v291 = vld [vmem:[%s229 + $0xe0] sm:$0xff]
        %v292 = vld [vmem:[%s229 + $0xe8] sm:$0xff]
        %v293 = vld [vmem:[%s229 + $0xf0] sm:$0xff]
        %v294 = vld [vmem:[%s229 + $0xf8] sm:$0xff]
        %v295 = vpack.c.bf16 %v264, %v263
        %v296 = vpack.c.bf16 %v266, %v265
        %v297 = vpack.c.bf16 %v268, %v267
        %v298 = vpack.c.bf16 %v270, %v269
        %v299 = vpack.c.bf16 %v272, %v271
        %v300 = vpack.c.bf16 %v274, %v273
        %v301 = vpack.c.bf16 %v276, %v275
        %v302 = vpack.c.bf16 %v278, %v277
        %v303 = vpack.c.bf16 %v280, %v279
        %v304 = vpack.c.bf16 %v282, %v281
        %v305 = vpack.c.bf16 %v284, %v283
        %v306 = vpack.c.bf16 %v286, %v285
        %v307 = vpack.c.bf16 %v288, %v287
        %v308 = vpack.c.bf16 %v290, %v289
        %v309 = vpack.c.bf16 %v292, %v291
        %v310 = vpack.c.bf16 %v294, %v293
        %v311 = vld [vmem:[%s1] sm:$0xf]
        %v312 = vld [vmem:[%s1 + $0x4] sm:$0xf]
        %v313 = vld [vmem:[%s1 + $0x8] sm:$0xf]
        %v314 = vld [vmem:[%s1 + $0xc] sm:$0xf]
        %v315 = vld [vmem:[%s1 + $0x10] sm:$0xf]
        %v316 = vld [vmem:[%s1 + $0x14] sm:$0xf]
        %v317 = vld [vmem:[%s1 + $0x18] sm:$0xf]
        %v318 = vld [vmem:[%s1 + $0x1c] sm:$0xf]
        %v319 = vld [vmem:[%s1 + $0x20] sm:$0xf]
        %v320 = vld [vmem:[%s1 + $0x24] sm:$0xf]
        %v321 = vld [vmem:[%s1 + $0x28] sm:$0xf]
        %v322 = vld [vmem:[%s1 + $0x2c] sm:$0xf]
        %v323 = vld [vmem:[%s1 + $0x30] sm:$0xf]
        %v324 = vld [vmem:[%s1 + $0x34] sm:$0xf]
        %v325 = vld [vmem:[%s1 + $0x38] sm:$0xf]
        %v326 = vld [vmem:[%s1 + $0x3c] sm:$0xf]
        %v327 = vld [vmem:[%s2] sm:$0x1]
        %v329 = vperm.slane %v327, 0
        %v347 = vunpack.c.l.b16 %v311
        %v348 = vunpack.c.l.b16 %v312
        %v349 = vunpack.c.l.b16 %v313
        %v350 = vunpack.c.l.b16 %v314
        %v351 = vunpack.c.l.b16 %v315
        %v352 = vunpack.c.l.b16 %v316
        %v353 = vunpack.c.l.b16 %v317
        %v354 = vunpack.c.l.b16 %v318
        %v355 = vunpack.c.l.b16 %v319
        %v356 = vunpack.c.l.b16 %v320
        %v357 = vunpack.c.l.b16 %v321
        %v358 = vunpack.c.l.b16 %v322
        %v359 = vunpack.c.l.b16 %v323
        %v360 = vunpack.c.l.b16 %v324
        %v361 = vunpack.c.l.b16 %v325
        %v362 = vunpack.c.l.b16 %v326
        %v363 = vpack.c.b16 %v348, %v347
        %v364 = vpack.c.b16 %v350, %v349
        %v365 = vpack.c.b16 %v352, %v351
        %v366 = vpack.c.b16 %v354, %v353
        %v367 = vpack.c.b16 %v356, %v355
        %v368 = vpack.c.b16 %v358, %v357
        %v369 = vpack.c.b16 %v360, %v359
        %v370 = vpack.c.b16 %v362, %v361
        %379 = vmatpush.bf16.msra.mxu0 %v370
        %380 = vmatpush.bf16.msra.mxu0 %v369
        %381 = vmatpush.bf16.msra.mxu0 %v368
        %382 = vmatpush.bf16.msra.mxu0 %v367
        %383 = vmatpush.bf16.msra.mxu0 %v366
        %384 = vmatpush.bf16.msra.mxu0 %v365
        %385 = vmatpush.bf16.msra.mxu0 %v364
        %386 = vmatpush.bf16.msra.mxu0 %v363
        %387 = vmatmul.bf16.gmra.mxu0 %v295
        %v388 = vpop.f32.mrf.mxu0
        %v389 = vadd.f32 %v329, %v388
        %v390 = vpop.f32.mrf.mxu0
        %v391 = vadd.f32 %v329, %v390
        %392 = vmatmul.bf16.gmra.mxu0 %v296
        %v393 = vpop.f32.mrf.mxu0
        %v394 = vadd.f32 %v329, %v393
        %v395 = vpop.f32.mrf.mxu0
        %v396 = vadd.f32 %v329, %v395
        %397 = vmatmul.bf16.gmra.mxu0 %v297
        %v398 = vpop.f32.mrf.mxu0
        %v399 = vadd.f32 %v329, %v398
        %v400 = vpop.f32.mrf.mxu0
        %v401 = vadd.f32 %v329, %v400
        %402 = vmatmul.bf16.gmra.mxu0 %v298
        %v403 = vpop.f32.mrf.mxu0
        %v404 = vadd.f32 %v329, %v403
        %v405 = vpop.f32.mrf.mxu0
        %v406 = vadd.f32 %v329, %v405
        %407 = vmatmul.bf16.gmra.mxu0 %v299
        %v408 = vpop.f32.mrf.mxu0
        %v409 = vadd.f32 %v329, %v408
        %v410 = vpop.f32.mrf.mxu0
        %v411 = vadd.f32 %v329, %v410
        %412 = vmatmul.bf16.gmra.mxu0 %v300
        %v413 = vpop.f32.mrf.mxu0
        %v414 = vadd.f32 %v329, %v413
        %v415 = vpop.f32.mrf.mxu0
        %v416 = vadd.f32 %v329, %v415
        %417 = vmatmul.bf16.gmra.mxu0 %v301
        %v418 = vpop.f32.mrf.mxu0
        %v419 = vadd.f32 %v329, %v418
        %v420 = vpop.f32.mrf.mxu0
        %v421 = vadd.f32 %v329, %v420
        %422 = vmatmul.bf16.gmra.mxu0 %v302
        %v423 = vpop.f32.mrf.mxu0
        %v424 = vadd.f32 %v329, %v423
        %v425 = vpop.f32.mrf.mxu0
        %v426 = vadd.f32 %v329, %v425
        %427 = vmatmul.bf16.gmra.mxu0 %v303
        %v428 = vpop.f32.mrf.mxu0
        %v429 = vadd.f32 %v329, %v428
        %v430 = vpop.f32.mrf.mxu0
        %v431 = vadd.f32 %v329, %v430
        %432 = vmatmul.bf16.gmra.mxu0 %v304
        %v433 = vpop.f32.mrf.mxu0
        %v434 = vadd.f32 %v329, %v433
        %v435 = vpop.f32.mrf.mxu0
        %v436 = vadd.f32 %v329, %v435
        %437 = vmatmul.bf16.gmra.mxu0 %v305
        %v438 = vpop.f32.mrf.mxu0
        %v439 = vadd.f32 %v329, %v438
        %v440 = vpop.f32.mrf.mxu0
        %v441 = vadd.f32 %v329, %v440
        %442 = vmatmul.bf16.gmra.mxu0 %v306
        %v443 = vpop.f32.mrf.mxu0
        %v444 = vadd.f32 %v329, %v443
        %v445 = vpop.f32.mrf.mxu0
        %v446 = vadd.f32 %v329, %v445
        %447 = vmatmul.bf16.gmra.mxu0 %v307
        %v448 = vpop.f32.mrf.mxu0
        %v449 = vadd.f32 %v329, %v448
        %v450 = vpop.f32.mrf.mxu0
        %v451 = vadd.f32 %v329, %v450
        %452 = vmatmul.bf16.gmra.mxu0 %v308
        %v453 = vpop.f32.mrf.mxu0
        %v454 = vadd.f32 %v329, %v453
        %v455 = vpop.f32.mrf.mxu0
        %v456 = vadd.f32 %v329, %v455
        %457 = vmatmul.bf16.gmra.mxu0 %v309
        %v458 = vpop.f32.mrf.mxu0
        %v459 = vadd.f32 %v329, %v458
        %v460 = vpop.f32.mrf.mxu0
        %v461 = vadd.f32 %v329, %v460
        %462 = vmatmul.bf16.gmra.mxu0 %v310
        %v463 = vpop.f32.mrf.mxu0
        %v464 = vadd.f32 %v329, %v463
        %v465 = vpop.f32.mrf.mxu0
        %v466 = vadd.f32 %v329, %v465
        %467 = vdwg.mxu0
        %v468 = vsub.f32 0.0, %v389
        %v469 = vsub.f32 0.0, %v391
        %v470 = vsub.f32 0.0, %v394
        %v471 = vsub.f32 0.0, %v396
        %v472 = vsub.f32 0.0, %v399
        %v473 = vsub.f32 0.0, %v401
        %v474 = vsub.f32 0.0, %v404
        %v475 = vsub.f32 0.0, %v406
        %v476 = vsub.f32 0.0, %v409
        %v477 = vsub.f32 0.0, %v411
        %v478 = vsub.f32 0.0, %v414
        %v479 = vsub.f32 0.0, %v416
        %v480 = vsub.f32 0.0, %v419
        %v481 = vsub.f32 0.0, %v421
        %v482 = vsub.f32 0.0, %v424
        %v483 = vsub.f32 0.0, %v426
        %v484 = vsub.f32 0.0, %v429
        %v485 = vsub.f32 0.0, %v431
        %v486 = vsub.f32 0.0, %v434
        %v487 = vsub.f32 0.0, %v436
        %v488 = vsub.f32 0.0, %v439
        %v489 = vsub.f32 0.0, %v441
        %v490 = vsub.f32 0.0, %v444
        %v491 = vsub.f32 0.0, %v446
        %v492 = vsub.f32 0.0, %v449
        %v493 = vsub.f32 0.0, %v451
        %v494 = vsub.f32 0.0, %v454
        %v495 = vsub.f32 0.0, %v456
        %v496 = vsub.f32 0.0, %v459
        %v497 = vsub.f32 0.0, %v461
        %v498 = vsub.f32 0.0, %v464
        %v499 = vsub.f32 0.0, %v466
        %v500 = vmul.f32 %v468, 1.442695
        %v501 = vpow.pop %v500
        %v502 = vmul.f32 %v469, 1.442695
        %v503 = vpow.pop %v502
        %v504 = vmul.f32 %v470, 1.442695
        %v505 = vpow.pop %v504
        %v506 = vmul.f32 %v471, 1.442695
        %v507 = vpow.pop %v506
        %v508 = vmul.f32 %v472, 1.442695
        %v509 = vpow.pop %v508
        %v510 = vmul.f32 %v473, 1.442695
        %v511 = vpow.pop %v510
        %v512 = vmul.f32 %v474, 1.442695
        %v513 = vpow.pop %v512
        %v514 = vmul.f32 %v475, 1.442695
        %v515 = vpow.pop %v514
        %v516 = vmul.f32 %v476, 1.442695
        %v517 = vpow.pop %v516
        %v518 = vmul.f32 %v477, 1.442695
        %v519 = vpow.pop %v518
        %v520 = vmul.f32 %v478, 1.442695
        %v521 = vpow.pop %v520
        %v522 = vmul.f32 %v479, 1.442695
        %v523 = vpow.pop %v522
        %v524 = vmul.f32 %v480, 1.442695
        %v525 = vpow.pop %v524
        %v526 = vmul.f32 %v481, 1.442695
        %v527 = vpow.pop %v526
        %v528 = vmul.f32 %v482, 1.442695
        %v529 = vpow.pop %v528
        %v530 = vmul.f32 %v483, 1.442695
        %v531 = vpow.pop %v530
        %v532 = vmul.f32 %v484, 1.442695
        %v533 = vpow.pop %v532
        %v534 = vmul.f32 %v485, 1.442695
        %v535 = vpow.pop %v534
        %v536 = vmul.f32 %v486, 1.442695
        %v537 = vpow.pop %v536
        %v538 = vmul.f32 %v487, 1.442695
        %v539 = vpow.pop %v538
        %v540 = vmul.f32 %v488, 1.442695
        %v541 = vpow.pop %v540
        %v542 = vmul.f32 %v489, 1.442695
        %v543 = vpow.pop %v542
        %v544 = vmul.f32 %v490, 1.442695
        %v545 = vpow.pop %v544
        %v546 = vmul.f32 %v491, 1.442695
        %v547 = vpow.pop %v546
        %v548 = vmul.f32 %v492, 1.442695
        %v549 = vpow.pop %v548
        %v550 = vmul.f32 %v493, 1.442695
        %v551 = vpow.pop %v550
        %v552 = vmul.f32 %v494, 1.442695
        %v553 = vpow.pop %v552
        %v554 = vmul.f32 %v495, 1.442695
        %v555 = vpow.pop %v554
        %v556 = vmul.f32 %v496, 1.442695
        %v557 = vpow.pop %v556
        %v558 = vmul.f32 %v497, 1.442695
        %v559 = vpow.pop %v558
        %v560 = vmul.f32 %v498, 1.442695
        %v561 = vpow.pop %v560
        %v562 = vmul.f32 %v499, 1.442695
        %v563 = vpow.pop %v562
        %v564 = vadd.f32 %v501, 1.0
        %v565 = vadd.f32 %v503, 1.0
        %v566 = vadd.f32 %v505, 1.0
        %v567 = vadd.f32 %v507, 1.0
        %v568 = vadd.f32 %v509, 1.0
        %v569 = vadd.f32 %v511, 1.0
        %v570 = vadd.f32 %v513, 1.0
        %v571 = vadd.f32 %v515, 1.0
        %v572 = vadd.f32 %v517, 1.0
        %v573 = vadd.f32 %v519, 1.0
        %v574 = vadd.f32 %v521, 1.0
        %v575 = vadd.f32 %v523, 1.0
        %v576 = vadd.f32 %v525, 1.0
        %v577 = vadd.f32 %v527, 1.0
        %v578 = vadd.f32 %v529, 1.0
        %v579 = vadd.f32 %v531, 1.0
        %v580 = vadd.f32 %v533, 1.0
        %v581 = vadd.f32 %v535, 1.0
        %v582 = vadd.f32 %v537, 1.0
        %v583 = vadd.f32 %v539, 1.0
        %v584 = vadd.f32 %v541, 1.0
        %v585 = vadd.f32 %v543, 1.0
        %v586 = vadd.f32 %v545, 1.0
        %v587 = vadd.f32 %v547, 1.0
        %v588 = vadd.f32 %v549, 1.0
        %v589 = vadd.f32 %v551, 1.0
        %v590 = vadd.f32 %v553, 1.0
        %v591 = vadd.f32 %v555, 1.0
        %v592 = vadd.f32 %v557, 1.0
        %v593 = vadd.f32 %v559, 1.0
        %v594 = vadd.f32 %v561, 1.0
        %v595 = vadd.f32 %v563, 1.0
        %v596 = vrcp.pop %v564
        %v597 = vrcp.pop %v565
        %v598 = vrcp.pop %v566
        %v599 = vrcp.pop %v567
        %v600 = vrcp.pop %v568
        %v601 = vrcp.pop %v569
        %v602 = vrcp.pop %v570
        %v603 = vrcp.pop %v571
        %v604 = vrcp.pop %v572
        %v605 = vrcp.pop %v573
        %v606 = vrcp.pop %v574
        %v607 = vrcp.pop %v575
        %v608 = vrcp.pop %v576
        %v609 = vrcp.pop %v577
        %v610 = vrcp.pop %v578
        %v611 = vrcp.pop %v579
        %v612 = vrcp.pop %v580
        %v613 = vrcp.pop %v581
        %v614 = vrcp.pop %v582
        %v615 = vrcp.pop %v583
        %v616 = vrcp.pop %v584
        %v617 = vrcp.pop %v585
        %v618 = vrcp.pop %v586
        %v619 = vrcp.pop %v587
        %v620 = vrcp.pop %v588
        %v621 = vrcp.pop %v589
        %v622 = vrcp.pop %v590
        %v623 = vrcp.pop %v591
        %v624 = vrcp.pop %v592
        %v625 = vrcp.pop %v593
        %v626 = vrcp.pop %v594
        %v627 = vrcp.pop %v595
        %v628 = vmul.f32 %v389, %v596
        %v629 = vmul.f32 %v391, %v597
        %v630 = vmul.f32 %v394, %v598
        %v631 = vmul.f32 %v396, %v599
        %v632 = vmul.f32 %v399, %v600
        %v633 = vmul.f32 %v401, %v601
        %v634 = vmul.f32 %v404, %v602
        %v635 = vmul.f32 %v406, %v603
        %v636 = vmul.f32 %v409, %v604
        %v637 = vmul.f32 %v411, %v605
        %v638 = vmul.f32 %v414, %v606
        %v639 = vmul.f32 %v416, %v607
        %v640 = vmul.f32 %v419, %v608
        %v641 = vmul.f32 %v421, %v609
        %v642 = vmul.f32 %v424, %v610
        %v643 = vmul.f32 %v426, %v611
        %v644 = vmul.f32 %v429, %v612
        %v645 = vmul.f32 %v431, %v613
        %v646 = vmul.f32 %v434, %v614
        %v647 = vmul.f32 %v436, %v615
        %v648 = vmul.f32 %v439, %v616
        %v649 = vmul.f32 %v441, %v617
        %v650 = vmul.f32 %v444, %v618
        %v651 = vmul.f32 %v446, %v619
        %v652 = vmul.f32 %v449, %v620
        %v653 = vmul.f32 %v451, %v621
        %v654 = vmul.f32 %v454, %v622
        %v655 = vmul.f32 %v456, %v623
        %v656 = vmul.f32 %v459, %v624
        %v657 = vmul.f32 %v461, %v625
        %v658 = vmul.f32 %v464, %v626
        %v659 = vmul.f32 %v466, %v627
        %vm660 = vcmask 519168
        %661 = vst.msk [vmem:[#allocation2] sm:$0xf] %vm660, 0
        %662 = vst.msk [vmem:[#allocation2 + $0x4] sm:$0xf] %vm660, 0
        %663 = vst.msk [vmem:[#allocation2 + $0x8] sm:$0xf] %vm660, 0
        %664 = vst.msk [vmem:[#allocation2 + $0xc] sm:$0xf] %vm660, 0
        %s665 = scalar_lea.vmem [#allocation2], 272
        %666 = vst.msk [vmem:[%s665] sm:$0xf] %vm660, 0
        %667 = vst.msk [vmem:[%s665 + $0x4] sm:$0xf] %vm660, 0
        %668 = vst.msk [vmem:[%s665 + $0x8] sm:$0xf] %vm660, 0
        %669 = vst.msk [vmem:[%s665 + $0xc] sm:$0xf] %vm660, 0
        %vm670 = vcmask 519171
        %vm671 = vsmask.f32 7950
        %vm672 = vmand %vm670, %vm671
        %v673 = vld [vmem:[#allocation2] sm:$0x8]
        %v674 = vsel %vm672, 0, %v673
        %675 = vst [vmem:[#allocation2] sm:$0x8] %v674
        %v676 = vld [vmem:[#allocation2 + $0x10] sm:$0x8]
        %v677 = vsel %vm672, 0, %v676
        %678 = vst [vmem:[#allocation2 + $0x10] sm:$0x8] %v677
        %v679 = vld [vmem:[#allocation2 + $0x20] sm:$0x8]
        %v680 = vsel %vm672, 0, %v679
        %681 = vst [vmem:[#allocation2 + $0x20] sm:$0x8] %v680
        %v682 = vld [vmem:[#allocation2 + $0x30] sm:$0x8]
        %v683 = vsel %vm672, 0, %v682
        %684 = vst [vmem:[#allocation2 + $0x30] sm:$0x8] %v683
        %v685 = vld [vmem:[#allocation2 + $0x40] sm:$0x8]
        %v686 = vsel %vm672, 0, %v685
        %687 = vst [vmem:[#allocation2 + $0x40] sm:$0x8] %v686
        %v688 = vld [vmem:[#allocation2 + $0x50] sm:$0x8]
        %v689 = vsel %vm672, 0, %v688
        %690 = vst [vmem:[#allocation2 + $0x50] sm:$0x8] %v689
        %v691 = vld [vmem:[#allocation2 + $0x60] sm:$0x8]
        %v692 = vsel %vm672, 0, %v691
        %693 = vst [vmem:[#allocation2 + $0x60] sm:$0x8] %v692
        %v694 = vld [vmem:[#allocation2 + $0x70] sm:$0x8]
        %v695 = vsel %vm672, 0, %v694
        %696 = vst [vmem:[#allocation2 + $0x70] sm:$0x8] %v695
        %v697 = vld [vmem:[#allocation2 + $0x80] sm:$0x8]
        %v698 = vsel %vm672, 0, %v697
        %699 = vst [vmem:[#allocation2 + $0x80] sm:$0x8] %v698
        %v700 = vld [vmem:[#allocation2 + $0x90] sm:$0x8]
        %v701 = vsel %vm672, 0, %v700
        %702 = vst [vmem:[#allocation2 + $0x90] sm:$0x8] %v701
        %v703 = vld [vmem:[#allocation2 + $0xa0] sm:$0x8]
        %v704 = vsel %vm672, 0, %v703
        %705 = vst [vmem:[#allocation2 + $0xa0] sm:$0x8] %v704
        %v706 = vld [vmem:[#allocation2 + $0xb0] sm:$0x8]
        %v707 = vsel %vm672, 0, %v706
        %708 = vst [vmem:[#allocation2 + $0xb0] sm:$0x8] %v707
        %v709 = vld [vmem:[#allocation2 + $0xc0] sm:$0x8]
        %v710 = vsel %vm672, 0, %v709
        %711 = vst [vmem:[#allocation2 + $0xc0] sm:$0x8] %v710
        %v712 = vld [vmem:[#allocation2 + $0xd0] sm:$0x8]
        %v713 = vsel %vm672, 0, %v712
        %714 = vst [vmem:[#allocation2 + $0xd0] sm:$0x8] %v713
        %v715 = vld [vmem:[#allocation2 + $0xe0] sm:$0x8]
        %v716 = vsel %vm672, 0, %v715
        %717 = vst [vmem:[#allocation2 + $0xe0] sm:$0x8] %v716
        %v718 = vld [vmem:[#allocation2 + $0xf0] sm:$0x8]
        %v719 = vsel %vm672, 0, %v718
        %720 = vst [vmem:[#allocation2 + $0xf0] sm:$0x8] %v719
        %v721 = vld [vmem:[#allocation2 + $0x100] sm:$0x8]
        %v722 = vsel %vm672, 0, %v721
        %723 = vst [vmem:[#allocation2 + $0x100] sm:$0x8] %v722
        %v724 = vld [vmem:[#allocation2 + $0x110] sm:$0x8]
        %v725 = vsel %vm672, 0, %v724
        %726 = vst [vmem:[#allocation2 + $0x110] sm:$0x8] %v725
        %vm727 = vcmask 516096
        %vm728 = vsmask.f32 256
        %vm729 = vmand %vm727, %vm728
        %v730 = vld [vmem:[#allocation2 + $0xc] sm:$0x1]
        %v731 = vsel %vm729, 0, %v730
        %732 = vst [vmem:[#allocation2 + $0xc] sm:$0x1] %v731
        %v733 = vld [vmem:[#allocation2 + $0x1c] sm:$0x1]
        %v734 = vsel %vm729, 0, %v733
        %735 = vst [vmem:[#allocation2 + $0x1c] sm:$0x1] %v734
        %v736 = vld [vmem:[#allocation2 + $0x2c] sm:$0x1]
        %v737 = vsel %vm729, 0, %v736
        %738 = vst [vmem:[#allocation2 + $0x2c] sm:$0x1] %v737
        %v739 = vld [vmem:[#allocation2 + $0x3c] sm:$0x1]
        %v740 = vsel %vm729, 0, %v739
        %741 = vst [vmem:[#allocation2 + $0x3c] sm:$0x1] %v740
        %v742 = vld [vmem:[#allocation2 + $0x4c] sm:$0x1]
        %v743 = vsel %vm729, 0, %v742
        %744 = vst [vmem:[#allocation2 + $0x4c] sm:$0x1] %v743
        %v745 = vld [vmem:[#allocation2 + $0x5c] sm:$0x1]
        %v746 = vsel %vm729, 0, %v745
        %747 = vst [vmem:[#allocation2 + $0x5c] sm:$0x1] %v746
        %v748 = vld [vmem:[#allocation2 + $0x6c] sm:$0x1]
        %v749 = vsel %vm729, 0, %v748
        %750 = vst [vmem:[#allocation2 + $0x6c] sm:$0x1] %v749
        %v751 = vld [vmem:[#allocation2 + $0x7c] sm:$0x1]
        %v752 = vsel %vm729, 0, %v751
        %753 = vst [vmem:[#allocation2 + $0x7c] sm:$0x1] %v752
        %v754 = vld [vmem:[#allocation2 + $0x8c] sm:$0x1]
        %v755 = vsel %vm729, 0, %v754
        %756 = vst [vmem:[#allocation2 + $0x8c] sm:$0x1] %v755
        %v757 = vld [vmem:[#allocation2 + $0x9c] sm:$0x1]
        %v758 = vsel %vm729, 0, %v757
        %759 = vst [vmem:[#allocation2 + $0x9c] sm:$0x1] %v758
        %v760 = vld [vmem:[#allocation2 + $0xac] sm:$0x1]
        %v761 = vsel %vm729, 0, %v760
        %762 = vst [vmem:[#allocation2 + $0xac] sm:$0x1] %v761
        %v763 = vld [vmem:[#allocation2 + $0xbc] sm:$0x1]
        %v764 = vsel %vm729, 0, %v763
        %765 = vst [vmem:[#allocation2 + $0xbc] sm:$0x1] %v764
        %v766 = vld [vmem:[#allocation2 + $0xcc] sm:$0x1]
        %v767 = vsel %vm729, 0, %v766
        %768 = vst [vmem:[#allocation2 + $0xcc] sm:$0x1] %v767
        %v769 = vld [vmem:[#allocation2 + $0xdc] sm:$0x1]
        %v770 = vsel %vm729, 0, %v769
        %771 = vst [vmem:[#allocation2 + $0xdc] sm:$0x1] %v770
        %v772 = vld [vmem:[#allocation2 + $0xec] sm:$0x1]
        %v773 = vsel %vm729, 0, %v772
        %774 = vst [vmem:[#allocation2 + $0xec] sm:$0x1] %v773
        %v775 = vld [vmem:[#allocation2 + $0xfc] sm:$0x1]
        %v776 = vsel %vm729, 0, %v775
        %777 = vst [vmem:[#allocation2 + $0xfc] sm:$0x1] %v776
        %v778 = vld [vmem:[#allocation2 + $0x10c] sm:$0x1]
        %v779 = vsel %vm729, 0, %v778
        %780 = vst [vmem:[#allocation2 + $0x10c] sm:$0x1] %v779
        %v781 = vld [vmem:[#allocation2 + $0x11c] sm:$0x1]
        %v782 = vsel %vm729, 0, %v781
        %783 = vst [vmem:[#allocation2 + $0x11c] sm:$0x1] %v782
        %v784 = vpack.c.bf16 %v628, %v628
        %v785 = vpack.c.bf16 %v629, %v629
        %v786 = vpack.c.bf16 %v630, %v630
        %v787 = vpack.c.bf16 %v631, %v631
        %v788 = vpack.c.bf16 %v632, %v632
        %v789 = vpack.c.bf16 %v633, %v633
        %v790 = vpack.c.bf16 %v634, %v634
        %v791 = vpack.c.bf16 %v635, %v635
        %v792 = vpack.c.bf16 %v636, %v636
        %v793 = vpack.c.bf16 %v637, %v637
        %v794 = vpack.c.bf16 %v638, %v638
        %v795 = vpack.c.bf16 %v639, %v639
        %v796 = vpack.c.bf16 %v640, %v640
        %v797 = vpack.c.bf16 %v641, %v641
        %v798 = vpack.c.bf16 %v642, %v642
        %v799 = vpack.c.bf16 %v643, %v643
        %v800 = vpack.c.bf16 %v644, %v644
        %v801 = vpack.c.bf16 %v645, %v645
        %v802 = vpack.c.bf16 %v646, %v646
        %v803 = vpack.c.bf16 %v647, %v647
        %v804 = vpack.c.bf16 %v648, %v648
        %v805 = vpack.c.bf16 %v649, %v649
        %v806 = vpack.c.bf16 %v650, %v650
        %v807 = vpack.c.bf16 %v651, %v651
        %v808 = vpack.c.bf16 %v652, %v652
        %v809 = vpack.c.bf16 %v653, %v653
        %v810 = vpack.c.bf16 %v654, %v654
        %v811 = vpack.c.bf16 %v655, %v655
        %v812 = vpack.c.bf16 %v656, %v656
        %v813 = vpack.c.bf16 %v657, %v657
        %v814 = vpack.c.bf16 %v658, %v658
        %v815 = vpack.c.bf16 %v659, %v659
        %s816 = scalar_lea.vmem [#allocation2], 16
        %817 = vst.msk [vmem:[%s816 + $0x4] sm:$0xf] %vm660, %v784
        %818 = vst.msk [vmem:[%s816 + $0x8] sm:$0xf] %vm660, %v785
        %819 = vst.msk [vmem:[%s816 + $0x14] sm:$0xf] %vm660, %v786
        %820 = vst.msk [vmem:[%s816 + $0x18] sm:$0xf] %vm660, %v787
        %821 = vst.msk [vmem:[%s816 + $0x24] sm:$0xf] %vm660, %v788
        %822 = vst.msk [vmem:[%s816 + $0x28] sm:$0xf] %vm660, %v789
        %823 = vst.msk [vmem:[%s816 + $0x34] sm:$0xf] %vm660, %v790
        %824 = vst.msk [vmem:[%s816 + $0x38] sm:$0xf] %vm660, %v791
        %825 = vst.msk [vmem:[%s816 + $0x44] sm:$0xf] %vm660, %v792
        %826 = vst.msk [vmem:[%s816 + $0x48] sm:$0xf] %vm660, %v793
        %827 = vst.msk [vmem:[%s816 + $0x54] sm:$0xf] %vm660, %v794
        %828 = vst.msk [vmem:[%s816 + $0x58] sm:$0xf] %vm660, %v795
        %829 = vst.msk [vmem:[%s816 + $0x64] sm:$0xf] %vm660, %v796
        %830 = vst.msk [vmem:[%s816 + $0x68] sm:$0xf] %vm660, %v797
        %831 = vst.msk [vmem:[%s816 + $0x74] sm:$0xf] %vm660, %v798
        %832 = vst.msk [vmem:[%s816 + $0x78] sm:$0xf] %vm660, %v799
        %833 = vst.msk [vmem:[%s816 + $0x84] sm:$0xf] %vm660, %v800
        %834 = vst.msk [vmem:[%s816 + $0x88] sm:$0xf] %vm660, %v801
        %835 = vst.msk [vmem:[%s816 + $0x94] sm:$0xf] %vm660, %v802
        %836 = vst.msk [vmem:[%s816 + $0x98] sm:$0xf] %vm660, %v803
        %837 = vst.msk [vmem:[%s816 + $0xa4] sm:$0xf] %vm660, %v804
        %838 = vst.msk [vmem:[%s816 + $0xa8] sm:$0xf] %vm660, %v805
        %839 = vst.msk [vmem:[%s816 + $0xb4] sm:$0xf] %vm660, %v806
        %840 = vst.msk [vmem:[%s816 + $0xb8] sm:$0xf] %vm660, %v807
        %841 = vst.msk [vmem:[%s816 + $0xc4] sm:$0xf] %vm660, %v808
        %842 = vst.msk [vmem:[%s816 + $0xc8] sm:$0xf] %vm660, %v809
        %843 = vst.msk [vmem:[%s816 + $0xd4] sm:$0xf] %vm660, %v810
        %844 = vst.msk [vmem:[%s816 + $0xd8] sm:$0xf] %vm660, %v811
        %845 = vst.msk [vmem:[%s816 + $0xe4] sm:$0xf] %vm660, %v812
        %846 = vst.msk [vmem:[%s816 + $0xe8] sm:$0xf] %vm660, %v813
        %847 = vst.msk [vmem:[%s816 + $0xf4] sm:$0xf] %vm660, %v814
        %848 = vst.msk [vmem:[%s816 + $0xf8] sm:$0xf] %vm660, %v815
        %v849 = vld [vmem:[#allocation2] sm:$0x8]
        %v850 = vld [vmem:[#allocation2 + $0x4] sm:$0xf]
        %v851 = vld [vmem:[#allocation2 + $0x8] sm:$0xf]
        %v852 = vld [vmem:[#allocation2 + $0x10] sm:$0x8]
        %v853 = vld [vmem:[#allocation2 + $0x14] sm:$0xf]
        %v854 = vld [vmem:[#allocation2 + $0x18] sm:$0xf]
        %v855 = vld [vmem:[#allocation2 + $0x20] sm:$0x8]
        %v856 = vld [vmem:[#allocation2 + $0x24] sm:$0xf]
        %v857 = vld [vmem:[#allocation2 + $0x28] sm:$0xf]
        %v858 = vld [vmem:[#allocation2 + $0x30] sm:$0x8]
        %v859 = vld [vmem:[#allocation2 + $0x34] sm:$0xf]
        %v860 = vld [vmem:[#allocation2 + $0x38] sm:$0xf]
        %v861 = vld [vmem:[#allocation2 + $0x40] sm:$0x8]
        %v862 = vld [vmem:[#allocation2 + $0x44] sm:$0xf]
        %v863 = vld [vmem:[#allocation2 + $0x48] sm:$0xf]
        %v864 = vld [vmem:[#allocation2 + $0x50] sm:$0x8]
        %v865 = vld [vmem:[#allocation2 + $0x54] sm:$0xf]
        %v866 = vld [vmem:[#allocation2 + $0x58] sm:$0xf]
        %v867 = vld [vmem:[#allocation2 + $0x60] sm:$0x8]
        %v868 = vld [vmem:[#allocation2 + $0x64] sm:$0xf]
        %v869 = vld [vmem:[#allocation2 + $0x68] sm:$0xf]
        %v870 = vld [vmem:[#allocation2 + $0x70] sm:$0x8]
        %v871 = vld [vmem:[#allocation2 + $0x74] sm:$0xf]
        %v872 = vld [vmem:[#allocation2 + $0x78] sm:$0xf]
        %v873 = vld [vmem:[#allocation2 + $0x80] sm:$0x8]
        %v874 = vld [vmem:[#allocation2 + $0x84] sm:$0xf]
        %v875 = vld [vmem:[#allocation2 + $0x88] sm:$0xf]
        %v876 = vld [vmem:[#allocation2 + $0x90] sm:$0x8]
        %v877 = vld [vmem:[#allocation2 + $0x94] sm:$0xf]
        %v878 = vld [vmem:[#allocation2 + $0x98] sm:$0xf]
        %v879 = vld [vmem:[#allocation2 + $0xa0] sm:$0x8]
        %v880 = vld [vmem:[#allocation2 + $0xa4] sm:$0xf]
        %v881 = vld [vmem:[#allocation2 + $0xa8] sm:$0xf]
        %v882 = vld [vmem:[#allocation2 + $0xb0] sm:$0x8]
        %v883 = vld [vmem:[#allocation2 + $0xb4] sm:$0xf]
        %v884 = vld [vmem:[#allocation2 + $0xb8] sm:$0xf]
        %v885 = vld [vmem:[#allocation2 + $0xc0] sm:$0x8]
        %v886 = vld [vmem:[#allocation2 + $0xc4] sm:$0xf]
        %v887 = vld [vmem:[#allocation2 + $0xc8] sm:$0xf]
        %v888 = vld [vmem:[#allocation2 + $0xd0] sm:$0x8]
        %v889 = vld [vmem:[#allocation2 + $0xd4] sm:$0xf]
        %v890 = vld [vmem:[#allocation2 + $0xd8] sm:$0xf]
        %v891 = vld [vmem:[#allocation2 + $0xe0] sm:$0x8]
        %v892 = vld [vmem:[#allocation2 + $0xe4] sm:$0xf]
        %v893 = vld [vmem:[#allocation2 + $0xe8] sm:$0xf]
        %v894 = vld [vmem:[#allocation2 + $0xf0] sm:$0x8]
        %v895 = vld [vmem:[#allocation2 + $0xf4] sm:$0xf]
        %v896 = vld [vmem:[#allocation2 + $0xf8] sm:$0xf]
        %v897 = vld [vmem:[#allocation2 + $0xc] sm:$0x1]
        %v898 = vld [vmem:[#allocation2 + $0x1c] sm:$0x1]
        %v899 = vld [vmem:[#allocation2 + $0x2c] sm:$0x1]
        %v900 = vld [vmem:[#allocation2 + $0x3c] sm:$0x1]
        %v901 = vld [vmem:[#allocation2 + $0x4c] sm:$0x1]
        %v902 = vld [vmem:[#allocation2 + $0x5c] sm:$0x1]
        %v903 = vld [vmem:[#allocation2 + $0x6c] sm:$0x1]
        %v904 = vld [vmem:[#allocation2 + $0x7c] sm:$0x1]
        %v905 = vld [vmem:[#allocation2 + $0x8c] sm:$0x1]
        %v906 = vld [vmem:[#allocation2 + $0x9c] sm:$0x1]
        %v907 = vld [vmem:[#allocation2 + $0xac] sm:$0x1]
        %v908 = vld [vmem:[#allocation2 + $0xbc] sm:$0x1]
        %v909 = vld [vmem:[#allocation2 + $0xcc] sm:$0x1]
        %v910 = vld [vmem:[#allocation2 + $0xdc] sm:$0x1]
        %v911 = vld [vmem:[#allocation2 + $0xec] sm:$0x1]
        %v912 = vld [vmem:[#allocation2 + $0xfc] sm:$0x1]
        %v961 = vunpack.c.l.b16 %v849
        %v962 = vunpack.c.l.b16 %v850
        %v963 = vunpack.c.l.b16 %v851
        %v964 = vunpack.c.l.b16 %v852
        %v965 = vunpack.c.l.b16 %v853
        %v966 = vunpack.c.l.b16 %v854
        %v967 = vunpack.c.l.b16 %v855
        %v968 = vunpack.c.l.b16 %v856
        %v969 = vunpack.c.l.b16 %v857
        %v970 = vunpack.c.l.b16 %v858
        %v971 = vunpack.c.l.b16 %v859
        %v972 = vunpack.c.l.b16 %v860
        %v973 = vunpack.c.l.b16 %v861
        %v974 = vunpack.c.l.b16 %v862
        %v975 = vunpack.c.l.b16 %v863
        %v976 = vunpack.c.l.b16 %v864
        %v977 = vunpack.c.l.b16 %v865
        %v978 = vunpack.c.l.b16 %v866
        %v979 = vunpack.c.l.b16 %v867
        %v980 = vunpack.c.l.b16 %v868
        %v981 = vunpack.c.l.b16 %v869
        %v982 = vunpack.c.l.b16 %v870
        %v983 = vunpack.c.l.b16 %v871
        %v984 = vunpack.c.l.b16 %v872
        %v985 = vunpack.c.l.b16 %v873
        %v986 = vunpack.c.l.b16 %v874
        %v987 = vunpack.c.l.b16 %v875
        %v988 = vunpack.c.l.b16 %v876
        %v989 = vunpack.c.l.b16 %v877
        %v990 = vunpack.c.l.b16 %v878
        %v991 = vunpack.c.l.b16 %v879
        %v992 = vunpack.c.l.b16 %v880
        %v993 = vunpack.c.l.b16 %v881
        %v994 = vunpack.c.l.b16 %v882
        %v995 = vunpack.c.l.b16 %v883
        %v996 = vunpack.c.l.b16 %v884
        %v997 = vunpack.c.l.b16 %v885
        %v998 = vunpack.c.l.b16 %v886
        %v999 = vunpack.c.l.b16 %v887
        %v1000 = vunpack.c.l.b16 %v888
        %v1001 = vunpack.c.l.b16 %v889
        %v1002 = vunpack.c.l.b16 %v890
        %v1003 = vunpack.c.l.b16 %v891
        %v1004 = vunpack.c.l.b16 %v892
        %v1005 = vunpack.c.l.b16 %v893
        %v1006 = vunpack.c.l.b16 %v894
        %v1007 = vunpack.c.l.b16 %v895
        %v1008 = vunpack.c.l.b16 %v896
        %v1009 = vpack.c.b16 %v962, %v961
        %v1010 = vpack.c.b16 %v963, %v963
        %v1011 = vpack.c.b16 %v965, %v964
        %v1012 = vpack.c.b16 %v966, %v966
        %v1013 = vpack.c.b16 %v968, %v967
        %v1014 = vpack.c.b16 %v969, %v969
        %v1015 = vpack.c.b16 %v971, %v970
        %v1016 = vpack.c.b16 %v972, %v972
        %v1017 = vpack.c.b16 %v974, %v973
        %v1018 = vpack.c.b16 %v975, %v975
        %v1019 = vpack.c.b16 %v977, %v976
        %v1020 = vpack.c.b16 %v978, %v978
        %v1021 = vpack.c.b16 %v980, %v979
        %v1022 = vpack.c.b16 %v981, %v981
        %v1023 = vpack.c.b16 %v983, %v982
        %v1024 = vpack.c.b16 %v984, %v984
        %v1025 = vpack.c.b16 %v986, %v985
        %v1026 = vpack.c.b16 %v987, %v987
        %v1027 = vpack.c.b16 %v989, %v988
        %v1028 = vpack.c.b16 %v990, %v990
        %v1029 = vpack.c.b16 %v992, %v991
        %v1030 = vpack.c.b16 %v993, %v993
        %v1031 = vpack.c.b16 %v995, %v994
        %v1032 = vpack.c.b16 %v996, %v996
        %v1033 = vpack.c.b16 %v998, %v997
        %v1034 = vpack.c.b16 %v999, %v999
        %v1035 = vpack.c.b16 %v1001, %v1000
        %v1036 = vpack.c.b16 %v1002, %v1002
        %v1037 = vpack.c.b16 %v1004, %v1003
        %v1038 = vpack.c.b16 %v1005, %v1005
        %v1039 = vpack.c.b16 %v1007, %v1006
        %v1040 = vpack.c.b16 %v1008, %v1008
        %v1041 = vpack.c.b16 %v963, %v962
        %v1042 = vpack.c.b16 %v966, %v965
        %v1043 = vpack.c.b16 %v969, %v968
        %v1044 = vpack.c.b16 %v972, %v971
        %v1045 = vpack.c.b16 %v975, %v974
        %v1046 = vpack.c.b16 %v978, %v977
        %v1047 = vpack.c.b16 %v981, %v980
        %v1048 = vpack.c.b16 %v984, %v983
        %v1049 = vpack.c.b16 %v987, %v986
        %v1050 = vpack.c.b16 %v990, %v989
        %v1051 = vpack.c.b16 %v993, %v992
        %v1052 = vpack.c.b16 %v996, %v995
        %v1053 = vpack.c.b16 %v999, %v998
        %v1054 = vpack.c.b16 %v1002, %v1001
        %v1055 = vpack.c.b16 %v1005, %v1004
        %v1056 = vpack.c.b16 %v1008, %v1007
        %v1058 = vshrl.u32 %v1041, 16
        %v1060 = vrot.slane %v1058, 4
        %v1061 = vshll.u32 %v1041, 16
        %v1063 = vrot.slane %v1061, 5
        %v1064 = vor.u32 %v1060, %v1063
        %v1066 = vshrl.u32 %v1042, 16
        %v1068 = vrot.slane %v1066, 4
        %v1069 = vshll.u32 %v1042, 16
        %v1071 = vrot.slane %v1069, 5
        %v1072 = vor.u32 %v1068, %v1071
        %v1074 = vshrl.u32 %v1043, 16
        %v1076 = vrot.slane %v1074, 4
        %v1077 = vshll.u32 %v1043, 16
        %v1079 = vrot.slane %v1077, 5
        %v1080 = vor.u32 %v1076, %v1079
        %v1082 = vshrl.u32 %v1044, 16
        %v1084 = vrot.slane %v1082, 4
        %v1085 = vshll.u32 %v1044, 16
        %v1087 = vrot.slane %v1085, 5
        %v1088 = vor.u32 %v1084, %v1087
        %v1090 = vshrl.u32 %v1045, 16
        %v1092 = vrot.slane %v1090, 4
        %v1093 = vshll.u32 %v1045, 16
        %v1095 = vrot.slane %v1093, 5
        %v1096 = vor.u32 %v1092, %v1095
        %v1098 = vshrl.u32 %v1046, 16
        %v1100 = vrot.slane %v1098, 4
        %v1101 = vshll.u32 %v1046, 16
        %v1103 = vrot.slane %v1101, 5
        %v1104 = vor.u32 %v1100, %v1103
        %v1106 = vshrl.u32 %v1047, 16
        %v1108 = vrot.slane %v1106, 4
        %v1109 = vshll.u32 %v1047, 16
        %v1111 = vrot.slane %v1109, 5
        %v1112 = vor.u32 %v1108, %v1111
        %v1114 = vshrl.u32 %v1048, 16
        %v1116 = vrot.slane %v1114, 4
        %v1117 = vshll.u32 %v1048, 16
        %v1119 = vrot.slane %v1117, 5
        %v1120 = vor.u32 %v1116, %v1119
        %v1122 = vshrl.u32 %v1049, 16
        %v1124 = vrot.slane %v1122, 4
        %v1125 = vshll.u32 %v1049, 16
        %v1127 = vrot.slane %v1125, 5
        %v1128 = vor.u32 %v1124, %v1127
        %v1130 = vshrl.u32 %v1050, 16
        %v1132 = vrot.slane %v1130, 4
        %v1133 = vshll.u32 %v1050, 16
        %v1135 = vrot.slane %v1133, 5
        %v1136 = vor.u32 %v1132, %v1135
        %v1138 = vshrl.u32 %v1051, 16
        %v1140 = vrot.slane %v1138, 4
        %v1141 = vshll.u32 %v1051, 16
        %v1143 = vrot.slane %v1141, 5
        %v1144 = vor.u32 %v1140, %v1143
        %v1146 = vshrl.u32 %v1052, 16
        %v1148 = vrot.slane %v1146, 4
        %v1149 = vshll.u32 %v1052, 16
        %v1151 = vrot.slane %v1149, 5
        %v1152 = vor.u32 %v1148, %v1151
        %v1154 = vshrl.u32 %v1053, 16
        %v1156 = vrot.slane %v1154, 4
        %v1157 = vshll.u32 %v1053, 16
        %v1159 = vrot.slane %v1157, 5
        %v1160 = vor.u32 %v1156, %v1159
        %v1162 = vshrl.u32 %v1054, 16
        %v1164 = vrot.slane %v1162, 4
        %v1165 = vshll.u32 %v1054, 16
        %v1167 = vrot.slane %v1165, 5
        %v1168 = vor.u32 %v1164, %v1167
        %v1170 = vshrl.u32 %v1055, 16
        %v1172 = vrot.slane %v1170, 4
        %v1173 = vshll.u32 %v1055, 16
        %v1175 = vrot.slane %v1173, 5
        %v1176 = vor.u32 %v1172, %v1175
        %v1178 = vshrl.u32 %v1056, 16
        %v1180 = vrot.slane %v1178, 4
        %v1181 = vshll.u32 %v1056, 16
        %v1183 = vrot.slane %v1181, 5
        %v1184 = vor.u32 %v1180, %v1183
        %1185 = vrot.lane.b32.xlu0 %v1064, 64
        %v1186 = vpop.permute.xlu0 %1185
        %1187 = vrot.lane.b32.xlu0 %v1072, 64
        %v1188 = vpop.permute.xlu0 %1187
        %1189 = vrot.lane.b32.xlu0 %v1080, 64
        %v1190 = vpop.permute.xlu0 %1189
        %1191 = vrot.lane.b32.xlu0 %v1088, 64
        %v1192 = vpop.permute.xlu0 %1191
        %1193 = vrot.lane.b32.xlu0 %v1096, 64
        %v1194 = vpop.permute.xlu0 %1193
        %1195 = vrot.lane.b32.xlu0 %v1104, 64
        %v1196 = vpop.permute.xlu0 %1195
        %1197 = vrot.lane.b32.xlu0 %v1112, 64
        %v1198 = vpop.permute.xlu0 %1197
        %1199 = vrot.lane.b32.xlu0 %v1120, 64
        %v1200 = vpop.permute.xlu0 %1199
        %1201 = vrot.lane.b32.xlu0 %v1128, 64
        %v1202 = vpop.permute.xlu0 %1201
        %1203 = vrot.lane.b32.xlu0 %v1136, 64
        %v1204 = vpop.permute.xlu0 %1203
        %1205 = vrot.lane.b32.xlu0 %v1144, 64
        %v1206 = vpop.permute.xlu0 %1205
        %1207 = vrot.lane.b32.xlu0 %v1152, 64
        %v1208 = vpop.permute.xlu0 %1207
        %1209 = vrot.lane.b32.xlu0 %v1160, 64
        %v1210 = vpop.permute.xlu0 %1209
        %1211 = vrot.lane.b32.xlu0 %v1168, 64
        %v1212 = vpop.permute.xlu0 %1211
        %1213 = vrot.lane.b32.xlu0 %v1176, 64
        %v1214 = vpop.permute.xlu0 %1213
        %1215 = vrot.lane.b32.xlu0 %v1184, 64
        %v1216 = vpop.permute.xlu0 %1215
        %v1233 = vunpack.c.l.b16 %v897
        %v1234 = vunpack.c.l.b16 %v898
        %v1235 = vunpack.c.l.b16 %v899
        %v1236 = vunpack.c.l.b16 %v900
        %v1237 = vunpack.c.l.b16 %v901
        %v1238 = vunpack.c.l.b16 %v902
        %v1239 = vunpack.c.l.b16 %v903
        %v1240 = vunpack.c.l.b16 %v904
        %v1241 = vunpack.c.l.b16 %v905
        %v1242 = vunpack.c.l.b16 %v906
        %v1243 = vunpack.c.l.b16 %v907
        %v1244 = vunpack.c.l.b16 %v908
        %v1245 = vunpack.c.l.b16 %v909
        %v1246 = vunpack.c.l.b16 %v910
        %v1247 = vunpack.c.l.b16 %v911
        %v1248 = vunpack.c.l.b16 %v912
        %v1249 = vpack.c.b16 %v1233, %v1233
        %v1250 = vpack.c.b16 %v1234, %v1234
        %v1251 = vpack.c.b16 %v1235, %v1235
        %v1252 = vpack.c.b16 %v1236, %v1236
        %v1253 = vpack.c.b16 %v1237, %v1237
        %v1254 = vpack.c.b16 %v1238, %v1238
        %v1255 = vpack.c.b16 %v1239, %v1239
        %v1256 = vpack.c.b16 %v1240, %v1240
        %v1257 = vpack.c.b16 %v1241, %v1241
        %v1258 = vpack.c.b16 %v1242, %v1242
        %v1259 = vpack.c.b16 %v1243, %v1243
        %v1260 = vpack.c.b16 %v1244, %v1244
        %v1261 = vpack.c.b16 %v1245, %v1245
        %v1262 = vpack.c.b16 %v1246, %v1246
        %v1263 = vpack.c.b16 %v1247, %v1247
        %v1264 = vpack.c.b16 %v1248, %v1248
        %vm1265 = vcmask 1042432
        %v1266 = vrot.slane %v1041, 5
        %v1267 = vrot.slane %v1249, 5
        %v1268 = vsel %vm1265, %v1266, %v1267
        %v1269 = vrot.slane %v1042, 5
        %v1270 = vrot.slane %v1250, 5
        %v1271 = vsel %vm1265, %v1269, %v1270
        %v1272 = vrot.slane %v1043, 5
        %v1273 = vrot.slane %v1251, 5
        %v1274 = vsel %vm1265, %v1272, %v1273
        %v1275 = vrot.slane %v1044, 5
        %v1276 = vrot.slane %v1252, 5
        %v1277 = vsel %vm1265, %v1275, %v1276
        %v1278 = vrot.slane %v1045, 5
        %v1279 = vrot.slane %v1253, 5
        %v1280 = vsel %vm1265, %v1278, %v1279
        %v1281 = vrot.slane %v1046, 5
        %v1282 = vrot.slane %v1254, 5
        %v1283 = vsel %vm1265, %v1281, %v1282
        %v1284 = vrot.slane %v1047, 5
        %v1285 = vrot.slane %v1255, 5
        %v1286 = vsel %vm1265, %v1284, %v1285
        %v1287 = vrot.slane %v1048, 5
        %v1288 = vrot.slane %v1256, 5
        %v1289 = vsel %vm1265, %v1287, %v1288
        %v1290 = vrot.slane %v1049, 5
        %v1291 = vrot.slane %v1257, 5
        %v1292 = vsel %vm1265, %v1290, %v1291
        %v1293 = vrot.slane %v1050, 5
        %v1294 = vrot.slane %v1258, 5
        %v1295 = vsel %vm1265, %v1293, %v1294
        %v1296 = vrot.slane %v1051, 5
        %v1297 = vrot.slane %v1259, 5
        %v1298 = vsel %vm1265, %v1296, %v1297
        %v1299 = vrot.slane %v1052, 5
        %v1300 = vrot.slane %v1260, 5
        %v1301 = vsel %vm1265, %v1299, %v1300
        %v1302 = vrot.slane %v1053, 5
        %v1303 = vrot.slane %v1261, 5
        %v1304 = vsel %vm1265, %v1302, %v1303
        %v1305 = vrot.slane %v1054, 5
        %v1306 = vrot.slane %v1262, 5
        %v1307 = vsel %vm1265, %v1305, %v1306
        %v1308 = vrot.slane %v1055, 5
        %v1309 = vrot.slane %v1263, 5
        %v1310 = vsel %vm1265, %v1308, %v1309
        %v1311 = vrot.slane %v1056, 5
        %v1312 = vrot.slane %v1264, 5
        %v1313 = vsel %vm1265, %v1311, %v1312
        %vm1314 = vcmask 523264
        %v1317 = vsel %vm1314, %v1009, %v1186
        %v1319 = vsel %vm1314, %v1010, %v1186
        %v1322 = vsel %vm1314, %v1011, %v1188
        %v1324 = vsel %vm1314, %v1012, %v1188
        %v1327 = vsel %vm1314, %v1013, %v1190
        %v1329 = vsel %vm1314, %v1014, %v1190
        %v1332 = vsel %vm1314, %v1015, %v1192
        %v1334 = vsel %vm1314, %v1016, %v1192
        %v1337 = vsel %vm1314, %v1017, %v1194
        %v1339 = vsel %vm1314, %v1018, %v1194
        %v1342 = vsel %vm1314, %v1019, %v1196
        %v1344 = vsel %vm1314, %v1020, %v1196
        %v1347 = vsel %vm1314, %v1021, %v1198
        %v1349 = vsel %vm1314, %v1022, %v1198
        %v1352 = vsel %vm1314, %v1023, %v1200
        %v1354 = vsel %vm1314, %v1024, %v1200
        %v1357 = vsel %vm1314, %v1025, %v1202
        %v1359 = vsel %vm1314, %v1026, %v1202
        %v1362 = vsel %vm1314, %v1027, %v1204
        %v1364 = vsel %vm1314, %v1028, %v1204
        %v1367 = vsel %vm1314, %v1029, %v1206
        %v1369 = vsel %vm1314, %v1030, %v1206
        %v1372 = vsel %vm1314, %v1031, %v1208
        %v1374 = vsel %vm1314, %v1032, %v1208
        %v1377 = vsel %vm1314, %v1033, %v1210
        %v1379 = vsel %vm1314, %v1034, %v1210
        %v1382 = vsel %vm1314, %v1035, %v1212
        %v1384 = vsel %vm1314, %v1036, %v1212
        %v1387 = vsel %vm1314, %v1037, %v1214
        %v1389 = vsel %vm1314, %v1038, %v1214
        %v1392 = vsel %vm1314, %v1039, %v1216
        %v1394 = vsel %vm1314, %v1040, %v1216
        %vm1395 = vsmask.f32 4352
        %v1396 = vshrl.u32 %v1317, 16
        %v1398 = vrot.slane %v1396, 3
        %v1399 = vshll.u32 %v1317, 16
        %v1401 = vrot.slane %v1399, 4
        %v1402 = vor.u32 %v1398, %v1401
        %v1403 = vshrl.u32 %v1319, 16
        %v1405 = vrot.slane %v1403, 3
        %v1406 = vshll.u32 %v1319, 16
        %v1408 = vrot.slane %v1406, 4
        %v1409 = vor.u32 %v1405, %v1408
        %v1410 = vsel %vm1395, %v1402, %v1409
        %v1412 = vshrl.u32 %v1266, 16
        %v1414 = vrot.slane %v1412, 3
        %v1415 = vshll.u32 %v1266, 16
        %v1417 = vrot.slane %v1415, 4
        %v1418 = vor.u32 %v1414, %v1417
        %v1420 = vshrl.u32 %v1268, 16
        %v1422 = vrot.slane %v1420, 3
        %v1423 = vshll.u32 %v1268, 16
        %v1425 = vrot.slane %v1423, 4
        %v1426 = vor.u32 %v1422, %v1425
        %v1427 = vsel %vm1395, %v1418, %v1426
        %v1428 = vshrl.u32 %v1322, 16
        %v1430 = vrot.slane %v1428, 3
        %v1431 = vshll.u32 %v1322, 16
        %v1433 = vrot.slane %v1431, 4
        %v1434 = vor.u32 %v1430, %v1433
        %v1435 = vshrl.u32 %v1324, 16
        %v1437 = vrot.slane %v1435, 3
        %v1438 = vshll.u32 %v1324, 16
        %v1440 = vrot.slane %v1438, 4
        %v1441 = vor.u32 %v1437, %v1440
        %v1442 = vsel %vm1395, %v1434, %v1441
        %v1444 = vshrl.u32 %v1269, 16
        %v1446 = vrot.slane %v1444, 3
        %v1447 = vshll.u32 %v1269, 16
        %v1449 = vrot.slane %v1447, 4
        %v1450 = vor.u32 %v1446, %v1449
        %v1452 = vshrl.u32 %v1271, 16
        %v1454 = vrot.slane %v1452, 3
        %v1455 = vshll.u32 %v1271, 16
        %v1457 = vrot.slane %v1455, 4
        %v1458 = vor.u32 %v1454, %v1457
        %v1459 = vsel %vm1395, %v1450, %v1458
        %v1460 = vshrl.u32 %v1327, 16
        %v1462 = vrot.slane %v1460, 3
        %v1463 = vshll.u32 %v1327, 16
        %v1465 = vrot.slane %v1463, 4
        %v1466 = vor.u32 %v1462, %v1465
        %v1467 = vshrl.u32 %v1329, 16
        %v1469 = vrot.slane %v1467, 3
        %v1470 = vshll.u32 %v1329, 16
        %v1472 = vrot.slane %v1470, 4
        %v1473 = vor.u32 %v1469, %v1472
        %v1474 = vsel %vm1395, %v1466, %v1473
        %v1476 = vshrl.u32 %v1272, 16
        %v1478 = vrot.slane %v1476, 3
        %v1479 = vshll.u32 %v1272, 16
        %v1481 = vrot.slane %v1479, 4
        %v1482 = vor.u32 %v1478, %v1481
        %v1484 = vshrl.u32 %v1274, 16
        %v1486 = vrot.slane %v1484, 3
        %v1487 = vshll.u32 %v1274, 16
        %v1489 = vrot.slane %v1487, 4
        %v1490 = vor.u32 %v1486, %v1489
        %v1491 = vsel %vm1395, %v1482, %v1490
        %v1492 = vshrl.u32 %v1332, 16
        %v1494 = vrot.slane %v1492, 3
        %v1495 = vshll.u32 %v1332, 16
        %v1497 = vrot.slane %v1495, 4
        %v1498 = vor.u32 %v1494, %v1497
        %v1499 = vshrl.u32 %v1334, 16
        %v1501 = vrot.slane %v1499, 3
        %v1502 = vshll.u32 %v1334, 16
        %v1504 = vrot.slane %v1502, 4
        %v1505 = vor.u32 %v1501, %v1504
        %v1506 = vsel %vm1395, %v1498, %v1505
        %v1508 = vshrl.u32 %v1275, 16
        %v1510 = vrot.slane %v1508, 3
        %v1511 = vshll.u32 %v1275, 16
        %v1513 = vrot.slane %v1511, 4
        %v1514 = vor.u32 %v1510, %v1513
        %v1516 = vshrl.u32 %v1277, 16
        %v1518 = vrot.slane %v1516, 3
        %v1519 = vshll.u32 %v1277, 16
        %v1521 = vrot.slane %v1519, 4
        %v1522 = vor.u32 %v1518, %v1521
        %v1523 = vsel %vm1395, %v1514, %v1522
        %v1524 = vshrl.u32 %v1337, 16
        %v1526 = vrot.slane %v1524, 3
        %v1527 = vshll.u32 %v1337, 16
        %v1529 = vrot.slane %v1527, 4
        %v1530 = vor.u32 %v1526, %v1529
        %v1531 = vshrl.u32 %v1339, 16
        %v1533 = vrot.slane %v1531, 3
        %v1534 = vshll.u32 %v1339, 16
        %v1536 = vrot.slane %v1534, 4
        %v1537 = vor.u32 %v1533, %v1536
        %v1538 = vsel %vm1395, %v1530, %v1537
        %v1540 = vshrl.u32 %v1278, 16
        %v1542 = vrot.slane %v1540, 3
        %v1543 = vshll.u32 %v1278, 16
        %v1545 = vrot.slane %v1543, 4
        %v1546 = vor.u32 %v1542, %v1545
        %v1548 = vshrl.u32 %v1280, 16
        %v1550 = vrot.slane %v1548, 3
        %v1551 = vshll.u32 %v1280, 16
        %v1553 = vrot.slane %v1551, 4
        %v1554 = vor.u32 %v1550, %v1553
        %v1555 = vsel %vm1395, %v1546, %v1554
        %v1556 = vshrl.u32 %v1342, 16
        %v1558 = vrot.slane %v1556, 3
        %v1559 = vshll.u32 %v1342, 16
        %v1561 = vrot.slane %v1559, 4
        %v1562 = vor.u32 %v1558, %v1561
        %v1563 = vshrl.u32 %v1344, 16
        %v1565 = vrot.slane %v1563, 3
        %v1566 = vshll.u32 %v1344, 16
        %v1568 = vrot.slane %v1566, 4
        %v1569 = vor.u32 %v1565, %v1568
        %v1570 = vsel %vm1395, %v1562, %v1569
        %v1572 = vshrl.u32 %v1281, 16
        %v1574 = vrot.slane %v1572, 3
        %v1575 = vshll.u32 %v1281, 16
        %v1577 = vrot.slane %v1575, 4
        %v1578 = vor.u32 %v1574, %v1577
        %v1580 = vshrl.u32 %v1283, 16
        %v1582 = vrot.slane %v1580, 3
        %v1583 = vshll.u32 %v1283, 16
        %v1585 = vrot.slane %v1583, 4
        %v1586 = vor.u32 %v1582, %v1585
        %v1587 = vsel %vm1395, %v1578, %v1586
        %v1588 = vshrl.u32 %v1347, 16
        %v1590 = vrot.slane %v1588, 3
        %v1591 = vshll.u32 %v1347, 16
        %v1593 = vrot.slane %v1591, 4
        %v1594 = vor.u32 %v1590, %v1593
        %v1595 = vshrl.u32 %v1349, 16
        %v1597 = vrot.slane %v1595, 3
        %v1598 = vshll.u32 %v1349, 16
        %v1600 = vrot.slane %v1598, 4
        %v1601 = vor.u32 %v1597, %v1600
        %v1602 = vsel %vm1395, %v1594, %v1601
        %v1604 = vshrl.u32 %v1284, 16
        %v1606 = vrot.slane %v1604, 3
        %v1607 = vshll.u32 %v1284, 16
        %v1609 = vrot.slane %v1607, 4
        %v1610 = vor.u32 %v1606, %v1609
        %v1612 = vshrl.u32 %v1286, 16
        %v1614 = vrot.slane %v1612, 3
        %v1615 = vshll.u32 %v1286, 16
        %v1617 = vrot.slane %v1615, 4
        %v1618 = vor.u32 %v1614, %v1617
        %v1619 = vsel %vm1395, %v1610, %v1618
        %v1620 = vshrl.u32 %v1352, 16
        %v1622 = vrot.slane %v1620, 3
        %v1623 = vshll.u32 %v1352, 16
        %v1625 = vrot.slane %v1623, 4
        %v1626 = vor.u32 %v1622, %v1625
        %v1627 = vshrl.u32 %v1354, 16
        %v1629 = vrot.slane %v1627, 3
        %v1630 = vshll.u32 %v1354, 16
        %v1632 = vrot.slane %v1630, 4
        %v1633 = vor.u32 %v1629, %v1632
        %v1634 = vsel %vm1395, %v1626, %v1633
        %v1636 = vshrl.u32 %v1287, 16
        %v1638 = vrot.slane %v1636, 3
        %v1639 = vshll.u32 %v1287, 16
        %v1641 = vrot.slane %v1639, 4
        %v1642 = vor.u32 %v1638, %v1641
        %v1644 = vshrl.u32 %v1289, 16
        %v1646 = vrot.slane %v1644, 3
        %v1647 = vshll.u32 %v1289, 16
        %v1649 = vrot.slane %v1647, 4
        %v1650 = vor.u32 %v1646, %v1649
        %v1651 = vsel %vm1395, %v1642, %v1650
        %v1652 = vshrl.u32 %v1357, 16
        %v1654 = vrot.slane %v1652, 3
        %v1655 = vshll.u32 %v1357, 16
        %v1657 = vrot.slane %v1655, 4
        %v1658 = vor.u32 %v1654, %v1657
        %v1659 = vshrl.u32 %v1359, 16
        %v1661 = vrot.slane %v1659, 3
        %v1662 = vshll.u32 %v1359, 16
        %v1664 = vrot.slane %v1662, 4
        %v1665 = vor.u32 %v1661, %v1664
        %v1666 = vsel %vm1395, %v1658, %v1665
        %v1668 = vshrl.u32 %v1290, 16
        %v1670 = vrot.slane %v1668, 3
        %v1671 = vshll.u32 %v1290, 16
        %v1673 = vrot.slane %v1671, 4
        %v1674 = vor.u32 %v1670, %v1673
        %v1676 = vshrl.u32 %v1292, 16
        %v1678 = vrot.slane %v1676, 3
        %v1679 = vshll.u32 %v1292, 16
        %v1681 = vrot.slane %v1679, 4
        %v1682 = vor.u32 %v1678, %v1681
        %v1683 = vsel %vm1395, %v1674, %v1682
        %v1684 = vshrl.u32 %v1362, 16
        %v1686 = vrot.slane %v1684, 3
        %v1687 = vshll.u32 %v1362, 16
        %v1689 = vrot.slane %v1687, 4
        %v1690 = vor.u32 %v1686, %v1689
        %v1691 = vshrl.u32 %v1364, 16
        %v1693 = vrot.slane %v1691, 3
        %v1694 = vshll.u32 %v1364, 16
        %v1696 = vrot.slane %v1694, 4
        %v1697 = vor.u32 %v1693, %v1696
        %v1698 = vsel %vm1395, %v1690, %v1697
        %v1700 = vshrl.u32 %v1293, 16
        %v1702 = vrot.slane %v1700, 3
        %v1703 = vshll.u32 %v1293, 16
        %v1705 = vrot.slane %v1703, 4
        %v1706 = vor.u32 %v1702, %v1705
        %v1708 = vshrl.u32 %v1295, 16
        %v1710 = vrot.slane %v1708, 3
        %v1711 = vshll.u32 %v1295, 16
        %v1713 = vrot.slane %v1711, 4
        %v1714 = vor.u32 %v1710, %v1713
        %v1715 = vsel %vm1395, %v1706, %v1714
        %v1716 = vshrl.u32 %v1367, 16
        %v1718 = vrot.slane %v1716, 3
        %v1719 = vshll.u32 %v1367, 16
        %v1721 = vrot.slane %v1719, 4
        %v1722 = vor.u32 %v1718, %v1721
        %v1723 = vshrl.u32 %v1369, 16
        %v1725 = vrot.slane %v1723, 3
        %v1726 = vshll.u32 %v1369, 16
        %v1728 = vrot.slane %v1726, 4
        %v1729 = vor.u32 %v1725, %v1728
        %v1730 = vsel %vm1395, %v1722, %v1729
        %v1732 = vshrl.u32 %v1296, 16
        %v1734 = vrot.slane %v1732, 3
        %v1735 = vshll.u32 %v1296, 16
        %v1737 = vrot.slane %v1735, 4
        %v1738 = vor.u32 %v1734, %v1737
        %v1740 = vshrl.u32 %v1298, 16
        %v1742 = vrot.slane %v1740, 3
        %v1743 = vshll.u32 %v1298, 16
        %v1745 = vrot.slane %v1743, 4
        %v1746 = vor.u32 %v1742, %v1745
        %v1747 = vsel %vm1395, %v1738, %v1746
        %v1748 = vshrl.u32 %v1372, 16
        %v1750 = vrot.slane %v1748, 3
        %v1751 = vshll.u32 %v1372, 16
        %v1753 = vrot.slane %v1751, 4
        %v1754 = vor.u32 %v1750, %v1753
        %v1755 = vshrl.u32 %v1374, 16
        %v1757 = vrot.slane %v1755, 3
        %v1758 = vshll.u32 %v1374, 16
        %v1760 = vrot.slane %v1758, 4
        %v1761 = vor.u32 %v1757, %v1760
        %v1762 = vsel %vm1395, %v1754, %v1761
        %v1764 = vshrl.u32 %v1299, 16
        %v1766 = vrot.slane %v1764, 3
        %v1767 = vshll.u32 %v1299, 16
        %v1769 = vrot.slane %v1767, 4
        %v1770 = vor.u32 %v1766, %v1769
        %v1772 = vshrl.u32 %v1301, 16
        %v1774 = vrot.slane %v1772, 3
        %v1775 = vshll.u32 %v1301, 16
        %v1777 = vrot.slane %v1775, 4
        %v1778 = vor.u32 %v1774, %v1777
        %v1779 = vsel %vm1395, %v1770, %v1778
        %v1780 = vshrl.u32 %v1377, 16
        %v1782 = vrot.slane %v1780, 3
        %v1783 = vshll.u32 %v1377, 16
        %v1785 = vrot.slane %v1783, 4
        %v1786 = vor.u32 %v1782, %v1785
        %v1787 = vshrl.u32 %v1379, 16
        %v1789 = vrot.slane %v1787, 3
        %v1790 = vshll.u32 %v1379, 16
        %v1792 = vrot.slane %v1790, 4
        %v1793 = vor.u32 %v1789, %v1792
        %v1794 = vsel %vm1395, %v1786, %v1793
        %v1796 = vshrl.u32 %v1302, 16
        %v1798 = vrot.slane %v1796, 3
        %v1799 = vshll.u32 %v1302, 16
        %v1801 = vrot.slane %v1799, 4
        %v1802 = vor.u32 %v1798, %v1801
        %v1804 = vshrl.u32 %v1304, 16
        %v1806 = vrot.slane %v1804, 3
        %v1807 = vshll.u32 %v1304, 16
        %v1809 = vrot.slane %v1807, 4
        %v1810 = vor.u32 %v1806, %v1809
        %v1811 = vsel %vm1395, %v1802, %v1810
        %v1812 = vshrl.u32 %v1382, 16
        %v1814 = vrot.slane %v1812, 3
        %v1815 = vshll.u32 %v1382, 16
        %v1817 = vrot.slane %v1815, 4
        %v1818 = vor.u32 %v1814, %v1817
        %v1819 = vshrl.u32 %v1384, 16
        %v1821 = vrot.slane %v1819, 3
        %v1822 = vshll.u32 %v1384, 16
        %v1824 = vrot.slane %v1822, 4
        %v1825 = vor.u32 %v1821, %v1824
        %v1826 = vsel %vm1395, %v1818, %v1825
        %v1828 = vshrl.u32 %v1305, 16
        %v1830 = vrot.slane %v1828, 3
        %v1831 = vshll.u32 %v1305, 16
        %v1833 = vrot.slane %v1831, 4
        %v1834 = vor.u32 %v1830, %v1833
        %v1836 = vshrl.u32 %v1307, 16
        %v1838 = vrot.slane %v1836, 3
        %v1839 = vshll.u32 %v1307, 16
        %v1841 = vrot.slane %v1839, 4
        %v1842 = vor.u32 %v1838, %v1841
        %v1843 = vsel %vm1395, %v1834, %v1842
        %v1844 = vshrl.u32 %v1387, 16
        %v1846 = vrot.slane %v1844, 3
        %v1847 = vshll.u32 %v1387, 16
        %v1849 = vrot.slane %v1847, 4
        %v1850 = vor.u32 %v1846, %v1849
        %v1851 = vshrl.u32 %v1389, 16
        %v1853 = vrot.slane %v1851, 3
        %v1854 = vshll.u32 %v1389, 16
        %v1856 = vrot.slane %v1854, 4
        %v1857 = vor.u32 %v1853, %v1856
        %v1858 = vsel %vm1395, %v1850, %v1857
        %v1860 = vshrl.u32 %v1308, 16
        %v1862 = vrot.slane %v1860, 3
        %v1863 = vshll.u32 %v1308, 16
        %v1865 = vrot.slane %v1863, 4
        %v1866 = vor.u32 %v1862, %v1865
        %v1868 = vshrl.u32 %v1310, 16
        %v1870 = vrot.slane %v1868, 3
        %v1871 = vshll.u32 %v1310, 16
        %v1873 = vrot.slane %v1871, 4
        %v1874 = vor.u32 %v1870, %v1873
        %v1875 = vsel %vm1395, %v1866, %v1874
        %v1876 = vshrl.u32 %v1392, 16
        %v1878 = vrot.slane %v1876, 3
        %v1879 = vshll.u32 %v1392, 16
        %v1881 = vrot.slane %v1879, 4
        %v1882 = vor.u32 %v1878, %v1881
        %v1883 = vshrl.u32 %v1394, 16
        %v1885 = vrot.slane %v1883, 3
        %v1886 = vshll.u32 %v1394, 16
        %v1888 = vrot.slane %v1886, 4
        %v1889 = vor.u32 %v1885, %v1888
        %v1890 = vsel %vm1395, %v1882, %v1889
        %v1892 = vshrl.u32 %v1311, 16
        %v1894 = vrot.slane %v1892, 3
        %v1895 = vshll.u32 %v1311, 16
        %v1897 = vrot.slane %v1895, 4
        %v1898 = vor.u32 %v1894, %v1897
        %v1900 = vshrl.u32 %v1313, 16
        %v1902 = vrot.slane %v1900, 3
        %v1903 = vshll.u32 %v1313, 16
        %v1905 = vrot.slane %v1903, 4
        %v1906 = vor.u32 %v1902, %v1905
        %v1907 = vsel %vm1395, %v1898, %v1906
        %v1924 = vld [vmem:[#allocation6] sm:$0xf]
        %v1925 = vld [vmem:[#allocation6 + $0x4] sm:$0xf]
        %v1926 = vld [vmem:[#allocation6 + $0x8] sm:$0xf]
        %v1927 = vld [vmem:[#allocation6 + $0xc] sm:$0xf]
        %v1928 = vld [vmem:[#allocation6 + $0x10] sm:$0xf]
        %v1929 = vld [vmem:[#allocation6 + $0x14] sm:$0xf]
        %v1930 = vld [vmem:[#allocation6 + $0x18] sm:$0xf]
        %v1931 = vld [vmem:[#allocation6 + $0x1c] sm:$0xf]
        %v1932 = vld [vmem:[#allocation6 + $0x20] sm:$0xf]
        %v1933 = vld [vmem:[#allocation6 + $0x24] sm:$0xf]
        %v1934 = vld [vmem:[#allocation6 + $0x28] sm:$0xf]
        %v1935 = vld [vmem:[#allocation6 + $0x2c] sm:$0xf]
        %v1936 = vld [vmem:[#allocation6 + $0x30] sm:$0xf]
        %v1937 = vld [vmem:[#allocation6 + $0x34] sm:$0xf]
        %v1938 = vld [vmem:[#allocation6 + $0x38] sm:$0xf]
        %v1939 = vld [vmem:[#allocation6 + $0x3c] sm:$0xf]
        %v1940 = vld [vmem:[#allocation6 + $0x40] sm:$0xf]
        %v1941 = vld [vmem:[#allocation6 + $0x44] sm:$0xf]
        %v1942 = vld [vmem:[#allocation6 + $0x48] sm:$0xf]
        %v1943 = vld [vmem:[#allocation6 + $0x4c] sm:$0xf]
        %v1944 = vld [vmem:[#allocation6 + $0x50] sm:$0xf]
        %v1945 = vld [vmem:[#allocation6 + $0x54] sm:$0xf]
        %v1946 = vld [vmem:[#allocation6 + $0x58] sm:$0xf]
        %v1947 = vld [vmem:[#allocation6 + $0x5c] sm:$0xf]
        %v1948 = vld [vmem:[%s816] sm:$0x8]
        %v1949 = vld [vmem:[%s816 + $0x4] sm:$0xf]
        %v1950 = vld [vmem:[%s816 + $0x8] sm:$0xf]
        %v1951 = vld [vmem:[%s816 + $0x10] sm:$0x8]
        %v1952 = vld [vmem:[%s816 + $0x14] sm:$0xf]
        %v1953 = vld [vmem:[%s816 + $0x18] sm:$0xf]
        %v1954 = vld [vmem:[%s816 + $0x20] sm:$0x8]
        %v1955 = vld [vmem:[%s816 + $0x24] sm:$0xf]
        %v1956 = vld [vmem:[%s816 + $0x28] sm:$0xf]
        %v1957 = vld [vmem:[%s816 + $0x30] sm:$0x8]
        %v1958 = vld [vmem:[%s816 + $0x34] sm:$0xf]
        %v1959 = vld [vmem:[%s816 + $0x38] sm:$0xf]
        %v1960 = vld [vmem:[%s816 + $0x40] sm:$0x8]
        %v1961 = vld [vmem:[%s816 + $0x44] sm:$0xf]
        %v1962 = vld [vmem:[%s816 + $0x48] sm:$0xf]
        %v1963 = vld [vmem:[%s816 + $0x50] sm:$0x8]
        %v1964 = vld [vmem:[%s816 + $0x54] sm:$0xf]
        %v1965 = vld [vmem:[%s816 + $0x58] sm:$0xf]
        %v1966 = vld [vmem:[%s816 + $0x60] sm:$0x8]
        %v1967 = vld [vmem:[%s816 + $0x64] sm:$0xf]
        %v1968 = vld [vmem:[%s816 + $0x68] sm:$0xf]
        %v1969 = vld [vmem:[%s816 + $0x70] sm:$0x8]
        %v1970 = vld [vmem:[%s816 + $0x74] sm:$0xf]
        %v1971 = vld [vmem:[%s816 + $0x78] sm:$0xf]
        %v1972 = vld [vmem:[%s816 + $0x80] sm:$0x8]
        %v1973 = vld [vmem:[%s816 + $0x84] sm:$0xf]
        %v1974 = vld [vmem:[%s816 + $0x88] sm:$0xf]
        %v1975 = vld [vmem:[%s816 + $0x90] sm:$0x8]
        %v1976 = vld [vmem:[%s816 + $0x94] sm:$0xf]
        %v1977 = vld [vmem:[%s816 + $0x98] sm:$0xf]
        %v1978 = vld [vmem:[%s816 + $0xa0] sm:$0x8]
        %v1979 = vld [vmem:[%s816 + $0xa4] sm:$0xf]
        %v1980 = vld [vmem:[%s816 + $0xa8] sm:$0xf]
        %v1981 = vld [vmem:[%s816 + $0xb0] sm:$0x8]
        %v1982 = vld [vmem:[%s816 + $0xb4] sm:$0xf]
        %v1983 = vld [vmem:[%s816 + $0xb8] sm:$0xf]
        %v1984 = vld [vmem:[%s816 + $0xc0] sm:$0x8]
        %v1985 = vld [vmem:[%s816 + $0xc4] sm:$0xf]
        %v1986 = vld [vmem:[%s816 + $0xc8] sm:$0xf]
        %v1987 = vld [vmem:[%s816 + $0xd0] sm:$0x8]
        %v1988 = vld [vmem:[%s816 + $0xd4] sm:$0xf]
        %v1989 = vld [vmem:[%s816 + $0xd8] sm:$0xf]
        %v1990 = vld [vmem:[%s816 + $0xe0] sm:$0x8]
        %v1991 = vld [vmem:[%s816 + $0xe4] sm:$0xf]
        %v1992 = vld [vmem:[%s816 + $0xe8] sm:$0xf]
        %v1993 = vld [vmem:[%s816 + $0xf0] sm:$0x8]
        %v1994 = vld [vmem:[%s816 + $0xf4] sm:$0xf]
        %v1995 = vld [vmem:[%s816 + $0xf8] sm:$0xf]
        %v1996 = vld [vmem:[%s816 + $0xc] sm:$0x1]
        %v1997 = vld [vmem:[%s816 + $0x1c] sm:$0x1]
        %v1998 = vld [vmem:[%s816 + $0x2c] sm:$0x1]
        %v1999 = vld [vmem:[%s816 + $0x3c] sm:$0x1]
        %v2000 = vld [vmem:[%s816 + $0x4c] sm:$0x1]
        %v2001 = vld [vmem:[%s816 + $0x5c] sm:$0x1]
        %v2002 = vld [vmem:[%s816 + $0x6c] sm:$0x1]
        %v2003 = vld [vmem:[%s816 + $0x7c] sm:$0x1]
        %v2004 = vld [vmem:[%s816 + $0x8c] sm:$0x1]
        %v2005 = vld [vmem:[%s816 + $0x9c] sm:$0x1]
        %v2006 = vld [vmem:[%s816 + $0xac] sm:$0x1]
        %v2007 = vld [vmem:[%s816 + $0xbc] sm:$0x1]
        %v2008 = vld [vmem:[%s816 + $0xcc] sm:$0x1]
        %v2009 = vld [vmem:[%s816 + $0xdc] sm:$0x1]
        %v2010 = vld [vmem:[%s816 + $0xec] sm:$0x1]
        %v2011 = vld [vmem:[%s816 + $0xfc] sm:$0x1]
        %v2060 = vunpack.c.l.b16 %v1948
        %v2061 = vunpack.c.l.b16 %v1949
        %v2062 = vunpack.c.l.b16 %v1950
        %v2063 = vunpack.c.l.b16 %v1951
        %v2064 = vunpack.c.l.b16 %v1952
        %v2065 = vunpack.c.l.b16 %v1953
        %v2066 = vunpack.c.l.b16 %v1954
        %v2067 = vunpack.c.l.b16 %v1955
        %v2068 = vunpack.c.l.b16 %v1956
        %v2069 = vunpack.c.l.b16 %v1957
        %v2070 = vunpack.c.l.b16 %v1958
        %v2071 = vunpack.c.l.b16 %v1959
        %v2072 = vunpack.c.l.b16 %v1960
        %v2073 = vunpack.c.l.b16 %v1961
        %v2074 = vunpack.c.l.b16 %v1962
        %v2075 = vunpack.c.l.b16 %v1963
        %v2076 = vunpack.c.l.b16 %v1964
        %v2077 = vunpack.c.l.b16 %v1965
        %v2078 = vunpack.c.l.b16 %v1966
        %v2079 = vunpack.c.l.b16 %v1967
        %v2080 = vunpack.c.l.b16 %v1968
        %v2081 = vunpack.c.l.b16 %v1969
        %v2082 = vunpack.c.l.b16 %v1970
        %v2083 = vunpack.c.l.b16 %v1971
        %v2084 = vunpack.c.l.b16 %v1972
        %v2085 = vunpack.c.l.b16 %v1973
        %v2086 = vunpack.c.l.b16 %v1974
        %v2087 = vunpack.c.l.b16 %v1975
        %v2088 = vunpack.c.l.b16 %v1976
        %v2089 = vunpack.c.l.b16 %v1977
        %v2090 = vunpack.c.l.b16 %v1978
        %v2091 = vunpack.c.l.b16 %v1979
        %v2092 = vunpack.c.l.b16 %v1980
        %v2093 = vunpack.c.l.b16 %v1981
        %v2094 = vunpack.c.l.b16 %v1982
        %v2095 = vunpack.c.l.b16 %v1983
        %v2096 = vunpack.c.l.b16 %v1984
        %v2097 = vunpack.c.l.b16 %v1985
        %v2098 = vunpack.c.l.b16 %v1986
        %v2099 = vunpack.c.l.b16 %v1987
        %v2100 = vunpack.c.l.b16 %v1988
        %v2101 = vunpack.c.l.b16 %v1989
        %v2102 = vunpack.c.l.b16 %v1990
        %v2103 = vunpack.c.l.b16 %v1991
        %v2104 = vunpack.c.l.b16 %v1992
        %v2105 = vunpack.c.l.b16 %v1993
        %v2106 = vunpack.c.l.b16 %v1994
        %v2107 = vunpack.c.l.b16 %v1995
        %v2108 = vpack.c.b16 %v2061, %v2060
        %v2109 = vpack.c.b16 %v2062, %v2062
        %v2110 = vpack.c.b16 %v2064, %v2063
        %v2111 = vpack.c.b16 %v2065, %v2065
        %v2112 = vpack.c.b16 %v2067, %v2066
        %v2113 = vpack.c.b16 %v2068, %v2068
        %v2114 = vpack.c.b16 %v2070, %v2069
        %v2115 = vpack.c.b16 %v2071, %v2071
        %v2116 = vpack.c.b16 %v2073, %v2072
        %v2117 = vpack.c.b16 %v2074, %v2074
        %v2118 = vpack.c.b16 %v2076, %v2075
        %v2119 = vpack.c.b16 %v2077, %v2077
        %v2120 = vpack.c.b16 %v2079, %v2078
        %v2121 = vpack.c.b16 %v2080, %v2080
        %v2122 = vpack.c.b16 %v2082, %v2081
        %v2123 = vpack.c.b16 %v2083, %v2083
        %v2124 = vpack.c.b16 %v2085, %v2084
        %v2125 = vpack.c.b16 %v2086, %v2086
        %v2126 = vpack.c.b16 %v2088, %v2087
        %v2127 = vpack.c.b16 %v2089, %v2089
        %v2128 = vpack.c.b16 %v2091, %v2090
        %v2129 = vpack.c.b16 %v2092, %v2092
        %v2130 = vpack.c.b16 %v2094, %v2093
        %v2131 = vpack.c.b16 %v2095, %v2095
        %v2132 = vpack.c.b16 %v2097, %v2096
        %v2133 = vpack.c.b16 %v2098, %v2098
        %v2134 = vpack.c.b16 %v2100, %v2099
        %v2135 = vpack.c.b16 %v2101, %v2101
        %v2136 = vpack.c.b16 %v2103, %v2102
        %v2137 = vpack.c.b16 %v2104, %v2104
        %v2138 = vpack.c.b16 %v2106, %v2105
        %v2139 = vpack.c.b16 %v2107, %v2107
        %v2140 = vpack.c.b16 %v2062, %v2061
        %v2141 = vpack.c.b16 %v2065, %v2064
        %v2142 = vpack.c.b16 %v2068, %v2067
        %v2143 = vpack.c.b16 %v2071, %v2070
        %v2144 = vpack.c.b16 %v2074, %v2073
        %v2145 = vpack.c.b16 %v2077, %v2076
        %v2146 = vpack.c.b16 %v2080, %v2079
        %v2147 = vpack.c.b16 %v2083, %v2082
        %v2148 = vpack.c.b16 %v2086, %v2085
        %v2149 = vpack.c.b16 %v2089, %v2088
        %v2150 = vpack.c.b16 %v2092, %v2091
        %v2151 = vpack.c.b16 %v2095, %v2094
        %v2152 = vpack.c.b16 %v2098, %v2097
        %v2153 = vpack.c.b16 %v2101, %v2100
        %v2154 = vpack.c.b16 %v2104, %v2103
        %v2155 = vpack.c.b16 %v2107, %v2106
        %v2157 = vshrl.u32 %v2140, 16
        %v2159 = vrot.slane %v2157, 4
        %v2160 = vshll.u32 %v2140, 16
        %v2162 = vrot.slane %v2160, 5
        %v2163 = vor.u32 %v2159, %v2162
        %v2165 = vshrl.u32 %v2141, 16
        %v2167 = vrot.slane %v2165, 4
        %v2168 = vshll.u32 %v2141, 16
        %v2170 = vrot.slane %v2168, 5
        %v2171 = vor.u32 %v2167, %v2170
        %v2173 = vshrl.u32 %v2142, 16
        %v2175 = vrot.slane %v2173, 4
        %v2176 = vshll.u32 %v2142, 16
        %v2178 = vrot.slane %v2176, 5
        %v2179 = vor.u32 %v2175, %v2178
        %v2181 = vshrl.u32 %v2143, 16
        %v2183 = vrot.slane %v2181, 4
        %v2184 = vshll.u32 %v2143, 16
        %v2186 = vrot.slane %v2184, 5
        %v2187 = vor.u32 %v2183, %v2186
        %v2189 = vshrl.u32 %v2144, 16
        %v2191 = vrot.slane %v2189, 4
        %v2192 = vshll.u32 %v2144, 16
        %v2194 = vrot.slane %v2192, 5
        %v2195 = vor.u32 %v2191, %v2194
        %v2197 = vshrl.u32 %v2145, 16
        %v2199 = vrot.slane %v2197, 4
        %v2200 = vshll.u32 %v2145, 16
        %v2202 = vrot.slane %v2200, 5
        %v2203 = vor.u32 %v2199, %v2202
        %v2205 = vshrl.u32 %v2146, 16
        %v2207 = vrot.slane %v2205, 4
        %v2208 = vshll.u32 %v2146, 16
        %v2210 = vrot.slane %v2208, 5
        %v2211 = vor.u32 %v2207, %v2210
        %v2213 = vshrl.u32 %v2147, 16
        %v2215 = vrot.slane %v2213, 4
        %v2216 = vshll.u32 %v2147, 16
        %v2218 = vrot.slane %v2216, 5
        %v2219 = vor.u32 %v2215, %v2218
        %v2221 = vshrl.u32 %v2148, 16
        %v2223 = vrot.slane %v2221, 4
        %v2224 = vshll.u32 %v2148, 16
        %v2226 = vrot.slane %v2224, 5
        %v2227 = vor.u32 %v2223, %v2226
        %v2229 = vshrl.u32 %v2149, 16
        %v2231 = vrot.slane %v2229, 4
        %v2232 = vshll.u32 %v2149, 16
        %v2234 = vrot.slane %v2232, 5
        %v2235 = vor.u32 %v2231, %v2234
        %v2237 = vshrl.u32 %v2150, 16
        %v2239 = vrot.slane %v2237, 4
        %v2240 = vshll.u32 %v2150, 16
        %v2242 = vrot.slane %v2240, 5
        %v2243 = vor.u32 %v2239, %v2242
        %v2245 = vshrl.u32 %v2151, 16
        %v2247 = vrot.slane %v2245, 4
        %v2248 = vshll.u32 %v2151, 16
        %v2250 = vrot.slane %v2248, 5
        %v2251 = vor.u32 %v2247, %v2250
        %v2253 = vshrl.u32 %v2152, 16
        %v2255 = vrot.slane %v2253, 4
        %v2256 = vshll.u32 %v2152, 16
        %v2258 = vrot.slane %v2256, 5
        %v2259 = vor.u32 %v2255, %v2258
        %v2261 = vshrl.u32 %v2153, 16
        %v2263 = vrot.slane %v2261, 4
        %v2264 = vshll.u32 %v2153, 16
        %v2266 = vrot.slane %v2264, 5
        %v2267 = vor.u32 %v2263, %v2266
        %v2269 = vshrl.u32 %v2154, 16
        %v2271 = vrot.slane %v2269, 4
        %v2272 = vshll.u32 %v2154, 16
        %v2274 = vrot.slane %v2272, 5
        %v2275 = vor.u32 %v2271, %v2274
        %v2277 = vshrl.u32 %v2155, 16
        %v2279 = vrot.slane %v2277, 4
        %v2280 = vshll.u32 %v2155, 16
        %v2282 = vrot.slane %v2280, 5
        %v2283 = vor.u32 %v2279, %v2282
        %2284 = vrot.lane.b32.xlu0 %v2163, 64
        %v2285 = vpop.permute.xlu0 %2284
        %2286 = vrot.lane.b32.xlu0 %v2171, 64
        %v2287 = vpop.permute.xlu0 %2286
        %2288 = vrot.lane.b32.xlu0 %v2179, 64
        %v2289 = vpop.permute.xlu0 %2288
        %2290 = vrot.lane.b32.xlu0 %v2187, 64
        %v2291 = vpop.permute.xlu0 %2290
        %2292 = vrot.lane.b32.xlu0 %v2195, 64
        %v2293 = vpop.permute.xlu0 %2292
        %2294 = vrot.lane.b32.xlu0 %v2203, 64
        %v2295 = vpop.permute.xlu0 %2294
        %2296 = vrot.lane.b32.xlu0 %v2211, 64
        %v2297 = vpop.permute.xlu0 %2296
        %2298 = vrot.lane.b32.xlu0 %v2219, 64
        %v2299 = vpop.permute.xlu0 %2298
        %2300 = vrot.lane.b32.xlu0 %v2227, 64
        %v2301 = vpop.permute.xlu0 %2300
        %2302 = vrot.lane.b32.xlu0 %v2235, 64
        %v2303 = vpop.permute.xlu0 %2302
        %2304 = vrot.lane.b32.xlu0 %v2243, 64
        %v2305 = vpop.permute.xlu0 %2304
        %2306 = vrot.lane.b32.xlu0 %v2251, 64
        %v2307 = vpop.permute.xlu0 %2306
        %2308 = vrot.lane.b32.xlu0 %v2259, 64
        %v2309 = vpop.permute.xlu0 %2308
        %2310 = vrot.lane.b32.xlu0 %v2267, 64
        %v2311 = vpop.permute.xlu0 %2310
        %2312 = vrot.lane.b32.xlu0 %v2275, 64
        %v2313 = vpop.permute.xlu0 %2312
        %2314 = vrot.lane.b32.xlu0 %v2283, 64
        %v2315 = vpop.permute.xlu0 %2314
        %v2332 = vunpack.c.l.b16 %v1996
        %v2333 = vunpack.c.l.b16 %v1997
        %v2334 = vunpack.c.l.b16 %v1998
        %v2335 = vunpack.c.l.b16 %v1999
        %v2336 = vunpack.c.l.b16 %v2000
        %v2337 = vunpack.c.l.b16 %v2001
        %v2338 = vunpack.c.l.b16 %v2002
        %v2339 = vunpack.c.l.b16 %v2003
        %v2340 = vunpack.c.l.b16 %v2004
        %v2341 = vunpack.c.l.b16 %v2005
        %v2342 = vunpack.c.l.b16 %v2006
        %v2343 = vunpack.c.l.b16 %v2007
        %v2344 = vunpack.c.l.b16 %v2008
        %v2345 = vunpack.c.l.b16 %v2009
        %v2346 = vunpack.c.l.b16 %v2010
        %v2347 = vunpack.c.l.b16 %v2011
        %v2348 = vpack.c.b16 %v2332, %v2332
        %v2349 = vpack.c.b16 %v2333, %v2333
        %v2350 = vpack.c.b16 %v2334, %v2334
        %v2351 = vpack.c.b16 %v2335, %v2335
        %v2352 = vpack.c.b16 %v2336, %v2336
        %v2353 = vpack.c.b16 %v2337, %v2337
        %v2354 = vpack.c.b16 %v2338, %v2338
        %v2355 = vpack.c.b16 %v2339, %v2339
        %v2356 = vpack.c.b16 %v2340, %v2340
        %v2357 = vpack.c.b16 %v2341, %v2341
        %v2358 = vpack.c.b16 %v2342, %v2342
        %v2359 = vpack.c.b16 %v2343, %v2343
        %v2360 = vpack.c.b16 %v2344, %v2344
        %v2361 = vpack.c.b16 %v2345, %v2345
        %v2362 = vpack.c.b16 %v2346, %v2346
        %v2363 = vpack.c.b16 %v2347, %v2347
        %v2364 = vrot.slane %v2140, 5
        %v2365 = vrot.slane %v2348, 5
        %v2366 = vsel %vm1265, %v2364, %v2365
        %v2367 = vrot.slane %v2141, 5
        %v2368 = vrot.slane %v2349, 5
        %v2369 = vsel %vm1265, %v2367, %v2368
        %v2370 = vrot.slane %v2142, 5
        %v2371 = vrot.slane %v2350, 5
        %v2372 = vsel %vm1265, %v2370, %v2371
        %v2373 = vrot.slane %v2143, 5
        %v2374 = vrot.slane %v2351, 5
        %v2375 = vsel %vm1265, %v2373, %v2374
        %v2376 = vrot.slane %v2144, 5
        %v2377 = vrot.slane %v2352, 5
        %v2378 = vsel %vm1265, %v2376, %v2377
        %v2379 = vrot.slane %v2145, 5
        %v2380 = vrot.slane %v2353, 5
        %v2381 = vsel %vm1265, %v2379, %v2380
        %v2382 = vrot.slane %v2146, 5
        %v2383 = vrot.slane %v2354, 5
        %v2384 = vsel %vm1265, %v2382, %v2383
        %v2385 = vrot.slane %v2147, 5
        %v2386 = vrot.slane %v2355, 5
        %v2387 = vsel %vm1265, %v2385, %v2386
        %v2388 = vrot.slane %v2148, 5
        %v2389 = vrot.slane %v2356, 5
        %v2390 = vsel %vm1265, %v2388, %v2389
        %v2391 = vrot.slane %v2149, 5
        %v2392 = vrot.slane %v2357, 5
        %v2393 = vsel %vm1265, %v2391, %v2392
        %v2394 = vrot.slane %v2150, 5
        %v2395 = vrot.slane %v2358, 5
        %v2396 = vsel %vm1265, %v2394, %v2395
        %v2397 = vrot.slane %v2151, 5
        %v2398 = vrot.slane %v2359, 5
        %v2399 = vsel %vm1265, %v2397, %v2398
        %v2400 = vrot.slane %v2152, 5
        %v2401 = vrot.slane %v2360, 5
        %v2402 = vsel %vm1265, %v2400, %v2401
        %v2403 = vrot.slane %v2153, 5
        %v2404 = vrot.slane %v2361, 5
        %v2405 = vsel %vm1265, %v2403, %v2404
        %v2406 = vrot.slane %v2154, 5
        %v2407 = vrot.slane %v2362, 5
        %v2408 = vsel %vm1265, %v2406, %v2407
        %v2409 = vrot.slane %v2155, 5
        %v2410 = vrot.slane %v2363, 5
        %v2411 = vsel %vm1265, %v2409, %v2410
        %v2414 = vsel %vm1314, %v2108, %v2285
        %v2416 = vsel %vm1314, %v2109, %v2285
        %v2419 = vsel %vm1314, %v2110, %v2287
        %v2421 = vsel %vm1314, %v2111, %v2287
        %v2424 = vsel %vm1314, %v2112, %v2289
        %v2426 = vsel %vm1314, %v2113, %v2289
        %v2429 = vsel %vm1314, %v2114, %v2291
        %v2431 = vsel %vm1314, %v2115, %v2291
        %v2434 = vsel %vm1314, %v2116, %v2293
        %v2436 = vsel %vm1314, %v2117, %v2293
        %v2439 = vsel %vm1314, %v2118, %v2295
        %v2441 = vsel %vm1314, %v2119, %v2295
        %v2444 = vsel %vm1314, %v2120, %v2297
        %v2446 = vsel %vm1314, %v2121, %v2297
        %v2449 = vsel %vm1314, %v2122, %v2299
        %v2451 = vsel %vm1314, %v2123, %v2299
        %v2454 = vsel %vm1314, %v2124, %v2301
        %v2456 = vsel %vm1314, %v2125, %v2301
        %v2459 = vsel %vm1314, %v2126, %v2303
        %v2461 = vsel %vm1314, %v2127, %v2303
        %v2464 = vsel %vm1314, %v2128, %v2305
        %v2466 = vsel %vm1314, %v2129, %v2305
        %v2469 = vsel %vm1314, %v2130, %v2307
        %v2471 = vsel %vm1314, %v2131, %v2307
        %v2474 = vsel %vm1314, %v2132, %v2309
        %v2476 = vsel %vm1314, %v2133, %v2309
        %v2479 = vsel %vm1314, %v2134, %v2311
        %v2481 = vsel %vm1314, %v2135, %v2311
        %v2484 = vsel %vm1314, %v2136, %v2313
        %v2486 = vsel %vm1314, %v2137, %v2313
        %v2489 = vsel %vm1314, %v2138, %v2315
        %v2491 = vsel %vm1314, %v2139, %v2315
        %v2492 = vshrl.u32 %v2414, 16
        %v2494 = vrot.slane %v2492, 3
        %v2495 = vshll.u32 %v2414, 16
        %v2497 = vrot.slane %v2495, 4
        %v2498 = vor.u32 %v2494, %v2497
        %v2499 = vshrl.u32 %v2416, 16
        %v2501 = vrot.slane %v2499, 3
        %v2502 = vshll.u32 %v2416, 16
        %v2504 = vrot.slane %v2502, 4
        %v2505 = vor.u32 %v2501, %v2504
        %v2506 = vsel %vm1395, %v2498, %v2505
        %v2508 = vshrl.u32 %v2364, 16
        %v2510 = vrot.slane %v2508, 3
        %v2511 = vshll.u32 %v2364, 16
        %v2513 = vrot.slane %v2511, 4
        %v2514 = vor.u32 %v2510, %v2513
        %v2516 = vshrl.u32 %v2366, 16
        %v2518 = vrot.slane %v2516, 3
        %v2519 = vshll.u32 %v2366, 16
        %v2521 = vrot.slane %v2519, 4
        %v2522 = vor.u32 %v2518, %v2521
        %v2523 = vsel %vm1395, %v2514, %v2522
        %v2524 = vshrl.u32 %v2419, 16
        %v2526 = vrot.slane %v2524, 3
        %v2527 = vshll.u32 %v2419, 16
        %v2529 = vrot.slane %v2527, 4
        %v2530 = vor.u32 %v2526, %v2529
        %v2531 = vshrl.u32 %v2421, 16
        %v2533 = vrot.slane %v2531, 3
        %v2534 = vshll.u32 %v2421, 16
        %v2536 = vrot.slane %v2534, 4
        %v2537 = vor.u32 %v2533, %v2536
        %v2538 = vsel %vm1395, %v2530, %v2537
        %v2540 = vshrl.u32 %v2367, 16
        %v2542 = vrot.slane %v2540, 3
        %v2543 = vshll.u32 %v2367, 16
        %v2545 = vrot.slane %v2543, 4
        %v2546 = vor.u32 %v2542, %v2545
        %v2548 = vshrl.u32 %v2369, 16
        %v2550 = vrot.slane %v2548, 3
        %v2551 = vshll.u32 %v2369, 16
        %v2553 = vrot.slane %v2551, 4
        %v2554 = vor.u32 %v2550, %v2553
        %v2555 = vsel %vm1395, %v2546, %v2554
        %v2556 = vshrl.u32 %v2424, 16
        %v2558 = vrot.slane %v2556, 3
        %v2559 = vshll.u32 %v2424, 16
        %v2561 = vrot.slane %v2559, 4
        %v2562 = vor.u32 %v2558, %v2561
        %v2563 = vshrl.u32 %v2426, 16
        %v2565 = vrot.slane %v2563, 3
        %v2566 = vshll.u32 %v2426, 16
        %v2568 = vrot.slane %v2566, 4
        %v2569 = vor.u32 %v2565, %v2568
        %v2570 = vsel %vm1395, %v2562, %v2569
        %v2572 = vshrl.u32 %v2370, 16
        %v2574 = vrot.slane %v2572, 3
        %v2575 = vshll.u32 %v2370, 16
        %v2577 = vrot.slane %v2575, 4
        %v2578 = vor.u32 %v2574, %v2577
        %v2580 = vshrl.u32 %v2372, 16
        %v2582 = vrot.slane %v2580, 3
        %v2583 = vshll.u32 %v2372, 16
        %v2585 = vrot.slane %v2583, 4
        %v2586 = vor.u32 %v2582, %v2585
        %v2587 = vsel %vm1395, %v2578, %v2586
        %v2588 = vshrl.u32 %v2429, 16
        %v2590 = vrot.slane %v2588, 3
        %v2591 = vshll.u32 %v2429, 16
        %v2593 = vrot.slane %v2591, 4
        %v2594 = vor.u32 %v2590, %v2593
        %v2595 = vshrl.u32 %v2431, 16
        %v2597 = vrot.slane %v2595, 3
        %v2598 = vshll.u32 %v2431, 16
        %v2600 = vrot.slane %v2598, 4
        %v2601 = vor.u32 %v2597, %v2600
        %v2602 = vsel %vm1395, %v2594, %v2601
        %v2604 = vshrl.u32 %v2373, 16
        %v2606 = vrot.slane %v2604, 3
        %v2607 = vshll.u32 %v2373, 16
        %v2609 = vrot.slane %v2607, 4
        %v2610 = vor.u32 %v2606, %v2609
        %v2612 = vshrl.u32 %v2375, 16
        %v2614 = vrot.slane %v2612, 3
        %v2615 = vshll.u32 %v2375, 16
        %v2617 = vrot.slane %v2615, 4
        %v2618 = vor.u32 %v2614, %v2617
        %v2619 = vsel %vm1395, %v2610, %v2618
        %v2620 = vshrl.u32 %v2434, 16
        %v2622 = vrot.slane %v2620, 3
        %v2623 = vshll.u32 %v2434, 16
        %v2625 = vrot.slane %v2623, 4
        %v2626 = vor.u32 %v2622, %v2625
        %v2627 = vshrl.u32 %v2436, 16
        %v2629 = vrot.slane %v2627, 3
        %v2630 = vshll.u32 %v2436, 16
        %v2632 = vrot.slane %v2630, 4
        %v2633 = vor.u32 %v2629, %v2632
        %v2634 = vsel %vm1395, %v2626, %v2633
        %v2636 = vshrl.u32 %v2376, 16
        %v2638 = vrot.slane %v2636, 3
        %v2639 = vshll.u32 %v2376, 16
        %v2641 = vrot.slane %v2639, 4
        %v2642 = vor.u32 %v2638, %v2641
        %v2644 = vshrl.u32 %v2378, 16
        %v2646 = vrot.slane %v2644, 3
        %v2647 = vshll.u32 %v2378, 16
        %v2649 = vrot.slane %v2647, 4
        %v2650 = vor.u32 %v2646, %v2649
        %v2651 = vsel %vm1395, %v2642, %v2650
        %v2652 = vshrl.u32 %v2439, 16
        %v2654 = vrot.slane %v2652, 3
        %v2655 = vshll.u32 %v2439, 16
        %v2657 = vrot.slane %v2655, 4
        %v2658 = vor.u32 %v2654, %v2657
        %v2659 = vshrl.u32 %v2441, 16
        %v2661 = vrot.slane %v2659, 3
        %v2662 = vshll.u32 %v2441, 16
        %v2664 = vrot.slane %v2662, 4
        %v2665 = vor.u32 %v2661, %v2664
        %v2666 = vsel %vm1395, %v2658, %v2665
        %v2668 = vshrl.u32 %v2379, 16
        %v2670 = vrot.slane %v2668, 3
        %v2671 = vshll.u32 %v2379, 16
        %v2673 = vrot.slane %v2671, 4
        %v2674 = vor.u32 %v2670, %v2673
        %v2676 = vshrl.u32 %v2381, 16
        %v2678 = vrot.slane %v2676, 3
        %v2679 = vshll.u32 %v2381, 16
        %v2681 = vrot.slane %v2679, 4
        %v2682 = vor.u32 %v2678, %v2681
        %v2683 = vsel %vm1395, %v2674, %v2682
        %v2684 = vshrl.u32 %v2444, 16
        %v2686 = vrot.slane %v2684, 3
        %v2687 = vshll.u32 %v2444, 16
        %v2689 = vrot.slane %v2687, 4
        %v2690 = vor.u32 %v2686, %v2689
        %v2691 = vshrl.u32 %v2446, 16
        %v2693 = vrot.slane %v2691, 3
        %v2694 = vshll.u32 %v2446, 16
        %v2696 = vrot.slane %v2694, 4
        %v2697 = vor.u32 %v2693, %v2696
        %v2698 = vsel %vm1395, %v2690, %v2697
        %v2700 = vshrl.u32 %v2382, 16
        %v2702 = vrot.slane %v2700, 3
        %v2703 = vshll.u32 %v2382, 16
        %v2705 = vrot.slane %v2703, 4
        %v2706 = vor.u32 %v2702, %v2705
        %v2708 = vshrl.u32 %v2384, 16
        %v2710 = vrot.slane %v2708, 3
        %v2711 = vshll.u32 %v2384, 16
        %v2713 = vrot.slane %v2711, 4
        %v2714 = vor.u32 %v2710, %v2713
        %v2715 = vsel %vm1395, %v2706, %v2714
        %v2716 = vshrl.u32 %v2449, 16
        %v2718 = vrot.slane %v2716, 3
        %v2719 = vshll.u32 %v2449, 16
        %v2721 = vrot.slane %v2719, 4
        %v2722 = vor.u32 %v2718, %v2721
        %v2723 = vshrl.u32 %v2451, 16
        %v2725 = vrot.slane %v2723, 3
        %v2726 = vshll.u32 %v2451, 16
        %v2728 = vrot.slane %v2726, 4
        %v2729 = vor.u32 %v2725, %v2728
        %v2730 = vsel %vm1395, %v2722, %v2729
        %v2732 = vshrl.u32 %v2385, 16
        %v2734 = vrot.slane %v2732, 3
        %v2735 = vshll.u32 %v2385, 16
        %v2737 = vrot.slane %v2735, 4
        %v2738 = vor.u32 %v2734, %v2737
        %v2740 = vshrl.u32 %v2387, 16
        %v2742 = vrot.slane %v2740, 3
        %v2743 = vshll.u32 %v2387, 16
        %v2745 = vrot.slane %v2743, 4
        %v2746 = vor.u32 %v2742, %v2745
        %v2747 = vsel %vm1395, %v2738, %v2746
        %v2748 = vshrl.u32 %v2454, 16
        %v2750 = vrot.slane %v2748, 3
        %v2751 = vshll.u32 %v2454, 16
        %v2753 = vrot.slane %v2751, 4
        %v2754 = vor.u32 %v2750, %v2753
        %v2755 = vshrl.u32 %v2456, 16
        %v2757 = vrot.slane %v2755, 3
        %v2758 = vshll.u32 %v2456, 16
        %v2760 = vrot.slane %v2758, 4
        %v2761 = vor.u32 %v2757, %v2760
        %v2762 = vsel %vm1395, %v2754, %v2761
        %v2764 = vshrl.u32 %v2388, 16
        %v2766 = vrot.slane %v2764, 3
        %v2767 = vshll.u32 %v2388, 16
        %v2769 = vrot.slane %v2767, 4
        %v2770 = vor.u32 %v2766, %v2769
        %v2772 = vshrl.u32 %v2390, 16
        %v2774 = vrot.slane %v2772, 3
        %v2775 = vshll.u32 %v2390, 16
        %v2777 = vrot.slane %v2775, 4
        %v2778 = vor.u32 %v2774, %v2777
        %v2779 = vsel %vm1395, %v2770, %v2778
        %v2780 = vshrl.u32 %v2459, 16
        %v2782 = vrot.slane %v2780, 3
        %v2783 = vshll.u32 %v2459, 16
        %v2785 = vrot.slane %v2783, 4
        %v2786 = vor.u32 %v2782, %v2785
        %v2787 = vshrl.u32 %v2461, 16
        %v2789 = vrot.slane %v2787, 3
        %v2790 = vshll.u32 %v2461, 16
        %v2792 = vrot.slane %v2790, 4
        %v2793 = vor.u32 %v2789, %v2792
        %v2794 = vsel %vm1395, %v2786, %v2793
        %v2796 = vshrl.u32 %v2391, 16
        %v2798 = vrot.slane %v2796, 3
        %v2799 = vshll.u32 %v2391, 16
        %v2801 = vrot.slane %v2799, 4
        %v2802 = vor.u32 %v2798, %v2801
        %v2804 = vshrl.u32 %v2393, 16
        %v2806 = vrot.slane %v2804, 3
        %v2807 = vshll.u32 %v2393, 16
        %v2809 = vrot.slane %v2807, 4
        %v2810 = vor.u32 %v2806, %v2809
        %v2811 = vsel %vm1395, %v2802, %v2810
        %v2812 = vshrl.u32 %v2464, 16
        %v2814 = vrot.slane %v2812, 3
        %v2815 = vshll.u32 %v2464, 16
        %v2817 = vrot.slane %v2815, 4
        %v2818 = vor.u32 %v2814, %v2817
        %v2819 = vshrl.u32 %v2466, 16
        %v2821 = vrot.slane %v2819, 3
        %v2822 = vshll.u32 %v2466, 16
        %v2824 = vrot.slane %v2822, 4
        %v2825 = vor.u32 %v2821, %v2824
        %v2826 = vsel %vm1395, %v2818, %v2825
        %v2828 = vshrl.u32 %v2394, 16
        %v2830 = vrot.slane %v2828, 3
        %v2831 = vshll.u32 %v2394, 16
        %v2833 = vrot.slane %v2831, 4
        %v2834 = vor.u32 %v2830, %v2833
        %v2836 = vshrl.u32 %v2396, 16
        %v2838 = vrot.slane %v2836, 3
        %v2839 = vshll.u32 %v2396, 16
        %v2841 = vrot.slane %v2839, 4
        %v2842 = vor.u32 %v2838, %v2841
        %v2843 = vsel %vm1395, %v2834, %v2842
        %v2844 = vshrl.u32 %v2469, 16
        %v2846 = vrot.slane %v2844, 3
        %v2847 = vshll.u32 %v2469, 16
        %v2849 = vrot.slane %v2847, 4
        %v2850 = vor.u32 %v2846, %v2849
        %v2851 = vshrl.u32 %v2471, 16
        %v2853 = vrot.slane %v2851, 3
        %v2854 = vshll.u32 %v2471, 16
        %v2856 = vrot.slane %v2854, 4
        %v2857 = vor.u32 %v2853, %v2856
        %v2858 = vsel %vm1395, %v2850, %v2857
        %v2860 = vshrl.u32 %v2397, 16
        %v2862 = vrot.slane %v2860, 3
        %v2863 = vshll.u32 %v2397, 16
        %v2865 = vrot.slane %v2863, 4
        %v2866 = vor.u32 %v2862, %v2865
        %v2868 = vshrl.u32 %v2399, 16
        %v2870 = vrot.slane %v2868, 3
        %v2871 = vshll.u32 %v2399, 16
        %v2873 = vrot.slane %v2871, 4
        %v2874 = vor.u32 %v2870, %v2873
        %v2875 = vsel %vm1395, %v2866, %v2874
        %v2876 = vshrl.u32 %v2474, 16
        %v2878 = vrot.slane %v2876, 3
        %v2879 = vshll.u32 %v2474, 16
        %v2881 = vrot.slane %v2879, 4
        %v2882 = vor.u32 %v2878, %v2881
        %v2883 = vshrl.u32 %v2476, 16
        %v2885 = vrot.slane %v2883, 3
        %v2886 = vshll.u32 %v2476, 16
        %v2888 = vrot.slane %v2886, 4
        %v2889 = vor.u32 %v2885, %v2888
        %v2890 = vsel %vm1395, %v2882, %v2889
        %v2892 = vshrl.u32 %v2400, 16
        %v2894 = vrot.slane %v2892, 3
        %v2895 = vshll.u32 %v2400, 16
        %v2897 = vrot.slane %v2895, 4
        %v2898 = vor.u32 %v2894, %v2897
        %v2900 = vshrl.u32 %v2402, 16
        %v2902 = vrot.slane %v2900, 3
        %v2903 = vshll.u32 %v2402, 16
        %v2905 = vrot.slane %v2903, 4
        %v2906 = vor.u32 %v2902, %v2905
        %v2907 = vsel %vm1395, %v2898, %v2906
        %v2908 = vshrl.u32 %v2479, 16
        %v2910 = vrot.slane %v2908, 3
        %v2911 = vshll.u32 %v2479, 16
        %v2913 = vrot.slane %v2911, 4
        %v2914 = vor.u32 %v2910, %v2913
        %v2915 = vshrl.u32 %v2481, 16
        %v2917 = vrot.slane %v2915, 3
        %v2918 = vshll.u32 %v2481, 16
        %v2920 = vrot.slane %v2918, 4
        %v2921 = vor.u32 %v2917, %v2920
        %v2922 = vsel %vm1395, %v2914, %v2921
        %v2924 = vshrl.u32 %v2403, 16
        %v2926 = vrot.slane %v2924, 3
        %v2927 = vshll.u32 %v2403, 16
        %v2929 = vrot.slane %v2927, 4
        %v2930 = vor.u32 %v2926, %v2929
        %v2932 = vshrl.u32 %v2405, 16
        %v2934 = vrot.slane %v2932, 3
        %v2935 = vshll.u32 %v2405, 16
        %v2937 = vrot.slane %v2935, 4
        %v2938 = vor.u32 %v2934, %v2937
        %v2939 = vsel %vm1395, %v2930, %v2938
        %v2940 = vshrl.u32 %v2484, 16
        %v2942 = vrot.slane %v2940, 3
        %v2943 = vshll.u32 %v2484, 16
        %v2945 = vrot.slane %v2943, 4
        %v2946 = vor.u32 %v2942, %v2945
        %v2947 = vshrl.u32 %v2486, 16
        %v2949 = vrot.slane %v2947, 3
        %v2950 = vshll.u32 %v2486, 16
        %v2952 = vrot.slane %v2950, 4
        %v2953 = vor.u32 %v2949, %v2952
        %v2954 = vsel %vm1395, %v2946, %v2953
        %v2956 = vshrl.u32 %v2406, 16
        %v2958 = vrot.slane %v2956, 3
        %v2959 = vshll.u32 %v2406, 16
        %v2961 = vrot.slane %v2959, 4
        %v2962 = vor.u32 %v2958, %v2961
        %v2964 = vshrl.u32 %v2408, 16
        %v2966 = vrot.slane %v2964, 3
        %v2967 = vshll.u32 %v2408, 16
        %v2969 = vrot.slane %v2967, 4
        %v2970 = vor.u32 %v2966, %v2969
        %v2971 = vsel %vm1395, %v2962, %v2970
        %v2972 = vshrl.u32 %v2489, 16
        %v2974 = vrot.slane %v2972, 3
        %v2975 = vshll.u32 %v2489, 16
        %v2977 = vrot.slane %v2975, 4
        %v2978 = vor.u32 %v2974, %v2977
        %v2979 = vshrl.u32 %v2491, 16
        %v2981 = vrot.slane %v2979, 3
        %v2982 = vshll.u32 %v2491, 16
        %v2984 = vrot.slane %v2982, 4
        %v2985 = vor.u32 %v2981, %v2984
        %v2986 = vsel %vm1395, %v2978, %v2985
        %v2988 = vshrl.u32 %v2409, 16
        %v2990 = vrot.slane %v2988, 3
        %v2991 = vshll.u32 %v2409, 16
        %v2993 = vrot.slane %v2991, 4
        %v2994 = vor.u32 %v2990, %v2993
        %v2996 = vshrl.u32 %v2411, 16
        %v2998 = vrot.slane %v2996, 3
        %v2999 = vshll.u32 %v2411, 16
        %v3001 = vrot.slane %v2999, 4
        %v3002 = vor.u32 %v2998, %v3001
        %v3003 = vsel %vm1395, %v2994, %v3002
        %s3020 = scalar_lea.vmem [#allocation6], 96
        %v3021 = vld [vmem:[%s3020] sm:$0xf]
        %v3022 = vld [vmem:[%s3020 + $0x4] sm:$0xf]
        %v3023 = vld [vmem:[%s3020 + $0x8] sm:$0xf]
        %v3024 = vld [vmem:[%s3020 + $0xc] sm:$0xf]
        %v3025 = vld [vmem:[%s3020 + $0x10] sm:$0xf]
        %v3026 = vld [vmem:[%s3020 + $0x14] sm:$0xf]
        %v3027 = vld [vmem:[%s3020 + $0x18] sm:$0xf]
        %v3028 = vld [vmem:[%s3020 + $0x1c] sm:$0xf]
        %v3029 = vld [vmem:[%s3020 + $0x20] sm:$0xf]
        %v3030 = vld [vmem:[%s3020 + $0x24] sm:$0xf]
        %v3031 = vld [vmem:[%s3020 + $0x28] sm:$0xf]
        %v3032 = vld [vmem:[%s3020 + $0x2c] sm:$0xf]
        %v3033 = vld [vmem:[%s3020 + $0x30] sm:$0xf]
        %v3034 = vld [vmem:[%s3020 + $0x34] sm:$0xf]
        %v3035 = vld [vmem:[%s3020 + $0x38] sm:$0xf]
        %v3036 = vld [vmem:[%s3020 + $0x3c] sm:$0xf]
        %v3037 = vld [vmem:[%s3020 + $0x40] sm:$0xf]
        %v3038 = vld [vmem:[%s3020 + $0x44] sm:$0xf]
        %v3039 = vld [vmem:[%s3020 + $0x48] sm:$0xf]
        %v3040 = vld [vmem:[%s3020 + $0x4c] sm:$0xf]
        %v3041 = vld [vmem:[%s3020 + $0x50] sm:$0xf]
        %v3042 = vld [vmem:[%s3020 + $0x54] sm:$0xf]
        %v3043 = vld [vmem:[%s3020 + $0x58] sm:$0xf]
        %v3044 = vld [vmem:[%s3020 + $0x5c] sm:$0xf]
        %v3069 = vunpack.c.l.b16 %v3021
        %v3070 = vunpack.c.l.b16 %v3022
        %v3071 = vunpack.c.l.b16 %v3023
        %v3072 = vunpack.c.l.b16 %v3024
        %v3073 = vunpack.c.l.b16 %v3025
        %v3074 = vunpack.c.l.b16 %v3026
        %v3075 = vunpack.c.l.b16 %v3027
        %v3076 = vunpack.c.l.b16 %v3028
        %v3077 = vunpack.c.l.b16 %v3029
        %v3078 = vunpack.c.l.b16 %v3030
        %v3079 = vunpack.c.l.b16 %v3031
        %v3080 = vunpack.c.l.b16 %v3032
        %v3081 = vunpack.c.l.b16 %v3033
        %v3082 = vunpack.c.l.b16 %v3034
        %v3083 = vunpack.c.l.b16 %v3035
        %v3084 = vunpack.c.l.b16 %v3036
        %v3085 = vunpack.c.l.b16 %v3037
        %v3086 = vunpack.c.l.b16 %v3038
        %v3087 = vunpack.c.l.b16 %v3039
        %v3088 = vunpack.c.l.b16 %v3040
        %v3089 = vunpack.c.l.b16 %v3041
        %v3090 = vunpack.c.l.b16 %v3042
        %v3091 = vunpack.c.l.b16 %v3043
        %v3092 = vunpack.c.l.b16 %v3044
        %v3093 = vpack.c.b16 %v3070, %v3069
        %v3094 = vpack.c.b16 %v3072, %v3071
        %v3095 = vpack.c.b16 %v3074, %v3073
        %v3096 = vpack.c.b16 %v3076, %v3075
        %v3097 = vpack.c.b16 %v3078, %v3077
        %v3098 = vpack.c.b16 %v3080, %v3079
        %v3099 = vpack.c.b16 %v3082, %v3081
        %v3100 = vpack.c.b16 %v3084, %v3083
        %v3101 = vpack.c.b16 %v3086, %v3085
        %v3102 = vpack.c.b16 %v3088, %v3087
        %v3103 = vpack.c.b16 %v3090, %v3089
        %v3104 = vpack.c.b16 %v3092, %v3091
        %v3118 = vsel %vm1314, %v2523, 0
        %v3121 = vsel %vm1314, %v2555, 0
        %v3124 = vsel %vm1314, %v2587, 0
        %v3127 = vsel %vm1314, %v2619, 0
        %v3130 = vsel %vm1314, %v2651, 0
        %v3133 = vsel %vm1314, %v2683, 0
        %v3136 = vsel %vm1314, %v2715, 0
        %v3139 = vsel %vm1314, %v2747, 0
        %v3142 = vsel %vm1314, %v2779, 0
        %v3145 = vsel %vm1314, %v2811, 0
        %v3148 = vsel %vm1314, %v2843, 0
        %v3151 = vsel %vm1314, %v2875, 0
        %v3154 = vsel %vm1314, %v2907, 0
        %v3157 = vsel %vm1314, %v2939, 0
        %v3160 = vsel %vm1314, %v2971, 0
        %v3163 = vsel %vm1314, %v3003, 0
        %3165 = vmatpush.bf16.msra.mxu0 %v3100
        %3166 = vmatpush.bf16.msra.mxu0 %v3099
        %3167 = vmatpush.bf16.msra.mxu0 %v3098
        %3168 = vmatpush.bf16.msra.mxu0 %v3097
        %3169 = vmatpush.bf16.msra.mxu0 %v3096
        %3170 = vmatpush.bf16.msra.mxu0 %v3095
        %3171 = vmatpush.bf16.msra.mxu0 %v3094
        %3172 = vmatpush.bf16.msra.mxu0 %v3093
        %3173 = vmatmul.bf16.gmra.mxu0 %v2506
        %v3174 = vpop.f32.mrf.mxu0
        %v3175 = vadd.f32 0.0, %v3174
        %v3176 = vpop.f32.mrf.mxu0
        %v3177 = vadd.f32 0.0, %v3176
        %3178 = vmatmul.bf16.gmra.mxu0 %v2538
        %v3179 = vpop.f32.mrf.mxu0
        %v3180 = vadd.f32 0.0, %v3179
        %v3181 = vpop.f32.mrf.mxu0
        %v3182 = vadd.f32 0.0, %v3181
        %3183 = vmatmul.bf16.gmra.mxu0 %v2570
        %v3184 = vpop.f32.mrf.mxu0
        %v3185 = vadd.f32 0.0, %v3184
        %v3186 = vpop.f32.mrf.mxu0
        %v3187 = vadd.f32 0.0, %v3186
        %3188 = vmatmul.bf16.gmra.mxu0 %v2602
        %v3189 = vpop.f32.mrf.mxu0
        %v3190 = vadd.f32 0.0, %v3189
        %v3191 = vpop.f32.mrf.mxu0
        %v3192 = vadd.f32 0.0, %v3191
        %3193 = vmatmul.bf16.gmra.mxu0 %v2634
        %v3194 = vpop.f32.mrf.mxu0
        %v3195 = vadd.f32 0.0, %v3194
        %v3196 = vpop.f32.mrf.mxu0
        %v3197 = vadd.f32 0.0, %v3196
        %3198 = vmatmul.bf16.gmra.mxu0 %v2666
        %v3199 = vpop.f32.mrf.mxu0
        %v3200 = vadd.f32 0.0, %v3199
        %v3201 = vpop.f32.mrf.mxu0
        %v3202 = vadd.f32 0.0, %v3201
        %3203 = vmatmul.bf16.gmra.mxu0 %v2698
        %v3204 = vpop.f32.mrf.mxu0
        %v3205 = vadd.f32 0.0, %v3204
        %v3206 = vpop.f32.mrf.mxu0
        %v3207 = vadd.f32 0.0, %v3206
        %3208 = vmatmul.bf16.gmra.mxu0 %v2730
        %v3209 = vpop.f32.mrf.mxu0
        %v3210 = vadd.f32 0.0, %v3209
        %v3211 = vpop.f32.mrf.mxu0
        %v3212 = vadd.f32 0.0, %v3211
        %3213 = vmatmul.bf16.gmra.mxu0 %v2762
        %v3214 = vpop.f32.mrf.mxu0
        %v3215 = vadd.f32 0.0, %v3214
        %v3216 = vpop.f32.mrf.mxu0
        %v3217 = vadd.f32 0.0, %v3216
        %3218 = vmatmul.bf16.gmra.mxu0 %v2794
        %v3219 = vpop.f32.mrf.mxu0
        %v3220 = vadd.f32 0.0, %v3219
        %v3221 = vpop.f32.mrf.mxu0
        %v3222 = vadd.f32 0.0, %v3221
        %3223 = vmatmul.bf16.gmra.mxu0 %v2826
        %v3224 = vpop.f32.mrf.mxu0
        %v3225 = vadd.f32 0.0, %v3224
        %v3226 = vpop.f32.mrf.mxu0
        %v3227 = vadd.f32 0.0, %v3226
        %3228 = vmatmul.bf16.gmra.mxu0 %v2858
        %v3229 = vpop.f32.mrf.mxu0
        %v3230 = vadd.f32 0.0, %v3229
        %v3231 = vpop.f32.mrf.mxu0
        %v3232 = vadd.f32 0.0, %v3231
        %3233 = vmatmul.bf16.gmra.mxu0 %v2890
        %v3234 = vpop.f32.mrf.mxu0
        %v3235 = vadd.f32 0.0, %v3234
        %v3236 = vpop.f32.mrf.mxu0
        %v3237 = vadd.f32 0.0, %v3236
        %3238 = vmatmul.bf16.gmra.mxu0 %v2922
        %v3239 = vpop.f32.mrf.mxu0
        %v3240 = vadd.f32 0.0, %v3239
        %v3241 = vpop.f32.mrf.mxu0
        %v3242 = vadd.f32 0.0, %v3241
        %3243 = vmatmul.bf16.gmra.mxu0 %v2954
        %v3244 = vpop.f32.mrf.mxu0
        %v3245 = vadd.f32 0.0, %v3244
        %v3246 = vpop.f32.mrf.mxu0
        %v3247 = vadd.f32 0.0, %v3246
        %3248 = vmatmul.bf16.gmra.mxu0 %v2986
        %v3249 = vpop.f32.mrf.mxu0
        %v3250 = vadd.f32 0.0, %v3249
        %v3251 = vpop.f32.mrf.mxu0
        %v3252 = vadd.f32 0.0, %v3251
        %3253 = vdwg.mxu0
        %3254 = vmatpush.bf16.msra.mxu0 0
        %3255 = vmatpush.bf16.msra.mxu0 0
        %3256 = vmatpush.bf16.msra.mxu0 0
        %3257 = vmatpush.bf16.msra.mxu0 0
        %3258 = vmatpush.bf16.msra.mxu0 %v3104
        %3259 = vmatpush.bf16.msra.mxu0 %v3103
        %3260 = vmatpush.bf16.msra.mxu0 %v3102
        %3261 = vmatpush.bf16.msra.mxu0 %v3101
        %3262 = vmatmul.bf16.gmra.mxu0 %v3118
        %v3263 = vpop.f32.mrf.mxu0
        %v3264 = vadd.f32 %v3175, %v3263
        %v3265 = vpop.f32.mrf.mxu0
        %v3266 = vadd.f32 %v3177, %v3265
        %3267 = vmatmul.bf16.gmra.mxu0 %v3121
        %v3268 = vpop.f32.mrf.mxu0
        %v3269 = vadd.f32 %v3180, %v3268
        %v3270 = vpop.f32.mrf.mxu0
        %v3271 = vadd.f32 %v3182, %v3270
        %3272 = vmatmul.bf16.gmra.mxu0 %v3124
        %v3273 = vpop.f32.mrf.mxu0
        %v3274 = vadd.f32 %v3185, %v3273
        %v3275 = vpop.f32.mrf.mxu0
        %v3276 = vadd.f32 %v3187, %v3275
        %3277 = vmatmul.bf16.gmra.mxu0 %v3127
        %v3278 = vpop.f32.mrf.mxu0
        %v3279 = vadd.f32 %v3190, %v3278
        %v3280 = vpop.f32.mrf.mxu0
        %v3281 = vadd.f32 %v3192, %v3280
        %3282 = vmatmul.bf16.gmra.mxu0 %v3130
        %v3283 = vpop.f32.mrf.mxu0
        %v3284 = vadd.f32 %v3195, %v3283
        %v3285 = vpop.f32.mrf.mxu0
        %v3286 = vadd.f32 %v3197, %v3285
        %3287 = vmatmul.bf16.gmra.mxu0 %v3133
        %v3288 = vpop.f32.mrf.mxu0
        %v3289 = vadd.f32 %v3200, %v3288
        %v3290 = vpop.f32.mrf.mxu0
        %v3291 = vadd.f32 %v3202, %v3290
        %3292 = vmatmul.bf16.gmra.mxu0 %v3136
        %v3293 = vpop.f32.mrf.mxu0
        %v3294 = vadd.f32 %v3205, %v3293
        %v3295 = vpop.f32.mrf.mxu0
        %v3296 = vadd.f32 %v3207, %v3295
        %3297 = vmatmul.bf16.gmra.mxu0 %v3139
        %v3298 = vpop.f32.mrf.mxu0
        %v3299 = vadd.f32 %v3210, %v3298
        %v3300 = vpop.f32.mrf.mxu0
        %v3301 = vadd.f32 %v3212, %v3300
        %3302 = vmatmul.bf16.gmra.mxu0 %v3142
        %v3303 = vpop.f32.mrf.mxu0
        %v3304 = vadd.f32 %v3215, %v3303
        %v3305 = vpop.f32.mrf.mxu0
        %v3306 = vadd.f32 %v3217, %v3305
        %3307 = vmatmul.bf16.gmra.mxu0 %v3145
        %v3308 = vpop.f32.mrf.mxu0
        %v3309 = vadd.f32 %v3220, %v3308
        %v3310 = vpop.f32.mrf.mxu0
        %v3311 = vadd.f32 %v3222, %v3310
        %3312 = vmatmul.bf16.gmra.mxu0 %v3148
        %v3313 = vpop.f32.mrf.mxu0
        %v3314 = vadd.f32 %v3225, %v3313
        %v3315 = vpop.f32.mrf.mxu0
        %v3316 = vadd.f32 %v3227, %v3315
        %3317 = vmatmul.bf16.gmra.mxu0 %v3151
        %v3318 = vpop.f32.mrf.mxu0
        %v3319 = vadd.f32 %v3230, %v3318
        %v3320 = vpop.f32.mrf.mxu0
        %v3321 = vadd.f32 %v3232, %v3320
        %3322 = vmatmul.bf16.gmra.mxu0 %v3154
        %v3323 = vpop.f32.mrf.mxu0
        %v3324 = vadd.f32 %v3235, %v3323
        %v3325 = vpop.f32.mrf.mxu0
        %v3326 = vadd.f32 %v3237, %v3325
        %3327 = vmatmul.bf16.gmra.mxu0 %v3157
        %v3328 = vpop.f32.mrf.mxu0
        %v3329 = vadd.f32 %v3240, %v3328
        %v3330 = vpop.f32.mrf.mxu0
        %v3331 = vadd.f32 %v3242, %v3330
        %3332 = vmatmul.bf16.gmra.mxu0 %v3160
        %v3333 = vpop.f32.mrf.mxu0
        %v3334 = vadd.f32 %v3245, %v3333
        %v3335 = vpop.f32.mrf.mxu0
        %v3336 = vadd.f32 %v3247, %v3335
        %3337 = vmatmul.bf16.gmra.mxu0 %v3163
        %v3338 = vpop.f32.mrf.mxu0
        %v3339 = vadd.f32 %v3250, %v3338
        %v3340 = vpop.f32.mrf.mxu0
        %v3341 = vadd.f32 %v3252, %v3340
        %3342 = vdwg.mxu0
        %v3367 = vunpack.c.l.b16 %v1924
        %v3368 = vunpack.c.l.b16 %v1925
        %v3369 = vunpack.c.l.b16 %v1926
        %v3370 = vunpack.c.l.b16 %v1927
        %v3371 = vunpack.c.l.b16 %v1928
        %v3372 = vunpack.c.l.b16 %v1929
        %v3373 = vunpack.c.l.b16 %v1930
        %v3374 = vunpack.c.l.b16 %v1931
        %v3375 = vunpack.c.l.b16 %v1932
        %v3376 = vunpack.c.l.b16 %v1933
        %v3377 = vunpack.c.l.b16 %v1934
        %v3378 = vunpack.c.l.b16 %v1935
        %v3379 = vunpack.c.l.b16 %v1936
        %v3380 = vunpack.c.l.b16 %v1937
        %v3381 = vunpack.c.l.b16 %v1938
        %v3382 = vunpack.c.l.b16 %v1939
        %v3383 = vunpack.c.l.b16 %v1940
        %v3384 = vunpack.c.l.b16 %v1941
        %v3385 = vunpack.c.l.b16 %v1942
        %v3386 = vunpack.c.l.b16 %v1943
        %v3387 = vunpack.c.l.b16 %v1944
        %v3388 = vunpack.c.l.b16 %v1945
        %v3389 = vunpack.c.l.b16 %v1946
        %v3390 = vunpack.c.l.b16 %v1947
        %v3391 = vpack.c.b16 %v3368, %v3367
        %v3392 = vpack.c.b16 %v3370, %v3369
        %v3393 = vpack.c.b16 %v3372, %v3371
        %v3394 = vpack.c.b16 %v3374, %v3373
        %v3395 = vpack.c.b16 %v3376, %v3375
        %v3396 = vpack.c.b16 %v3378, %v3377
        %v3397 = vpack.c.b16 %v3380, %v3379
        %v3398 = vpack.c.b16 %v3382, %v3381
        %v3399 = vpack.c.b16 %v3384, %v3383
        %v3400 = vpack.c.b16 %v3386, %v3385
        %v3401 = vpack.c.b16 %v3388, %v3387
        %v3402 = vpack.c.b16 %v3390, %v3389
        %v3416 = vsel %vm1314, %v1427, 0
        %v3419 = vsel %vm1314, %v1459, 0
        %v3422 = vsel %vm1314, %v1491, 0
        %v3425 = vsel %vm1314, %v1523, 0
        %v3428 = vsel %vm1314, %v1555, 0
        %v3431 = vsel %vm1314, %v1587, 0
        %v3434 = vsel %vm1314, %v1619, 0
        %v3437 = vsel %vm1314, %v1651, 0
        %v3440 = vsel %vm1314, %v1683, 0
        %v3443 = vsel %vm1314, %v1715, 0
        %v3446 = vsel %vm1314, %v1747, 0
        %v3449 = vsel %vm1314, %v1779, 0
        %v3452 = vsel %vm1314, %v1811, 0
        %v3455 = vsel %vm1314, %v1843, 0
        %v3458 = vsel %vm1314, %v1875, 0
        %v3461 = vsel %vm1314, %v1907, 0
        %3463 = vmatpush.bf16.msra.mxu0 %v3398
        %3464 = vmatpush.bf16.msra.mxu0 %v3397
        %3465 = vmatpush.bf16.msra.mxu0 %v3396
        %3466 = vmatpush.bf16.msra.mxu0 %v3395
        %3467 = vmatpush.bf16.msra.mxu0 %v3394
        %3468 = vmatpush.bf16.msra.mxu0 %v3393
        %3469 = vmatpush.bf16.msra.mxu0 %v3392
        %3470 = vmatpush.bf16.msra.mxu0 %v3391
        %3471 = vmatmul.bf16.gmra.mxu0 %v1410
        %v3472 = vpop.f32.mrf.mxu0
        %v3473 = vadd.f32 %v3264, %v3472
        %v3474 = vpop.f32.mrf.mxu0
        %v3475 = vadd.f32 %v3266, %v3474
        %3476 = vmatmul.bf16.gmra.mxu0 %v1442
        %v3477 = vpop.f32.mrf.mxu0
        %v3478 = vadd.f32 %v3269, %v3477
        %v3479 = vpop.f32.mrf.mxu0
        %v3480 = vadd.f32 %v3271, %v3479
        %3481 = vmatmul.bf16.gmra.mxu0 %v1474
        %v3482 = vpop.f32.mrf.mxu0
        %v3483 = vadd.f32 %v3274, %v3482
        %v3484 = vpop.f32.mrf.mxu0
        %v3485 = vadd.f32 %v3276, %v3484
        %3486 = vmatmul.bf16.gmra.mxu0 %v1506
        %v3487 = vpop.f32.mrf.mxu0
        %v3488 = vadd.f32 %v3279, %v3487
        %v3489 = vpop.f32.mrf.mxu0
        %v3490 = vadd.f32 %v3281, %v3489
        %3491 = vmatmul.bf16.gmra.mxu0 %v1538
        %v3492 = vpop.f32.mrf.mxu0
        %v3493 = vadd.f32 %v3284, %v3492
        %v3494 = vpop.f32.mrf.mxu0
        %v3495 = vadd.f32 %v3286, %v3494
        %3496 = vmatmul.bf16.gmra.mxu0 %v1570
        %v3497 = vpop.f32.mrf.mxu0
        %v3498 = vadd.f32 %v3289, %v3497
        %v3499 = vpop.f32.mrf.mxu0
        %v3500 = vadd.f32 %v3291, %v3499
        %3501 = vmatmul.bf16.gmra.mxu0 %v1602
        %v3502 = vpop.f32.mrf.mxu0
        %v3503 = vadd.f32 %v3294, %v3502
        %v3504 = vpop.f32.mrf.mxu0
        %v3505 = vadd.f32 %v3296, %v3504
        %3506 = vmatmul.bf16.gmra.mxu0 %v1634
        %v3507 = vpop.f32.mrf.mxu0
        %v3508 = vadd.f32 %v3299, %v3507
        %v3509 = vpop.f32.mrf.mxu0
        %v3510 = vadd.f32 %v3301, %v3509
        %3511 = vmatmul.bf16.gmra.mxu0 %v1666
        %v3512 = vpop.f32.mrf.mxu0
        %v3513 = vadd.f32 %v3304, %v3512
        %v3514 = vpop.f32.mrf.mxu0
        %v3515 = vadd.f32 %v3306, %v3514
        %3516 = vmatmul.bf16.gmra.mxu0 %v1698
        %v3517 = vpop.f32.mrf.mxu0
        %v3518 = vadd.f32 %v3309, %v3517
        %v3519 = vpop.f32.mrf.mxu0
        %v3520 = vadd.f32 %v3311, %v3519
        %3521 = vmatmul.bf16.gmra.mxu0 %v1730
        %v3522 = vpop.f32.mrf.mxu0
        %v3523 = vadd.f32 %v3314, %v3522
        %v3524 = vpop.f32.mrf.mxu0
        %v3525 = vadd.f32 %v3316, %v3524
        %3526 = vmatmul.bf16.gmra.mxu0 %v1762
        %v3527 = vpop.f32.mrf.mxu0
        %v3528 = vadd.f32 %v3319, %v3527
        %v3529 = vpop.f32.mrf.mxu0
        %v3530 = vadd.f32 %v3321, %v3529
        %3531 = vmatmul.bf16.gmra.mxu0 %v1794
        %v3532 = vpop.f32.mrf.mxu0
        %v3533 = vadd.f32 %v3324, %v3532
        %v3534 = vpop.f32.mrf.mxu0
        %v3535 = vadd.f32 %v3326, %v3534
        %3536 = vmatmul.bf16.gmra.mxu0 %v1826
        %v3537 = vpop.f32.mrf.mxu0
        %v3538 = vadd.f32 %v3329, %v3537
        %v3539 = vpop.f32.mrf.mxu0
        %v3540 = vadd.f32 %v3331, %v3539
        %3541 = vmatmul.bf16.gmra.mxu0 %v1858
        %v3542 = vpop.f32.mrf.mxu0
        %v3543 = vadd.f32 %v3334, %v3542
        %v3544 = vpop.f32.mrf.mxu0
        %v3545 = vadd.f32 %v3336, %v3544
        %3546 = vmatmul.bf16.gmra.mxu0 %v1890
        %v3547 = vpop.f32.mrf.mxu0
        %v3548 = vadd.f32 %v3339, %v3547
        %v3549 = vpop.f32.mrf.mxu0
        %v3550 = vadd.f32 %v3341, %v3549
        %3551 = vdwg.mxu0
        %3552 = vmatpush.bf16.msra.mxu0 0
        %3553 = vmatpush.bf16.msra.mxu0 0
        %3554 = vmatpush.bf16.msra.mxu0 0
        %3555 = vmatpush.bf16.msra.mxu0 0
        %3556 = vmatpush.bf16.msra.mxu0 %v3402
        %3557 = vmatpush.bf16.msra.mxu0 %v3401
        %3558 = vmatpush.bf16.msra.mxu0 %v3400
        %3559 = vmatpush.bf16.msra.mxu0 %v3399
        %3560 = vmatmul.bf16.gmra.mxu0 %v3416
        %v3561 = vpop.f32.mrf.mxu0
        %v3562 = vadd.f32 %v3473, %v3561
        %v3563 = vpop.f32.mrf.mxu0
        %v3564 = vadd.f32 %v3475, %v3563
        %3565 = vmatmul.bf16.gmra.mxu0 %v3419
        %v3566 = vpop.f32.mrf.mxu0
        %v3567 = vadd.f32 %v3478, %v3566
        %v3568 = vpop.f32.mrf.mxu0
        %v3569 = vadd.f32 %v3480, %v3568
        %3570 = vmatmul.bf16.gmra.mxu0 %v3422
        %v3571 = vpop.f32.mrf.mxu0
        %v3572 = vadd.f32 %v3483, %v3571
        %v3573 = vpop.f32.mrf.mxu0
        %v3574 = vadd.f32 %v3485, %v3573
        %3575 = vmatmul.bf16.gmra.mxu0 %v3425
        %v3576 = vpop.f32.mrf.mxu0
        %v3577 = vadd.f32 %v3488, %v3576
        %v3578 = vpop.f32.mrf.mxu0
        %v3579 = vadd.f32 %v3490, %v3578
        %3580 = vmatmul.bf16.gmra.mxu0 %v3428
        %v3581 = vpop.f32.mrf.mxu0
        %v3582 = vadd.f32 %v3493, %v3581
        %v3583 = vpop.f32.mrf.mxu0
        %v3584 = vadd.f32 %v3495, %v3583
        %3585 = vmatmul.bf16.gmra.mxu0 %v3431
        %v3586 = vpop.f32.mrf.mxu0
        %v3587 = vadd.f32 %v3498, %v3586
        %v3588 = vpop.f32.mrf.mxu0
        %v3589 = vadd.f32 %v3500, %v3588
        %3590 = vmatmul.bf16.gmra.mxu0 %v3434
        %v3591 = vpop.f32.mrf.mxu0
        %v3592 = vadd.f32 %v3503, %v3591
        %v3593 = vpop.f32.mrf.mxu0
        %v3594 = vadd.f32 %v3505, %v3593
        %3595 = vmatmul.bf16.gmra.mxu0 %v3437
        %v3596 = vpop.f32.mrf.mxu0
        %v3597 = vadd.f32 %v3508, %v3596
        %v3598 = vpop.f32.mrf.mxu0
        %v3599 = vadd.f32 %v3510, %v3598
        %3600 = vmatmul.bf16.gmra.mxu0 %v3440
        %v3601 = vpop.f32.mrf.mxu0
        %v3602 = vadd.f32 %v3513, %v3601
        %v3603 = vpop.f32.mrf.mxu0
        %v3604 = vadd.f32 %v3515, %v3603
        %3605 = vmatmul.bf16.gmra.mxu0 %v3443
        %v3606 = vpop.f32.mrf.mxu0
        %v3607 = vadd.f32 %v3518, %v3606
        %v3608 = vpop.f32.mrf.mxu0
        %v3609 = vadd.f32 %v3520, %v3608
        %3610 = vmatmul.bf16.gmra.mxu0 %v3446
        %v3611 = vpop.f32.mrf.mxu0
        %v3612 = vadd.f32 %v3523, %v3611
        %v3613 = vpop.f32.mrf.mxu0
        %v3614 = vadd.f32 %v3525, %v3613
        %3615 = vmatmul.bf16.gmra.mxu0 %v3449
        %v3616 = vpop.f32.mrf.mxu0
        %v3617 = vadd.f32 %v3528, %v3616
        %v3618 = vpop.f32.mrf.mxu0
        %v3619 = vadd.f32 %v3530, %v3618
        %3620 = vmatmul.bf16.gmra.mxu0 %v3452
        %v3621 = vpop.f32.mrf.mxu0
        %v3622 = vadd.f32 %v3533, %v3621
        %v3623 = vpop.f32.mrf.mxu0
        %v3624 = vadd.f32 %v3535, %v3623
        %3625 = vmatmul.bf16.gmra.mxu0 %v3455
        %v3626 = vpop.f32.mrf.mxu0
        %v3627 = vadd.f32 %v3538, %v3626
        %v3628 = vpop.f32.mrf.mxu0
        %v3629 = vadd.f32 %v3540, %v3628
        %3630 = vmatmul.bf16.gmra.mxu0 %v3458
        %v3631 = vpop.f32.mrf.mxu0
        %v3632 = vadd.f32 %v3543, %v3631
        %v3633 = vpop.f32.mrf.mxu0
        %v3634 = vadd.f32 %v3545, %v3633
        %3635 = vmatmul.bf16.gmra.mxu0 %v3461
        %v3636 = vpop.f32.mrf.mxu0
        %v3637 = vadd.f32 %v3548, %v3636
        %v3638 = vpop.f32.mrf.mxu0
        %v3639 = vadd.f32 %v3550, %v3638
        %3640 = vdwg.mxu0
        %s3641 = scalar_lea.vmem [#allocation2], 32
        %v3642 = vld [vmem:[%s3641] sm:$0x8]
        %v3643 = vld [vmem:[%s3641 + $0x4] sm:$0xf]
        %v3644 = vld [vmem:[%s3641 + $0x8] sm:$0xf]
        %v3645 = vld [vmem:[%s3641 + $0x10] sm:$0x8]
        %v3646 = vld [vmem:[%s3641 + $0x14] sm:$0xf]
        %v3647 = vld [vmem:[%s3641 + $0x18] sm:$0xf]
        %v3648 = vld [vmem:[%s3641 + $0x20] sm:$0x8]
        %v3649 = vld [vmem:[%s3641 + $0x24] sm:$0xf]
        %v3650 = vld [vmem:[%s3641 + $0x28] sm:$0xf]
        %v3651 = vld [vmem:[%s3641 + $0x30] sm:$0x8]
        %v3652 = vld [vmem:[%s3641 + $0x34] sm:$0xf]
        %v3653 = vld [vmem:[%s3641 + $0x38] sm:$0xf]
        %v3654 = vld [vmem:[%s3641 + $0x40] sm:$0x8]
        %v3655 = vld [vmem:[%s3641 + $0x44] sm:$0xf]
        %v3656 = vld [vmem:[%s3641 + $0x48] sm:$0xf]
        %v3657 = vld [vmem:[%s3641 + $0x50] sm:$0x8]
        %v3658 = vld [vmem:[%s3641 + $0x54] sm:$0xf]
        %v3659 = vld [vmem:[%s3641 + $0x58] sm:$0xf]
        %v3660 = vld [vmem:[%s3641 + $0x60] sm:$0x8]
        %v3661 = vld [vmem:[%s3641 + $0x64] sm:$0xf]
        %v3662 = vld [vmem:[%s3641 + $0x68] sm:$0xf]
        %v3663 = vld [vmem:[%s3641 + $0x70] sm:$0x8]
        %v3664 = vld [vmem:[%s3641 + $0x74] sm:$0xf]
        %v3665 = vld [vmem:[%s3641 + $0x78] sm:$0xf]
        %v3666 = vld [vmem:[%s3641 + $0x80] sm:$0x8]
        %v3667 = vld [vmem:[%s3641 + $0x84] sm:$0xf]
        %v3668 = vld [vmem:[%s3641 + $0x88] sm:$0xf]
        %v3669 = vld [vmem:[%s3641 + $0x90] sm:$0x8]
        %v3670 = vld [vmem:[%s3641 + $0x94] sm:$0xf]
        %v3671 = vld [vmem:[%s3641 + $0x98] sm:$0xf]
        %v3672 = vld [vmem:[%s3641 + $0xa0] sm:$0x8]
        %v3673 = vld [vmem:[%s3641 + $0xa4] sm:$0xf]
        %v3674 = vld [vmem:[%s3641 + $0xa8] sm:$0xf]
        %v3675 = vld [vmem:[%s3641 + $0xb0] sm:$0x8]
        %v3676 = vld [vmem:[%s3641 + $0xb4] sm:$0xf]
        %v3677 = vld [vmem:[%s3641 + $0xb8] sm:$0xf]
        %v3678 = vld [vmem:[%s3641 + $0xc0] sm:$0x8]
        %v3679 = vld [vmem:[%s3641 + $0xc4] sm:$0xf]
        %v3680 = vld [vmem:[%s3641 + $0xc8] sm:$0xf]
        %v3681 = vld [vmem:[%s3641 + $0xd0] sm:$0x8]
        %v3682 = vld [vmem:[%s3641 + $0xd4] sm:$0xf]
        %v3683 = vld [vmem:[%s3641 + $0xd8] sm:$0xf]
        %v3684 = vld [vmem:[%s3641 + $0xe0] sm:$0x8]
        %v3685 = vld [vmem:[%s3641 + $0xe4] sm:$0xf]
        %v3686 = vld [vmem:[%s3641 + $0xe8] sm:$0xf]
        %v3687 = vld [vmem:[%s3641 + $0xf0] sm:$0x8]
        %v3688 = vld [vmem:[%s3641 + $0xf4] sm:$0xf]
        %v3689 = vld [vmem:[%s3641 + $0xf8] sm:$0xf]
        %v3690 = vld [vmem:[%s3641 + $0xc] sm:$0x1]
        %v3691 = vld [vmem:[%s3641 + $0x1c] sm:$0x1]
        %v3692 = vld [vmem:[%s3641 + $0x2c] sm:$0x1]
        %v3693 = vld [vmem:[%s3641 + $0x3c] sm:$0x1]
        %v3694 = vld [vmem:[%s3641 + $0x4c] sm:$0x1]
        %v3695 = vld [vmem:[%s3641 + $0x5c] sm:$0x1]
        %v3696 = vld [vmem:[%s3641 + $0x6c] sm:$0x1]
        %v3697 = vld [vmem:[%s3641 + $0x7c] sm:$0x1]
        %v3698 = vld [vmem:[%s3641 + $0x8c] sm:$0x1]
        %v3699 = vld [vmem:[%s3641 + $0x9c] sm:$0x1]
        %v3700 = vld [vmem:[%s3641 + $0xac] sm:$0x1]
        %v3701 = vld [vmem:[%s3641 + $0xbc] sm:$0x1]
        %v3702 = vld [vmem:[%s3641 + $0xcc] sm:$0x1]
        %v3703 = vld [vmem:[%s3641 + $0xdc] sm:$0x1]
        %v3704 = vld [vmem:[%s3641 + $0xec] sm:$0x1]
        %v3705 = vld [vmem:[%s3641 + $0xfc] sm:$0x1]
        %v3754 = vunpack.c.l.b16 %v3642
        %v3755 = vunpack.c.l.b16 %v3643
        %v3756 = vunpack.c.l.b16 %v3644
        %v3757 = vunpack.c.l.b16 %v3645
        %v3758 = vunpack.c.l.b16 %v3646
        %v3759 = vunpack.c.l.b16 %v3647
        %v3760 = vunpack.c.l.b16 %v3648
        %v3761 = vunpack.c.l.b16 %v3649
        %v3762 = vunpack.c.l.b16 %v3650
        %v3763 = vunpack.c.l.b16 %v3651
        %v3764 = vunpack.c.l.b16 %v3652
        %v3765 = vunpack.c.l.b16 %v3653
        %v3766 = vunpack.c.l.b16 %v3654
        %v3767 = vunpack.c.l.b16 %v3655
        %v3768 = vunpack.c.l.b16 %v3656
        %v3769 = vunpack.c.l.b16 %v3657
        %v3770 = vunpack.c.l.b16 %v3658
        %v3771 = vunpack.c.l.b16 %v3659
        %v3772 = vunpack.c.l.b16 %v3660
        %v3773 = vunpack.c.l.b16 %v3661
        %v3774 = vunpack.c.l.b16 %v3662
        %v3775 = vunpack.c.l.b16 %v3663
        %v3776 = vunpack.c.l.b16 %v3664
        %v3777 = vunpack.c.l.b16 %v3665
        %v3778 = vunpack.c.l.b16 %v3666
        %v3779 = vunpack.c.l.b16 %v3667
        %v3780 = vunpack.c.l.b16 %v3668
        %v3781 = vunpack.c.l.b16 %v3669
        %v3782 = vunpack.c.l.b16 %v3670
        %v3783 = vunpack.c.l.b16 %v3671
        %v3784 = vunpack.c.l.b16 %v3672
        %v3785 = vunpack.c.l.b16 %v3673
        %v3786 = vunpack.c.l.b16 %v3674
        %v3787 = vunpack.c.l.b16 %v3675
        %v3788 = vunpack.c.l.b16 %v3676
        %v3789 = vunpack.c.l.b16 %v3677
        %v3790 = vunpack.c.l.b16 %v3678
        %v3791 = vunpack.c.l.b16 %v3679
        %v3792 = vunpack.c.l.b16 %v3680
        %v3793 = vunpack.c.l.b16 %v3681
        %v3794 = vunpack.c.l.b16 %v3682
        %v3795 = vunpack.c.l.b16 %v3683
        %v3796 = vunpack.c.l.b16 %v3684
        %v3797 = vunpack.c.l.b16 %v3685
        %v3798 = vunpack.c.l.b16 %v3686
        %v3799 = vunpack.c.l.b16 %v3687
        %v3800 = vunpack.c.l.b16 %v3688
        %v3801 = vunpack.c.l.b16 %v3689
        %v3802 = vpack.c.b16 %v3755, %v3754
        %v3803 = vpack.c.b16 %v3756, %v3756
        %v3804 = vpack.c.b16 %v3758, %v3757
        %v3805 = vpack.c.b16 %v3759, %v3759
        %v3806 = vpack.c.b16 %v3761, %v3760
        %v3807 = vpack.c.b16 %v3762, %v3762
        %v3808 = vpack.c.b16 %v3764, %v3763
        %v3809 = vpack.c.b16 %v3765, %v3765
        %v3810 = vpack.c.b16 %v3767, %v3766
        %v3811 = vpack.c.b16 %v3768, %v3768
        %v3812 = vpack.c.b16 %v3770, %v3769
        %v3813 = vpack.c.b16 %v3771, %v3771
        %v3814 = vpack.c.b16 %v3773, %v3772
        %v3815 = vpack.c.b16 %v3774, %v3774
        %v3816 = vpack.c.b16 %v3776, %v3775
        %v3817 = vpack.c.b16 %v3777, %v3777
        %v3818 = vpack.c.b16 %v3779, %v3778
        %v3819 = vpack.c.b16 %v3780, %v3780
        %v3820 = vpack.c.b16 %v3782, %v3781
        %v3821 = vpack.c.b16 %v3783, %v3783
        %v3822 = vpack.c.b16 %v3785, %v3784
        %v3823 = vpack.c.b16 %v3786, %v3786
        %v3824 = vpack.c.b16 %v3788, %v3787
        %v3825 = vpack.c.b16 %v3789, %v3789
        %v3826 = vpack.c.b16 %v3791, %v3790
        %v3827 = vpack.c.b16 %v3792, %v3792
        %v3828 = vpack.c.b16 %v3794, %v3793
        %v3829 = vpack.c.b16 %v3795, %v3795
        %v3830 = vpack.c.b16 %v3797, %v3796
        %v3831 = vpack.c.b16 %v3798, %v3798
        %v3832 = vpack.c.b16 %v3800, %v3799
        %v3833 = vpack.c.b16 %v3801, %v3801
        %v3834 = vpack.c.b16 %v3756, %v3755
        %v3835 = vpack.c.b16 %v3759, %v3758
        %v3836 = vpack.c.b16 %v3762, %v3761
        %v3837 = vpack.c.b16 %v3765, %v3764
        %v3838 = vpack.c.b16 %v3768, %v3767
        %v3839 = vpack.c.b16 %v3771, %v3770
        %v3840 = vpack.c.b16 %v3774, %v3773
        %v3841 = vpack.c.b16 %v3777, %v3776
        %v3842 = vpack.c.b16 %v3780, %v3779
        %v3843 = vpack.c.b16 %v3783, %v3782
        %v3844 = vpack.c.b16 %v3786, %v3785
        %v3845 = vpack.c.b16 %v3789, %v3788
        %v3846 = vpack.c.b16 %v3792, %v3791
        %v3847 = vpack.c.b16 %v3795, %v3794
        %v3848 = vpack.c.b16 %v3798, %v3797
        %v3849 = vpack.c.b16 %v3801, %v3800
        %v3851 = vshrl.u32 %v3834, 16
        %v3853 = vrot.slane %v3851, 4
        %v3854 = vshll.u32 %v3834, 16
        %v3856 = vrot.slane %v3854, 5
        %v3857 = vor.u32 %v3853, %v3856
        %v3859 = vshrl.u32 %v3835, 16
        %v3861 = vrot.slane %v3859, 4
        %v3862 = vshll.u32 %v3835, 16
        %v3864 = vrot.slane %v3862, 5
        %v3865 = vor.u32 %v3861, %v3864
        %v3867 = vshrl.u32 %v3836, 16
        %v3869 = vrot.slane %v3867, 4
        %v3870 = vshll.u32 %v3836, 16
        %v3872 = vrot.slane %v3870, 5
        %v3873 = vor.u32 %v3869, %v3872
        %v3875 = vshrl.u32 %v3837, 16
        %v3877 = vrot.slane %v3875, 4
        %v3878 = vshll.u32 %v3837, 16
        %v3880 = vrot.slane %v3878, 5
        %v3881 = vor.u32 %v3877, %v3880
        %v3883 = vshrl.u32 %v3838, 16
        %v3885 = vrot.slane %v3883, 4
        %v3886 = vshll.u32 %v3838, 16
        %v3888 = vrot.slane %v3886, 5
        %v3889 = vor.u32 %v3885, %v3888
        %v3891 = vshrl.u32 %v3839, 16
        %v3893 = vrot.slane %v3891, 4
        %v3894 = vshll.u32 %v3839, 16
        %v3896 = vrot.slane %v3894, 5
        %v3897 = vor.u32 %v3893, %v3896
        %v3899 = vshrl.u32 %v3840, 16
        %v3901 = vrot.slane %v3899, 4
        %v3902 = vshll.u32 %v3840, 16
        %v3904 = vrot.slane %v3902, 5
        %v3905 = vor.u32 %v3901, %v3904
        %v3907 = vshrl.u32 %v3841, 16
        %v3909 = vrot.slane %v3907, 4
        %v3910 = vshll.u32 %v3841, 16
        %v3912 = vrot.slane %v3910, 5
        %v3913 = vor.u32 %v3909, %v3912
        %v3915 = vshrl.u32 %v3842, 16
        %v3917 = vrot.slane %v3915, 4
        %v3918 = vshll.u32 %v3842, 16
        %v3920 = vrot.slane %v3918, 5
        %v3921 = vor.u32 %v3917, %v3920
        %v3923 = vshrl.u32 %v3843, 16
        %v3925 = vrot.slane %v3923, 4
        %v3926 = vshll.u32 %v3843, 16
        %v3928 = vrot.slane %v3926, 5
        %v3929 = vor.u32 %v3925, %v3928
        %v3931 = vshrl.u32 %v3844, 16
        %v3933 = vrot.slane %v3931, 4
        %v3934 = vshll.u32 %v3844, 16
        %v3936 = vrot.slane %v3934, 5
        %v3937 = vor.u32 %v3933, %v3936
        %v3939 = vshrl.u32 %v3845, 16
        %v3941 = vrot.slane %v3939, 4
        %v3942 = vshll.u32 %v3845, 16
        %v3944 = vrot.slane %v3942, 5
        %v3945 = vor.u32 %v3941, %v3944
        %v3947 = vshrl.u32 %v3846, 16
        %v3949 = vrot.slane %v3947, 4
        %v3950 = vshll.u32 %v3846, 16
        %v3952 = vrot.slane %v3950, 5
        %v3953 = vor.u32 %v3949, %v3952
        %v3955 = vshrl.u32 %v3847, 16
        %v3957 = vrot.slane %v3955, 4
        %v3958 = vshll.u32 %v3847, 16
        %v3960 = vrot.slane %v3958, 5
        %v3961 = vor.u32 %v3957, %v3960
        %v3963 = vshrl.u32 %v3848, 16
        %v3965 = vrot.slane %v3963, 4
        %v3966 = vshll.u32 %v3848, 16
        %v3968 = vrot.slane %v3966, 5
        %v3969 = vor.u32 %v3965, %v3968
        %v3971 = vshrl.u32 %v3849, 16
        %v3973 = vrot.slane %v3971, 4
        %v3974 = vshll.u32 %v3849, 16
        %v3976 = vrot.slane %v3974, 5
        %v3977 = vor.u32 %v3973, %v3976
        %3978 = vrot.lane.b32.xlu0 %v3857, 64
        %v3979 = vpop.permute.xlu0 %3978
        %3980 = vrot.lane.b32.xlu0 %v3865, 64
        %v3981 = vpop.permute.xlu0 %3980
        %3982 = vrot.lane.b32.xlu0 %v3873, 64
        %v3983 = vpop.permute.xlu0 %3982
        %3984 = vrot.lane.b32.xlu0 %v3881, 64
        %v3985 = vpop.permute.xlu0 %3984
        %3986 = vrot.lane.b32.xlu0 %v3889, 64
        %v3987 = vpop.permute.xlu0 %3986
        %3988 = vrot.lane.b32.xlu0 %v3897, 64
        %v3989 = vpop.permute.xlu0 %3988
        %3990 = vrot.lane.b32.xlu0 %v3905, 64
        %v3991 = vpop.permute.xlu0 %3990
        %3992 = vrot.lane.b32.xlu0 %v3913, 64
        %v3993 = vpop.permute.xlu0 %3992
        %3994 = vrot.lane.b32.xlu0 %v3921, 64
        %v3995 = vpop.permute.xlu0 %3994
        %3996 = vrot.lane.b32.xlu0 %v3929, 64
        %v3997 = vpop.permute.xlu0 %3996
        %3998 = vrot.lane.b32.xlu0 %v3937, 64
        %v3999 = vpop.permute.xlu0 %3998
        %4000 = vrot.lane.b32.xlu0 %v3945, 64
        %v4001 = vpop.permute.xlu0 %4000
        %4002 = vrot.lane.b32.xlu0 %v3953, 64
        %v4003 = vpop.permute.xlu0 %4002
        %4004 = vrot.lane.b32.xlu0 %v3961, 64
        %v4005 = vpop.permute.xlu0 %4004
        %4006 = vrot.lane.b32.xlu0 %v3969, 64
        %v4007 = vpop.permute.xlu0 %4006
        %4008 = vrot.lane.b32.xlu0 %v3977, 64
        %v4009 = vpop.permute.xlu0 %4008
        %v4026 = vunpack.c.l.b16 %v3690
        %v4027 = vunpack.c.l.b16 %v3691
        %v4028 = vunpack.c.l.b16 %v3692
        %v4029 = vunpack.c.l.b16 %v3693
        %v4030 = vunpack.c.l.b16 %v3694
        %v4031 = vunpack.c.l.b16 %v3695
        %v4032 = vunpack.c.l.b16 %v3696
        %v4033 = vunpack.c.l.b16 %v3697
        %v4034 = vunpack.c.l.b16 %v3698
        %v4035 = vunpack.c.l.b16 %v3699
        %v4036 = vunpack.c.l.b16 %v3700
        %v4037 = vunpack.c.l.b16 %v3701
        %v4038 = vunpack.c.l.b16 %v3702
        %v4039 = vunpack.c.l.b16 %v3703
        %v4040 = vunpack.c.l.b16 %v3704
        %v4041 = vunpack.c.l.b16 %v3705
        %v4042 = vpack.c.b16 %v4026, %v4026
        %v4043 = vpack.c.b16 %v4027, %v4027
        %v4044 = vpack.c.b16 %v4028, %v4028
        %v4045 = vpack.c.b16 %v4029, %v4029
        %v4046 = vpack.c.b16 %v4030, %v4030
        %v4047 = vpack.c.b16 %v4031, %v4031
        %v4048 = vpack.c.b16 %v4032, %v4032
        %v4049 = vpack.c.b16 %v4033, %v4033
        %v4050 = vpack.c.b16 %v4034, %v4034
        %v4051 = vpack.c.b16 %v4035, %v4035
        %v4052 = vpack.c.b16 %v4036, %v4036
        %v4053 = vpack.c.b16 %v4037, %v4037
        %v4054 = vpack.c.b16 %v4038, %v4038
        %v4055 = vpack.c.b16 %v4039, %v4039
        %v4056 = vpack.c.b16 %v4040, %v4040
        %v4057 = vpack.c.b16 %v4041, %v4041
        %v4058 = vrot.slane %v3834, 5
        %v4059 = vrot.slane %v4042, 5
        %v4060 = vsel %vm1265, %v4058, %v4059
        %v4061 = vrot.slane %v3835, 5
        %v4062 = vrot.slane %v4043, 5
        %v4063 = vsel %vm1265, %v4061, %v4062
        %v4064 = vrot.slane %v3836, 5
        %v4065 = vrot.slane %v4044, 5
        %v4066 = vsel %vm1265, %v4064, %v4065
        %v4067 = vrot.slane %v3837, 5
        %v4068 = vrot.slane %v4045, 5
        %v4069 = vsel %vm1265, %v4067, %v4068
        %v4070 = vrot.slane %v3838, 5
        %v4071 = vrot.slane %v4046, 5
        %v4072 = vsel %vm1265, %v4070, %v4071
        %v4073 = vrot.slane %v3839, 5
        %v4074 = vrot.slane %v4047, 5
        %v4075 = vsel %vm1265, %v4073, %v4074
        %v4076 = vrot.slane %v3840, 5
        %v4077 = vrot.slane %v4048, 5
        %v4078 = vsel %vm1265, %v4076, %v4077
        %v4079 = vrot.slane %v3841, 5
        %v4080 = vrot.slane %v4049, 5
        %v4081 = vsel %vm1265, %v4079, %v4080
        %v4082 = vrot.slane %v3842, 5
        %v4083 = vrot.slane %v4050, 5
        %v4084 = vsel %vm1265, %v4082, %v4083
        %v4085 = vrot.slane %v3843, 5
        %v4086 = vrot.slane %v4051, 5
        %v4087 = vsel %vm1265, %v4085, %v4086
        %v4088 = vrot.slane %v3844, 5
        %v4089 = vrot.slane %v4052, 5
        %v4090 = vsel %vm1265, %v4088, %v4089
        %v4091 = vrot.slane %v3845, 5
        %v4092 = vrot.slane %v4053, 5
        %v4093 = vsel %vm1265, %v4091, %v4092
        %v4094 = vrot.slane %v3846, 5
        %v4095 = vrot.slane %v4054, 5
        %v4096 = vsel %vm1265, %v4094, %v4095
        %v4097 = vrot.slane %v3847, 5
        %v4098 = vrot.slane %v4055, 5
        %v4099 = vsel %vm1265, %v4097, %v4098
        %v4100 = vrot.slane %v3848, 5
        %v4101 = vrot.slane %v4056, 5
        %v4102 = vsel %vm1265, %v4100, %v4101
        %v4103 = vrot.slane %v3849, 5
        %v4104 = vrot.slane %v4057, 5
        %v4105 = vsel %vm1265, %v4103, %v4104
        %v4108 = vsel %vm1314, %v3802, %v3979
        %v4110 = vsel %vm1314, %v3803, %v3979
        %v4113 = vsel %vm1314, %v3804, %v3981
        %v4115 = vsel %vm1314, %v3805, %v3981
        %v4118 = vsel %vm1314, %v3806, %v3983
        %v4120 = vsel %vm1314, %v3807, %v3983
        %v4123 = vsel %vm1314, %v3808, %v3985
        %v4125 = vsel %vm1314, %v3809, %v3985
        %v4128 = vsel %vm1314, %v3810, %v3987
        %v4130 = vsel %vm1314, %v3811, %v3987
        %v4133 = vsel %vm1314, %v3812, %v3989
        %v4135 = vsel %vm1314, %v3813, %v3989
        %v4138 = vsel %vm1314, %v3814, %v3991
        %v4140 = vsel %vm1314, %v3815, %v3991
        %v4143 = vsel %vm1314, %v3816, %v3993
        %v4145 = vsel %vm1314, %v3817, %v3993
        %v4148 = vsel %vm1314, %v3818, %v3995
        %v4150 = vsel %vm1314, %v3819, %v3995
        %v4153 = vsel %vm1314, %v3820, %v3997
        %v4155 = vsel %vm1314, %v3821, %v3997
        %v4158 = vsel %vm1314, %v3822, %v3999
        %v4160 = vsel %vm1314, %v3823, %v3999
        %v4163 = vsel %vm1314, %v3824, %v4001
        %v4165 = vsel %vm1314, %v3825, %v4001
        %v4168 = vsel %vm1314, %v3826, %v4003
        %v4170 = vsel %vm1314, %v3827, %v4003
        %v4173 = vsel %vm1314, %v3828, %v4005
        %v4175 = vsel %vm1314, %v3829, %v4005
        %v4178 = vsel %vm1314, %v3830, %v4007
        %v4180 = vsel %vm1314, %v3831, %v4007
        %v4183 = vsel %vm1314, %v3832, %v4009
        %v4185 = vsel %vm1314, %v3833, %v4009
        %v4186 = vshrl.u32 %v4108, 16
        %v4188 = vrot.slane %v4186, 3
        %v4189 = vshll.u32 %v4108, 16
        %v4191 = vrot.slane %v4189, 4
        %v4192 = vor.u32 %v4188, %v4191
        %v4193 = vshrl.u32 %v4110, 16
        %v4195 = vrot.slane %v4193, 3
        %v4196 = vshll.u32 %v4110, 16
        %v4198 = vrot.slane %v4196, 4
        %v4199 = vor.u32 %v4195, %v4198
        %v4200 = vsel %vm1395, %v4192, %v4199
        %v4202 = vshrl.u32 %v4058, 16
        %v4204 = vrot.slane %v4202, 3
        %v4205 = vshll.u32 %v4058, 16
        %v4207 = vrot.slane %v4205, 4
        %v4208 = vor.u32 %v4204, %v4207
        %v4210 = vshrl.u32 %v4060, 16
        %v4212 = vrot.slane %v4210, 3
        %v4213 = vshll.u32 %v4060, 16
        %v4215 = vrot.slane %v4213, 4
        %v4216 = vor.u32 %v4212, %v4215
        %v4217 = vsel %vm1395, %v4208, %v4216
        %v4218 = vshrl.u32 %v4113, 16
        %v4220 = vrot.slane %v4218, 3
        %v4221 = vshll.u32 %v4113, 16
        %v4223 = vrot.slane %v4221, 4
        %v4224 = vor.u32 %v4220, %v4223
        %v4225 = vshrl.u32 %v4115, 16
        %v4227 = vrot.slane %v4225, 3
        %v4228 = vshll.u32 %v4115, 16
        %v4230 = vrot.slane %v4228, 4
        %v4231 = vor.u32 %v4227, %v4230
        %v4232 = vsel %vm1395, %v4224, %v4231
        %v4234 = vshrl.u32 %v4061, 16
        %v4236 = vrot.slane %v4234, 3
        %v4237 = vshll.u32 %v4061, 16
        %v4239 = vrot.slane %v4237, 4
        %v4240 = vor.u32 %v4236, %v4239
        %v4242 = vshrl.u32 %v4063, 16
        %v4244 = vrot.slane %v4242, 3
        %v4245 = vshll.u32 %v4063, 16
        %v4247 = vrot.slane %v4245, 4
        %v4248 = vor.u32 %v4244, %v4247
        %v4249 = vsel %vm1395, %v4240, %v4248
        %v4250 = vshrl.u32 %v4118, 16
        %v4252 = vrot.slane %v4250, 3
        %v4253 = vshll.u32 %v4118, 16
        %v4255 = vrot.slane %v4253, 4
        %v4256 = vor.u32 %v4252, %v4255
        %v4257 = vshrl.u32 %v4120, 16
        %v4259 = vrot.slane %v4257, 3
        %v4260 = vshll.u32 %v4120, 16
        %v4262 = vrot.slane %v4260, 4
        %v4263 = vor.u32 %v4259, %v4262
        %v4264 = vsel %vm1395, %v4256, %v4263
        %v4266 = vshrl.u32 %v4064, 16
        %v4268 = vrot.slane %v4266, 3
        %v4269 = vshll.u32 %v4064, 16
        %v4271 = vrot.slane %v4269, 4
        %v4272 = vor.u32 %v4268, %v4271
        %v4274 = vshrl.u32 %v4066, 16
        %v4276 = vrot.slane %v4274, 3
        %v4277 = vshll.u32 %v4066, 16
        %v4279 = vrot.slane %v4277, 4
        %v4280 = vor.u32 %v4276, %v4279
        %v4281 = vsel %vm1395, %v4272, %v4280
        %v4282 = vshrl.u32 %v4123, 16
        %v4284 = vrot.slane %v4282, 3
        %v4285 = vshll.u32 %v4123, 16
        %v4287 = vrot.slane %v4285, 4
        %v4288 = vor.u32 %v4284, %v4287
        %v4289 = vshrl.u32 %v4125, 16
        %v4291 = vrot.slane %v4289, 3
        %v4292 = vshll.u32 %v4125, 16
        %v4294 = vrot.slane %v4292, 4
        %v4295 = vor.u32 %v4291, %v4294
        %v4296 = vsel %vm1395, %v4288, %v4295
        %v4298 = vshrl.u32 %v4067, 16
        %v4300 = vrot.slane %v4298, 3
        %v4301 = vshll.u32 %v4067, 16
        %v4303 = vrot.slane %v4301, 4
        %v4304 = vor.u32 %v4300, %v4303
        %v4306 = vshrl.u32 %v4069, 16
        %v4308 = vrot.slane %v4306, 3
        %v4309 = vshll.u32 %v4069, 16
        %v4311 = vrot.slane %v4309, 4
        %v4312 = vor.u32 %v4308, %v4311
        %v4313 = vsel %vm1395, %v4304, %v4312
        %v4314 = vshrl.u32 %v4128, 16
        %v4316 = vrot.slane %v4314, 3
        %v4317 = vshll.u32 %v4128, 16
        %v4319 = vrot.slane %v4317, 4
        %v4320 = vor.u32 %v4316, %v4319
        %v4321 = vshrl.u32 %v4130, 16
        %v4323 = vrot.slane %v4321, 3
        %v4324 = vshll.u32 %v4130, 16
        %v4326 = vrot.slane %v4324, 4
        %v4327 = vor.u32 %v4323, %v4326
        %v4328 = vsel %vm1395, %v4320, %v4327
        %v4330 = vshrl.u32 %v4070, 16
        %v4332 = vrot.slane %v4330, 3
        %v4333 = vshll.u32 %v4070, 16
        %v4335 = vrot.slane %v4333, 4
        %v4336 = vor.u32 %v4332, %v4335
        %v4338 = vshrl.u32 %v4072, 16
        %v4340 = vrot.slane %v4338, 3
        %v4341 = vshll.u32 %v4072, 16
        %v4343 = vrot.slane %v4341, 4
        %v4344 = vor.u32 %v4340, %v4343
        %v4345 = vsel %vm1395, %v4336, %v4344
        %v4346 = vshrl.u32 %v4133, 16
        %v4348 = vrot.slane %v4346, 3
        %v4349 = vshll.u32 %v4133, 16
        %v4351 = vrot.slane %v4349, 4
        %v4352 = vor.u32 %v4348, %v4351
        %v4353 = vshrl.u32 %v4135, 16
        %v4355 = vrot.slane %v4353, 3
        %v4356 = vshll.u32 %v4135, 16
        %v4358 = vrot.slane %v4356, 4
        %v4359 = vor.u32 %v4355, %v4358
        %v4360 = vsel %vm1395, %v4352, %v4359
        %v4362 = vshrl.u32 %v4073, 16
        %v4364 = vrot.slane %v4362, 3
        %v4365 = vshll.u32 %v4073, 16
        %v4367 = vrot.slane %v4365, 4
        %v4368 = vor.u32 %v4364, %v4367
        %v4370 = vshrl.u32 %v4075, 16
        %v4372 = vrot.slane %v4370, 3
        %v4373 = vshll.u32 %v4075, 16
        %v4375 = vrot.slane %v4373, 4
        %v4376 = vor.u32 %v4372, %v4375
        %v4377 = vsel %vm1395, %v4368, %v4376
        %v4378 = vshrl.u32 %v4138, 16
        %v4380 = vrot.slane %v4378, 3
        %v4381 = vshll.u32 %v4138, 16
        %v4383 = vrot.slane %v4381, 4
        %v4384 = vor.u32 %v4380, %v4383
        %v4385 = vshrl.u32 %v4140, 16
        %v4387 = vrot.slane %v4385, 3
        %v4388 = vshll.u32 %v4140, 16
        %v4390 = vrot.slane %v4388, 4
        %v4391 = vor.u32 %v4387, %v4390
        %v4392 = vsel %vm1395, %v4384, %v4391
        %v4394 = vshrl.u32 %v4076, 16
        %v4396 = vrot.slane %v4394, 3
        %v4397 = vshll.u32 %v4076, 16
        %v4399 = vrot.slane %v4397, 4
        %v4400 = vor.u32 %v4396, %v4399
        %v4402 = vshrl.u32 %v4078, 16
        %v4404 = vrot.slane %v4402, 3
        %v4405 = vshll.u32 %v4078, 16
        %v4407 = vrot.slane %v4405, 4
        %v4408 = vor.u32 %v4404, %v4407
        %v4409 = vsel %vm1395, %v4400, %v4408
        %v4410 = vshrl.u32 %v4143, 16
        %v4412 = vrot.slane %v4410, 3
        %v4413 = vshll.u32 %v4143, 16
        %v4415 = vrot.slane %v4413, 4
        %v4416 = vor.u32 %v4412, %v4415
        %v4417 = vshrl.u32 %v4145, 16
        %v4419 = vrot.slane %v4417, 3
        %v4420 = vshll.u32 %v4145, 16
        %v4422 = vrot.slane %v4420, 4
        %v4423 = vor.u32 %v4419, %v4422
        %v4424 = vsel %vm1395, %v4416, %v4423
        %v4426 = vshrl.u32 %v4079, 16
        %v4428 = vrot.slane %v4426, 3
        %v4429 = vshll.u32 %v4079, 16
        %v4431 = vrot.slane %v4429, 4
        %v4432 = vor.u32 %v4428, %v4431
        %v4434 = vshrl.u32 %v4081, 16
        %v4436 = vrot.slane %v4434, 3
        %v4437 = vshll.u32 %v4081, 16
        %v4439 = vrot.slane %v4437, 4
        %v4440 = vor.u32 %v4436, %v4439
        %v4441 = vsel %vm1395, %v4432, %v4440
        %v4442 = vshrl.u32 %v4148, 16
        %v4444 = vrot.slane %v4442, 3
        %v4445 = vshll.u32 %v4148, 16
        %v4447 = vrot.slane %v4445, 4
        %v4448 = vor.u32 %v4444, %v4447
        %v4449 = vshrl.u32 %v4150, 16
        %v4451 = vrot.slane %v4449, 3
        %v4452 = vshll.u32 %v4150, 16
        %v4454 = vrot.slane %v4452, 4
        %v4455 = vor.u32 %v4451, %v4454
        %v4456 = vsel %vm1395, %v4448, %v4455
        %v4458 = vshrl.u32 %v4082, 16
        %v4460 = vrot.slane %v4458, 3
        %v4461 = vshll.u32 %v4082, 16
        %v4463 = vrot.slane %v4461, 4
        %v4464 = vor.u32 %v4460, %v4463
        %v4466 = vshrl.u32 %v4084, 16
        %v4468 = vrot.slane %v4466, 3
        %v4469 = vshll.u32 %v4084, 16
        %v4471 = vrot.slane %v4469, 4
        %v4472 = vor.u32 %v4468, %v4471
        %v4473 = vsel %vm1395, %v4464, %v4472
        %v4474 = vshrl.u32 %v4153, 16
        %v4476 = vrot.slane %v4474, 3
        %v4477 = vshll.u32 %v4153, 16
        %v4479 = vrot.slane %v4477, 4
        %v4480 = vor.u32 %v4476, %v4479
        %v4481 = vshrl.u32 %v4155, 16
        %v4483 = vrot.slane %v4481, 3
        %v4484 = vshll.u32 %v4155, 16
        %v4486 = vrot.slane %v4484, 4
        %v4487 = vor.u32 %v4483, %v4486
        %v4488 = vsel %vm1395, %v4480, %v4487
        %v4490 = vshrl.u32 %v4085, 16
        %v4492 = vrot.slane %v4490, 3
        %v4493 = vshll.u32 %v4085, 16
        %v4495 = vrot.slane %v4493, 4
        %v4496 = vor.u32 %v4492, %v4495
        %v4498 = vshrl.u32 %v4087, 16
        %v4500 = vrot.slane %v4498, 3
        %v4501 = vshll.u32 %v4087, 16
        %v4503 = vrot.slane %v4501, 4
        %v4504 = vor.u32 %v4500, %v4503
        %v4505 = vsel %vm1395, %v4496, %v4504
        %v4506 = vshrl.u32 %v4158, 16
        %v4508 = vrot.slane %v4506, 3
        %v4509 = vshll.u32 %v4158, 16
        %v4511 = vrot.slane %v4509, 4
        %v4512 = vor.u32 %v4508, %v4511
        %v4513 = vshrl.u32 %v4160, 16
        %v4515 = vrot.slane %v4513, 3
        %v4516 = vshll.u32 %v4160, 16
        %v4518 = vrot.slane %v4516, 4
        %v4519 = vor.u32 %v4515, %v4518
        %v4520 = vsel %vm1395, %v4512, %v4519
        %v4522 = vshrl.u32 %v4088, 16
        %v4524 = vrot.slane %v4522, 3
        %v4525 = vshll.u32 %v4088, 16
        %v4527 = vrot.slane %v4525, 4
        %v4528 = vor.u32 %v4524, %v4527
        %v4530 = vshrl.u32 %v4090, 16
        %v4532 = vrot.slane %v4530, 3
        %v4533 = vshll.u32 %v4090, 16
        %v4535 = vrot.slane %v4533, 4
        %v4536 = vor.u32 %v4532, %v4535
        %v4537 = vsel %vm1395, %v4528, %v4536
        %v4538 = vshrl.u32 %v4163, 16
        %v4540 = vrot.slane %v4538, 3
        %v4541 = vshll.u32 %v4163, 16
        %v4543 = vrot.slane %v4541, 4
        %v4544 = vor.u32 %v4540, %v4543
        %v4545 = vshrl.u32 %v4165, 16
        %v4547 = vrot.slane %v4545, 3
        %v4548 = vshll.u32 %v4165, 16
        %v4550 = vrot.slane %v4548, 4
        %v4551 = vor.u32 %v4547, %v4550
        %v4552 = vsel %vm1395, %v4544, %v4551
        %v4554 = vshrl.u32 %v4091, 16
        %v4556 = vrot.slane %v4554, 3
        %v4557 = vshll.u32 %v4091, 16
        %v4559 = vrot.slane %v4557, 4
        %v4560 = vor.u32 %v4556, %v4559
        %v4562 = vshrl.u32 %v4093, 16
        %v4564 = vrot.slane %v4562, 3
        %v4565 = vshll.u32 %v4093, 16
        %v4567 = vrot.slane %v4565, 4
        %v4568 = vor.u32 %v4564, %v4567
        %v4569 = vsel %vm1395, %v4560, %v4568
        %v4570 = vshrl.u32 %v4168, 16
        %v4572 = vrot.slane %v4570, 3
        %v4573 = vshll.u32 %v4168, 16
        %v4575 = vrot.slane %v4573, 4
        %v4576 = vor.u32 %v4572, %v4575
        %v4577 = vshrl.u32 %v4170, 16
        %v4579 = vrot.slane %v4577, 3
        %v4580 = vshll.u32 %v4170, 16
        %v4582 = vrot.slane %v4580, 4
        %v4583 = vor.u32 %v4579, %v4582
        %v4584 = vsel %vm1395, %v4576, %v4583
        %v4586 = vshrl.u32 %v4094, 16
        %v4588 = vrot.slane %v4586, 3
        %v4589 = vshll.u32 %v4094, 16
        %v4591 = vrot.slane %v4589, 4
        %v4592 = vor.u32 %v4588, %v4591
        %v4594 = vshrl.u32 %v4096, 16
        %v4596 = vrot.slane %v4594, 3
        %v4597 = vshll.u32 %v4096, 16
        %v4599 = vrot.slane %v4597, 4
        %v4600 = vor.u32 %v4596, %v4599
        %v4601 = vsel %vm1395, %v4592, %v4600
        %v4602 = vshrl.u32 %v4173, 16
        %v4604 = vrot.slane %v4602, 3
        %v4605 = vshll.u32 %v4173, 16
        %v4607 = vrot.slane %v4605, 4
        %v4608 = vor.u32 %v4604, %v4607
        %v4609 = vshrl.u32 %v4175, 16
        %v4611 = vrot.slane %v4609, 3
        %v4612 = vshll.u32 %v4175, 16
        %v4614 = vrot.slane %v4612, 4
        %v4615 = vor.u32 %v4611, %v4614
        %v4616 = vsel %vm1395, %v4608, %v4615
        %v4618 = vshrl.u32 %v4097, 16
        %v4620 = vrot.slane %v4618, 3
        %v4621 = vshll.u32 %v4097, 16
        %v4623 = vrot.slane %v4621, 4
        %v4624 = vor.u32 %v4620, %v4623
        %v4626 = vshrl.u32 %v4099, 16
        %v4628 = vrot.slane %v4626, 3
        %v4629 = vshll.u32 %v4099, 16
        %v4631 = vrot.slane %v4629, 4
        %v4632 = vor.u32 %v4628, %v4631
        %v4633 = vsel %vm1395, %v4624, %v4632
        %v4634 = vshrl.u32 %v4178, 16
        %v4636 = vrot.slane %v4634, 3
        %v4637 = vshll.u32 %v4178, 16
        %v4639 = vrot.slane %v4637, 4
        %v4640 = vor.u32 %v4636, %v4639
        %v4641 = vshrl.u32 %v4180, 16
        %v4643 = vrot.slane %v4641, 3
        %v4644 = vshll.u32 %v4180, 16
        %v4646 = vrot.slane %v4644, 4
        %v4647 = vor.u32 %v4643, %v4646
        %v4648 = vsel %vm1395, %v4640, %v4647
        %v4650 = vshrl.u32 %v4100, 16
        %v4652 = vrot.slane %v4650, 3
        %v4653 = vshll.u32 %v4100, 16
        %v4655 = vrot.slane %v4653, 4
        %v4656 = vor.u32 %v4652, %v4655
        %v4658 = vshrl.u32 %v4102, 16
        %v4660 = vrot.slane %v4658, 3
        %v4661 = vshll.u32 %v4102, 16
        %v4663 = vrot.slane %v4661, 4
        %v4664 = vor.u32 %v4660, %v4663
        %v4665 = vsel %vm1395, %v4656, %v4664
        %v4666 = vshrl.u32 %v4183, 16
        %v4668 = vrot.slane %v4666, 3
        %v4669 = vshll.u32 %v4183, 16
        %v4671 = vrot.slane %v4669, 4
        %v4672 = vor.u32 %v4668, %v4671
        %v4673 = vshrl.u32 %v4185, 16
        %v4675 = vrot.slane %v4673, 3
        %v4676 = vshll.u32 %v4185, 16
        %v4678 = vrot.slane %v4676, 4
        %v4679 = vor.u32 %v4675, %v4678
        %v4680 = vsel %vm1395, %v4672, %v4679
        %v4682 = vshrl.u32 %v4103, 16
        %v4684 = vrot.slane %v4682, 3
        %v4685 = vshll.u32 %v4103, 16
        %v4687 = vrot.slane %v4685, 4
        %v4688 = vor.u32 %v4684, %v4687
        %v4690 = vshrl.u32 %v4105, 16
        %v4692 = vrot.slane %v4690, 3
        %v4693 = vshll.u32 %v4105, 16
        %v4695 = vrot.slane %v4693, 4
        %v4696 = vor.u32 %v4692, %v4695
        %v4697 = vsel %vm1395, %v4688, %v4696
        %s4714 = scalar_lea.vmem [#allocation6], 192
        %v4715 = vld [vmem:[%s4714] sm:$0xf]
        %v4716 = vld [vmem:[%s4714 + $0x4] sm:$0xf]
        %v4717 = vld [vmem:[%s4714 + $0x8] sm:$0xf]
        %v4718 = vld [vmem:[%s4714 + $0xc] sm:$0xf]
        %v4719 = vld [vmem:[%s4714 + $0x10] sm:$0xf]
        %v4720 = vld [vmem:[%s4714 + $0x14] sm:$0xf]
        %v4721 = vld [vmem:[%s4714 + $0x18] sm:$0xf]
        %v4722 = vld [vmem:[%s4714 + $0x1c] sm:$0xf]
        %v4723 = vld [vmem:[%s4714 + $0x20] sm:$0xf]
        %v4724 = vld [vmem:[%s4714 + $0x24] sm:$0xf]
        %v4725 = vld [vmem:[%s4714 + $0x28] sm:$0xf]
        %v4726 = vld [vmem:[%s4714 + $0x2c] sm:$0xf]
        %v4727 = vld [vmem:[%s4714 + $0x30] sm:$0xf]
        %v4728 = vld [vmem:[%s4714 + $0x34] sm:$0xf]
        %v4729 = vld [vmem:[%s4714 + $0x38] sm:$0xf]
        %v4730 = vld [vmem:[%s4714 + $0x3c] sm:$0xf]
        %v4731 = vld [vmem:[%s4714 + $0x40] sm:$0xf]
        %v4732 = vld [vmem:[%s4714 + $0x44] sm:$0xf]
        %v4733 = vld [vmem:[%s4714 + $0x48] sm:$0xf]
        %v4734 = vld [vmem:[%s4714 + $0x4c] sm:$0xf]
        %v4735 = vld [vmem:[%s4714 + $0x50] sm:$0xf]
        %v4736 = vld [vmem:[%s4714 + $0x54] sm:$0xf]
        %v4737 = vld [vmem:[%s4714 + $0x58] sm:$0xf]
        %v4738 = vld [vmem:[%s4714 + $0x5c] sm:$0xf]
        %v4763 = vunpack.c.l.b16 %v4715
        %v4764 = vunpack.c.l.b16 %v4716
        %v4765 = vunpack.c.l.b16 %v4717
        %v4766 = vunpack.c.l.b16 %v4718
        %v4767 = vunpack.c.l.b16 %v4719
        %v4768 = vunpack.c.l.b16 %v4720
        %v4769 = vunpack.c.l.b16 %v4721
        %v4770 = vunpack.c.l.b16 %v4722
        %v4771 = vunpack.c.l.b16 %v4723
        %v4772 = vunpack.c.l.b16 %v4724
        %v4773 = vunpack.c.l.b16 %v4725
        %v4774 = vunpack.c.l.b16 %v4726
        %v4775 = vunpack.c.l.b16 %v4727
        %v4776 = vunpack.c.l.b16 %v4728
        %v4777 = vunpack.c.l.b16 %v4729
        %v4778 = vunpack.c.l.b16 %v4730
        %v4779 = vunpack.c.l.b16 %v4731
        %v4780 = vunpack.c.l.b16 %v4732
        %v4781 = vunpack.c.l.b16 %v4733
        %v4782 = vunpack.c.l.b16 %v4734
        %v4783 = vunpack.c.l.b16 %v4735
        %v4784 = vunpack.c.l.b16 %v4736
        %v4785 = vunpack.c.l.b16 %v4737
        %v4786 = vunpack.c.l.b16 %v4738
        %v4787 = vpack.c.b16 %v4764, %v4763
        %v4788 = vpack.c.b16 %v4766, %v4765
        %v4789 = vpack.c.b16 %v4768, %v4767
        %v4790 = vpack.c.b16 %v4770, %v4769
        %v4791 = vpack.c.b16 %v4772, %v4771
        %v4792 = vpack.c.b16 %v4774, %v4773
        %v4793 = vpack.c.b16 %v4776, %v4775
        %v4794 = vpack.c.b16 %v4778, %v4777
        %v4795 = vpack.c.b16 %v4780, %v4779
        %v4796 = vpack.c.b16 %v4782, %v4781
        %v4797 = vpack.c.b16 %v4784, %v4783
        %v4798 = vpack.c.b16 %v4786, %v4785
        %v4812 = vsel %vm1314, %v4217, 0
        %v4815 = vsel %vm1314, %v4249, 0
        %v4818 = vsel %vm1314, %v4281, 0
        %v4821 = vsel %vm1314, %v4313, 0
        %v4824 = vsel %vm1314, %v4345, 0
        %v4827 = vsel %vm1314, %v4377, 0
        %v4830 = vsel %vm1314, %v4409, 0
        %v4833 = vsel %vm1314, %v4441, 0
        %v4836 = vsel %vm1314, %v4473, 0
        %v4839 = vsel %vm1314, %v4505, 0
        %v4842 = vsel %vm1314, %v4537, 0
        %v4845 = vsel %vm1314, %v4569, 0
        %v4848 = vsel %vm1314, %v4601, 0
        %v4851 = vsel %vm1314, %v4633, 0
        %v4854 = vsel %vm1314, %v4665, 0
        %v4857 = vsel %vm1314, %v4697, 0
        %4859 = vmatpush.bf16.msra.mxu0 %v4794
        %4860 = vmatpush.bf16.msra.mxu0 %v4793
        %4861 = vmatpush.bf16.msra.mxu0 %v4792
        %4862 = vmatpush.bf16.msra.mxu0 %v4791
        %4863 = vmatpush.bf16.msra.mxu0 %v4790
        %4864 = vmatpush.bf16.msra.mxu0 %v4789
        %4865 = vmatpush.bf16.msra.mxu0 %v4788
        %4866 = vmatpush.bf16.msra.mxu0 %v4787
        %4867 = vmatmul.bf16.gmra.mxu0 %v4200
        %v4868 = vpop.f32.mrf.mxu0
        %v4869 = vadd.f32 0.0, %v4868
        %v4870 = vpop.f32.mrf.mxu0
        %v4871 = vadd.f32 0.0, %v4870
        %4872 = vmatmul.bf16.gmra.mxu0 %v4232
        %v4873 = vpop.f32.mrf.mxu0
        %v4874 = vadd.f32 0.0, %v4873
        %v4875 = vpop.f32.mrf.mxu0
        %v4876 = vadd.f32 0.0, %v4875
        %4877 = vmatmul.bf16.gmra.mxu0 %v4264
        %v4878 = vpop.f32.mrf.mxu0
        %v4879 = vadd.f32 0.0, %v4878
        %v4880 = vpop.f32.mrf.mxu0
        %v4881 = vadd.f32 0.0, %v4880
        %4882 = vmatmul.bf16.gmra.mxu0 %v4296
        %v4883 = vpop.f32.mrf.mxu0
        %v4884 = vadd.f32 0.0, %v4883
        %v4885 = vpop.f32.mrf.mxu0
        %v4886 = vadd.f32 0.0, %v4885
        %4887 = vmatmul.bf16.gmra.mxu0 %v4328
        %v4888 = vpop.f32.mrf.mxu0
        %v4889 = vadd.f32 0.0, %v4888
        %v4890 = vpop.f32.mrf.mxu0
        %v4891 = vadd.f32 0.0, %v4890
        %4892 = vmatmul.bf16.gmra.mxu0 %v4360
        %v4893 = vpop.f32.mrf.mxu0
        %v4894 = vadd.f32 0.0, %v4893
        %v4895 = vpop.f32.mrf.mxu0
        %v4896 = vadd.f32 0.0, %v4895
        %4897 = vmatmul.bf16.gmra.mxu0 %v4392
        %v4898 = vpop.f32.mrf.mxu0
        %v4899 = vadd.f32 0.0, %v4898
        %v4900 = vpop.f32.mrf.mxu0
        %v4901 = vadd.f32 0.0, %v4900
        %4902 = vmatmul.bf16.gmra.mxu0 %v4424
        %v4903 = vpop.f32.mrf.mxu0
        %v4904 = vadd.f32 0.0, %v4903
        %v4905 = vpop.f32.mrf.mxu0
        %v4906 = vadd.f32 0.0, %v4905
        %4907 = vmatmul.bf16.gmra.mxu0 %v4456
        %v4908 = vpop.f32.mrf.mxu0
        %v4909 = vadd.f32 0.0, %v4908
        %v4910 = vpop.f32.mrf.mxu0
        %v4911 = vadd.f32 0.0, %v4910
        %4912 = vmatmul.bf16.gmra.mxu0 %v4488
        %v4913 = vpop.f32.mrf.mxu0
        %v4914 = vadd.f32 0.0, %v4913
        %v4915 = vpop.f32.mrf.mxu0
        %v4916 = vadd.f32 0.0, %v4915
        %4917 = vmatmul.bf16.gmra.mxu0 %v4520
        %v4918 = vpop.f32.mrf.mxu0
        %v4919 = vadd.f32 0.0, %v4918
        %v4920 = vpop.f32.mrf.mxu0
        %v4921 = vadd.f32 0.0, %v4920
        %4922 = vmatmul.bf16.gmra.mxu0 %v4552
        %v4923 = vpop.f32.mrf.mxu0
        %v4924 = vadd.f32 0.0, %v4923
        %v4925 = vpop.f32.mrf.mxu0
        %v4926 = vadd.f32 0.0, %v4925
        %4927 = vmatmul.bf16.gmra.mxu0 %v4584
        %v4928 = vpop.f32.mrf.mxu0
        %v4929 = vadd.f32 0.0, %v4928
        %v4930 = vpop.f32.mrf.mxu0
        %v4931 = vadd.f32 0.0, %v4930
        %4932 = vmatmul.bf16.gmra.mxu0 %v4616
        %v4933 = vpop.f32.mrf.mxu0
        %v4934 = vadd.f32 0.0, %v4933
        %v4935 = vpop.f32.mrf.mxu0
        %v4936 = vadd.f32 0.0, %v4935
        %4937 = vmatmul.bf16.gmra.mxu0 %v4648
        %v4938 = vpop.f32.mrf.mxu0
        %v4939 = vadd.f32 0.0, %v4938
        %v4940 = vpop.f32.mrf.mxu0
        %v4941 = vadd.f32 0.0, %v4940
        %4942 = vmatmul.bf16.gmra.mxu0 %v4680
        %v4943 = vpop.f32.mrf.mxu0
        %v4944 = vadd.f32 0.0, %v4943
        %v4945 = vpop.f32.mrf.mxu0
        %v4946 = vadd.f32 0.0, %v4945
        %4947 = vdwg.mxu0
        %4948 = vmatpush.bf16.msra.mxu0 0
        %4949 = vmatpush.bf16.msra.mxu0 0
        %4950 = vmatpush.bf16.msra.mxu0 0
        %4951 = vmatpush.bf16.msra.mxu0 0
        %4952 = vmatpush.bf16.msra.mxu0 %v4798
        %4953 = vmatpush.bf16.msra.mxu0 %v4797
        %4954 = vmatpush.bf16.msra.mxu0 %v4796
        %4955 = vmatpush.bf16.msra.mxu0 %v4795
        %4956 = vmatmul.bf16.gmra.mxu0 %v4812
        %v4957 = vpop.f32.mrf.mxu0
        %v4958 = vadd.f32 %v4869, %v4957
        %v4959 = vpop.f32.mrf.mxu0
        %v4960 = vadd.f32 %v4871, %v4959
        %4961 = vmatmul.bf16.gmra.mxu0 %v4815
        %v4962 = vpop.f32.mrf.mxu0
        %v4963 = vadd.f32 %v4874, %v4962
        %v4964 = vpop.f32.mrf.mxu0
        %v4965 = vadd.f32 %v4876, %v4964
        %4966 = vmatmul.bf16.gmra.mxu0 %v4818
        %v4967 = vpop.f32.mrf.mxu0
        %v4968 = vadd.f32 %v4879, %v4967
        %v4969 = vpop.f32.mrf.mxu0
        %v4970 = vadd.f32 %v4881, %v4969
        %4971 = vmatmul.bf16.gmra.mxu0 %v4821
        %v4972 = vpop.f32.mrf.mxu0
        %v4973 = vadd.f32 %v4884, %v4972
        %v4974 = vpop.f32.mrf.mxu0
        %v4975 = vadd.f32 %v4886, %v4974
        %4976 = vmatmul.bf16.gmra.mxu0 %v4824
        %v4977 = vpop.f32.mrf.mxu0
        %v4978 = vadd.f32 %v4889, %v4977
        %v4979 = vpop.f32.mrf.mxu0
        %v4980 = vadd.f32 %v4891, %v4979
        %4981 = vmatmul.bf16.gmra.mxu0 %v4827
        %v4982 = vpop.f32.mrf.mxu0
        %v4983 = vadd.f32 %v4894, %v4982
        %v4984 = vpop.f32.mrf.mxu0
        %v4985 = vadd.f32 %v4896, %v4984
        %4986 = vmatmul.bf16.gmra.mxu0 %v4830
        %v4987 = vpop.f32.mrf.mxu0
        %v4988 = vadd.f32 %v4899, %v4987
        %v4989 = vpop.f32.mrf.mxu0
        %v4990 = vadd.f32 %v4901, %v4989
        %4991 = vmatmul.bf16.gmra.mxu0 %v4833
        %v4992 = vpop.f32.mrf.mxu0
        %v4993 = vadd.f32 %v4904, %v4992
        %v4994 = vpop.f32.mrf.mxu0
        %v4995 = vadd.f32 %v4906, %v4994
        %4996 = vmatmul.bf16.gmra.mxu0 %v4836
        %v4997 = vpop.f32.mrf.mxu0
        %v4998 = vadd.f32 %v4909, %v4997
        %v4999 = vpop.f32.mrf.mxu0
        %v5000 = vadd.f32 %v4911, %v4999
        %5001 = vmatmul.bf16.gmra.mxu0 %v4839
        %v5002 = vpop.f32.mrf.mxu0
        %v5003 = vadd.f32 %v4914, %v5002
        %v5004 = vpop.f32.mrf.mxu0
        %v5005 = vadd.f32 %v4916, %v5004
        %5006 = vmatmul.bf16.gmra.mxu0 %v4842
        %v5007 = vpop.f32.mrf.mxu0
        %v5008 = vadd.f32 %v4919, %v5007
        %v5009 = vpop.f32.mrf.mxu0
        %v5010 = vadd.f32 %v4921, %v5009
        %5011 = vmatmul.bf16.gmra.mxu0 %v4845
        %v5012 = vpop.f32.mrf.mxu0
        %v5013 = vadd.f32 %v4924, %v5012
        %v5014 = vpop.f32.mrf.mxu0
        %v5015 = vadd.f32 %v4926, %v5014
        %5016 = vmatmul.bf16.gmra.mxu0 %v4848
        %v5017 = vpop.f32.mrf.mxu0
        %v5018 = vadd.f32 %v4929, %v5017
        %v5019 = vpop.f32.mrf.mxu0
        %v5020 = vadd.f32 %v4931, %v5019
        %5021 = vmatmul.bf16.gmra.mxu0 %v4851
        %v5022 = vpop.f32.mrf.mxu0
        %v5023 = vadd.f32 %v4934, %v5022
        %v5024 = vpop.f32.mrf.mxu0
        %v5025 = vadd.f32 %v4936, %v5024
        %5026 = vmatmul.bf16.gmra.mxu0 %v4854
        %v5027 = vpop.f32.mrf.mxu0
        %v5028 = vadd.f32 %v4939, %v5027
        %v5029 = vpop.f32.mrf.mxu0
        %v5030 = vadd.f32 %v4941, %v5029
        %5031 = vmatmul.bf16.gmra.mxu0 %v4857
        %v5032 = vpop.f32.mrf.mxu0
        %v5033 = vadd.f32 %v4944, %v5032
        %v5034 = vpop.f32.mrf.mxu0
        %v5035 = vadd.f32 %v4946, %v5034
        %5036 = vdwg.mxu0
        %v5037 = vadd.f32 %v3562, %v4958
        %v5038 = vadd.f32 %v3564, %v4960
        %v5039 = vadd.f32 %v3567, %v4963
        %v5040 = vadd.f32 %v3569, %v4965
        %v5041 = vadd.f32 %v3572, %v4968
        %v5042 = vadd.f32 %v3574, %v4970
        %v5043 = vadd.f32 %v3577, %v4973
        %v5044 = vadd.f32 %v3579, %v4975
        %v5045 = vadd.f32 %v3582, %v4978
        %v5046 = vadd.f32 %v3584, %v4980
        %v5047 = vadd.f32 %v3587, %v4983
        %v5048 = vadd.f32 %v3589, %v4985
        %v5049 = vadd.f32 %v3592, %v4988
        %v5050 = vadd.f32 %v3594, %v4990
        %v5051 = vadd.f32 %v3597, %v4993
        %v5052 = vadd.f32 %v3599, %v4995
        %v5053 = vadd.f32 %v3602, %v4998
        %v5054 = vadd.f32 %v3604, %v5000
        %v5055 = vadd.f32 %v3607, %v5003
        %v5056 = vadd.f32 %v3609, %v5005
        %v5057 = vadd.f32 %v3612, %v5008
        %v5058 = vadd.f32 %v3614, %v5010
        %v5059 = vadd.f32 %v3617, %v5013
        %v5060 = vadd.f32 %v3619, %v5015
        %v5061 = vadd.f32 %v3622, %v5018
        %v5062 = vadd.f32 %v3624, %v5020
        %v5063 = vadd.f32 %v3627, %v5023
        %v5064 = vadd.f32 %v3629, %v5025
        %v5065 = vadd.f32 %v3632, %v5028
        %v5066 = vadd.f32 %v3634, %v5030
        %v5067 = vadd.f32 %v3637, %v5033
        %v5068 = vadd.f32 %v3639, %v5035
        %v5069 = vld [vmem:[%s4] sm:$0x1]
        %v5071 = vperm.slane %v5069, 0
        %v5073 = vadd.f32 %v5037, %v5071
        %v5074 = vadd.f32 %v5038, %v5071
        %v5075 = vadd.f32 %v5039, %v5071
        %v5076 = vadd.f32 %v5040, %v5071
        %v5077 = vadd.f32 %v5041, %v5071
        %v5078 = vadd.f32 %v5042, %v5071
        %v5079 = vadd.f32 %v5043, %v5071
        %v5080 = vadd.f32 %v5044, %v5071
        %v5081 = vadd.f32 %v5045, %v5071
        %v5082 = vadd.f32 %v5046, %v5071
        %v5083 = vadd.f32 %v5047, %v5071
        %v5084 = vadd.f32 %v5048, %v5071
        %v5085 = vadd.f32 %v5049, %v5071
        %v5086 = vadd.f32 %v5050, %v5071
        %v5087 = vadd.f32 %v5051, %v5071
        %v5088 = vadd.f32 %v5052, %v5071
        %v5089 = vadd.f32 %v5053, %v5071
        %v5090 = vadd.f32 %v5054, %v5071
        %v5091 = vadd.f32 %v5055, %v5071
        %v5092 = vadd.f32 %v5056, %v5071
        %v5093 = vadd.f32 %v5057, %v5071
        %v5094 = vadd.f32 %v5058, %v5071
        %v5095 = vadd.f32 %v5059, %v5071
        %v5096 = vadd.f32 %v5060, %v5071
        %v5097 = vadd.f32 %v5061, %v5071
        %v5098 = vadd.f32 %v5062, %v5071
        %v5099 = vadd.f32 %v5063, %v5071
        %v5100 = vadd.f32 %v5064, %v5071
        %v5101 = vadd.f32 %v5065, %v5071
        %v5102 = vadd.f32 %v5066, %v5071
        %v5103 = vadd.f32 %v5067, %v5071
        %v5104 = vadd.f32 %v5068, %v5071
        %v5105 = vsub.f32 0.0, %v5073
        %v5106 = vsub.f32 0.0, %v5074
        %v5107 = vsub.f32 0.0, %v5075
        %v5108 = vsub.f32 0.0, %v5076
        %v5109 = vsub.f32 0.0, %v5077
        %v5110 = vsub.f32 0.0, %v5078
        %v5111 = vsub.f32 0.0, %v5079
        %v5112 = vsub.f32 0.0, %v5080
        %v5113 = vsub.f32 0.0, %v5081
        %v5114 = vsub.f32 0.0, %v5082
        %v5115 = vsub.f32 0.0, %v5083
        %v5116 = vsub.f32 0.0, %v5084
        %v5117 = vsub.f32 0.0, %v5085
        %v5118 = vsub.f32 0.0, %v5086
        %v5119 = vsub.f32 0.0, %v5087
        %v5120 = vsub.f32 0.0, %v5088
        %v5121 = vsub.f32 0.0, %v5089
        %v5122 = vsub.f32 0.0, %v5090
        %v5123 = vsub.f32 0.0, %v5091
        %v5124 = vsub.f32 0.0, %v5092
        %v5125 = vsub.f32 0.0, %v5093
        %v5126 = vsub.f32 0.0, %v5094
        %v5127 = vsub.f32 0.0, %v5095
        %v5128 = vsub.f32 0.0, %v5096
        %v5129 = vsub.f32 0.0, %v5097
        %v5130 = vsub.f32 0.0, %v5098
        %v5131 = vsub.f32 0.0, %v5099
        %v5132 = vsub.f32 0.0, %v5100
        %v5133 = vsub.f32 0.0, %v5101
        %v5134 = vsub.f32 0.0, %v5102
        %v5135 = vsub.f32 0.0, %v5103
        %v5136 = vsub.f32 0.0, %v5104
        %v5137 = vmul.f32 %v5105, 1.442695
        %v5138 = vpow.pop %v5137
        %v5139 = vmul.f32 %v5106, 1.442695
        %v5140 = vpow.pop %v5139
        %v5141 = vmul.f32 %v5107, 1.442695
        %v5142 = vpow.pop %v5141
        %v5143 = vmul.f32 %v5108, 1.442695
        %v5144 = vpow.pop %v5143
        %v5145 = vmul.f32 %v5109, 1.442695
        %v5146 = vpow.pop %v5145
        %v5147 = vmul.f32 %v5110, 1.442695
        %v5148 = vpow.pop %v5147
        %v5149 = vmul.f32 %v5111, 1.442695
        %v5150 = vpow.pop %v5149
        %v5151 = vmul.f32 %v5112, 1.442695
        %v5152 = vpow.pop %v5151
        %v5153 = vmul.f32 %v5113, 1.442695
        %v5154 = vpow.pop %v5153
        %v5155 = vmul.f32 %v5114, 1.442695
        %v5156 = vpow.pop %v5155
        %v5157 = vmul.f32 %v5115, 1.442695
        %v5158 = vpow.pop %v5157
        %v5159 = vmul.f32 %v5116, 1.442695
        %v5160 = vpow.pop %v5159
        %v5161 = vmul.f32 %v5117, 1.442695
        %v5162 = vpow.pop %v5161
        %v5163 = vmul.f32 %v5118, 1.442695
        %v5164 = vpow.pop %v5163
        %v5165 = vmul.f32 %v5119, 1.442695
        %v5166 = vpow.pop %v5165
        %v5167 = vmul.f32 %v5120, 1.442695
        %v5168 = vpow.pop %v5167
        %v5169 = vmul.f32 %v5121, 1.442695
        %v5170 = vpow.pop %v5169
        %v5171 = vmul.f32 %v5122, 1.442695
        %v5172 = vpow.pop %v5171
        %v5173 = vmul.f32 %v5123, 1.442695
        %v5174 = vpow.pop %v5173
        %v5175 = vmul.f32 %v5124, 1.442695
        %v5176 = vpow.pop %v5175
        %v5177 = vmul.f32 %v5125, 1.442695
        %v5178 = vpow.pop %v5177
        %v5179 = vmul.f32 %v5126, 1.442695
        %v5180 = vpow.pop %v5179
        %v5181 = vmul.f32 %v5127, 1.442695
        %v5182 = vpow.pop %v5181
        %v5183 = vmul.f32 %v5128, 1.442695
        %v5184 = vpow.pop %v5183
        %v5185 = vmul.f32 %v5129, 1.442695
        %v5186 = vpow.pop %v5185
        %v5187 = vmul.f32 %v5130, 1.442695
        %v5188 = vpow.pop %v5187
        %v5189 = vmul.f32 %v5131, 1.442695
        %v5190 = vpow.pop %v5189
        %v5191 = vmul.f32 %v5132, 1.442695
        %v5192 = vpow.pop %v5191
        %v5193 = vmul.f32 %v5133, 1.442695
        %v5194 = vpow.pop %v5193
        %v5195 = vmul.f32 %v5134, 1.442695
        %v5196 = vpow.pop %v5195
        %v5197 = vmul.f32 %v5135, 1.442695
        %v5198 = vpow.pop %v5197
        %v5199 = vmul.f32 %v5136, 1.442695
        %v5200 = vpow.pop %v5199
        %v5201 = vadd.f32 %v5138, 1.0
        %v5202 = vadd.f32 %v5140, 1.0
        %v5203 = vadd.f32 %v5142, 1.0
        %v5204 = vadd.f32 %v5144, 1.0
        %v5205 = vadd.f32 %v5146, 1.0
        %v5206 = vadd.f32 %v5148, 1.0
        %v5207 = vadd.f32 %v5150, 1.0
        %v5208 = vadd.f32 %v5152, 1.0
        %v5209 = vadd.f32 %v5154, 1.0
        %v5210 = vadd.f32 %v5156, 1.0
        %v5211 = vadd.f32 %v5158, 1.0
        %v5212 = vadd.f32 %v5160, 1.0
        %v5213 = vadd.f32 %v5162, 1.0
        %v5214 = vadd.f32 %v5164, 1.0
        %v5215 = vadd.f32 %v5166, 1.0
        %v5216 = vadd.f32 %v5168, 1.0
        %v5217 = vadd.f32 %v5170, 1.0
        %v5218 = vadd.f32 %v5172, 1.0
        %v5219 = vadd.f32 %v5174, 1.0
        %v5220 = vadd.f32 %v5176, 1.0
        %v5221 = vadd.f32 %v5178, 1.0
        %v5222 = vadd.f32 %v5180, 1.0
        %v5223 = vadd.f32 %v5182, 1.0
        %v5224 = vadd.f32 %v5184, 1.0
        %v5225 = vadd.f32 %v5186, 1.0
        %v5226 = vadd.f32 %v5188, 1.0
        %v5227 = vadd.f32 %v5190, 1.0
        %v5228 = vadd.f32 %v5192, 1.0
        %v5229 = vadd.f32 %v5194, 1.0
        %v5230 = vadd.f32 %v5196, 1.0
        %v5231 = vadd.f32 %v5198, 1.0
        %v5232 = vadd.f32 %v5200, 1.0
        %v5233 = vrcp.pop %v5201
        %v5234 = vrcp.pop %v5202
        %v5235 = vrcp.pop %v5203
        %v5236 = vrcp.pop %v5204
        %v5237 = vrcp.pop %v5205
        %v5238 = vrcp.pop %v5206
        %v5239 = vrcp.pop %v5207
        %v5240 = vrcp.pop %v5208
        %v5241 = vrcp.pop %v5209
        %v5242 = vrcp.pop %v5210
        %v5243 = vrcp.pop %v5211
        %v5244 = vrcp.pop %v5212
        %v5245 = vrcp.pop %v5213
        %v5246 = vrcp.pop %v5214
        %v5247 = vrcp.pop %v5215
        %v5248 = vrcp.pop %v5216
        %v5249 = vrcp.pop %v5217
        %v5250 = vrcp.pop %v5218
        %v5251 = vrcp.pop %v5219
        %v5252 = vrcp.pop %v5220
        %v5253 = vrcp.pop %v5221
        %v5254 = vrcp.pop %v5222
        %v5255 = vrcp.pop %v5223
        %v5256 = vrcp.pop %v5224
        %v5257 = vrcp.pop %v5225
        %v5258 = vrcp.pop %v5226
        %v5259 = vrcp.pop %v5227
        %v5260 = vrcp.pop %v5228
        %v5261 = vrcp.pop %v5229
        %v5262 = vrcp.pop %v5230
        %v5263 = vrcp.pop %v5231
        %v5264 = vrcp.pop %v5232
        %v5265 = vmul.f32 %v5073, %v5233
        %v5266 = vmul.f32 %v5074, %v5234
        %v5267 = vmul.f32 %v5075, %v5235
        %v5268 = vmul.f32 %v5076, %v5236
        %v5269 = vmul.f32 %v5077, %v5237
        %v5270 = vmul.f32 %v5078, %v5238
        %v5271 = vmul.f32 %v5079, %v5239
        %v5272 = vmul.f32 %v5080, %v5240
        %v5273 = vmul.f32 %v5081, %v5241
        %v5274 = vmul.f32 %v5082, %v5242
        %v5275 = vmul.f32 %v5083, %v5243
        %v5276 = vmul.f32 %v5084, %v5244
        %v5277 = vmul.f32 %v5085, %v5245
        %v5278 = vmul.f32 %v5086, %v5246
        %v5279 = vmul.f32 %v5087, %v5247
        %v5280 = vmul.f32 %v5088, %v5248
        %v5281 = vmul.f32 %v5089, %v5249
        %v5282 = vmul.f32 %v5090, %v5250
        %v5283 = vmul.f32 %v5091, %v5251
        %v5284 = vmul.f32 %v5092, %v5252
        %v5285 = vmul.f32 %v5093, %v5253
        %v5286 = vmul.f32 %v5094, %v5254
        %v5287 = vmul.f32 %v5095, %v5255
        %v5288 = vmul.f32 %v5096, %v5256
        %v5289 = vmul.f32 %v5097, %v5257
        %v5290 = vmul.f32 %v5098, %v5258
        %v5291 = vmul.f32 %v5099, %v5259
        %v5292 = vmul.f32 %v5100, %v5260
        %v5293 = vmul.f32 %v5101, %v5261
        %v5294 = vmul.f32 %v5102, %v5262
        %v5295 = vmul.f32 %v5103, %v5263
        %v5296 = vmul.f32 %v5104, %v5264
        %v5297 = vadd.f32 %v5265, %v263
        %v5298 = vadd.f32 %v5266, %v264
        %v5299 = vadd.f32 %v5267, %v265
        %v5300 = vadd.f32 %v5268, %v266
        %v5301 = vadd.f32 %v5269, %v267
        %v5302 = vadd.f32 %v5270, %v268
        %v5303 = vadd.f32 %v5271, %v269
        %v5304 = vadd.f32 %v5272, %v270
        %v5305 = vadd.f32 %v5273, %v271
        %v5306 = vadd.f32 %v5274, %v272
        %v5307 = vadd.f32 %v5275, %v273
        %v5308 = vadd.f32 %v5276, %v274
        %v5309 = vadd.f32 %v5277, %v275
        %v5310 = vadd.f32 %v5278, %v276
        %v5311 = vadd.f32 %v5279, %v277
        %v5312 = vadd.f32 %v5280, %v278
        %v5313 = vadd.f32 %v5281, %v279
        %v5314 = vadd.f32 %v5282, %v280
        %v5315 = vadd.f32 %v5283, %v281
        %v5316 = vadd.f32 %v5284, %v282
        %v5317 = vadd.f32 %v5285, %v283
        %v5318 = vadd.f32 %v5286, %v284
        %v5319 = vadd.f32 %v5287, %v285
        %v5320 = vadd.f32 %v5288, %v286
        %v5321 = vadd.f32 %v5289, %v287
        %v5322 = vadd.f32 %v5290, %v288
        %v5323 = vadd.f32 %v5291, %v289
        %v5324 = vadd.f32 %v5292, %v290
        %v5325 = vadd.f32 %v5293, %v291
        %v5326 = vadd.f32 %v5294, %v292
        %v5327 = vadd.f32 %v5295, %v293
        %v5328 = vadd.f32 %v5296, %v294
        %5329 = vst [vmem:[%s261] sm:$0xff] %v5297
        %5330 = vst [vmem:[%s261 + $0x8] sm:$0xff] %v5298
        %5331 = vst [vmem:[%s261 + $0x10] sm:$0xff] %v5299
        %5332 = vst [vmem:[%s261 + $0x18] sm:$0xff] %v5300
        %5333 = vst [vmem:[%s261 + $0x20] sm:$0xff] %v5301
        %5334 = vst [vmem:[%s261 + $0x28] sm:$0xff] %v5302
        %5335 = vst [vmem:[%s261 + $0x30] sm:$0xff] %v5303
        %5336 = vst [vmem:[%s261 + $0x38] sm:$0xff] %v5304
        %5337 = vst [vmem:[%s261 + $0x40] sm:$0xff] %v5305
        %5338 = vst [vmem:[%s261 + $0x48] sm:$0xff] %v5306
        %5339 = vst [vmem:[%s261 + $0x50] sm:$0xff] %v5307
        %5340 = vst [vmem:[%s261 + $0x58] sm:$0xff] %v5308
        %5341 = vst [vmem:[%s261 + $0x60] sm:$0xff] %v5309
        %5342 = vst [vmem:[%s261 + $0x68] sm:$0xff] %v5310
        %5343 = vst [vmem:[%s261 + $0x70] sm:$0xff] %v5311
        %5344 = vst [vmem:[%s261 + $0x78] sm:$0xff] %v5312
        %5345 = vst [vmem:[%s261 + $0x80] sm:$0xff] %v5313
        %5346 = vst [vmem:[%s261 + $0x88] sm:$0xff] %v5314
        %5347 = vst [vmem:[%s261 + $0x90] sm:$0xff] %v5315
        %5348 = vst [vmem:[%s261 + $0x98] sm:$0xff] %v5316
        %5349 = vst [vmem:[%s261 + $0xa0] sm:$0xff] %v5317
        %5350 = vst [vmem:[%s261 + $0xa8] sm:$0xff] %v5318
        %5351 = vst [vmem:[%s261 + $0xb0] sm:$0xff] %v5319
        %5352 = vst [vmem:[%s261 + $0xb8] sm:$0xff] %v5320
        %5353 = vst [vmem:[%s261 + $0xc0] sm:$0xff] %v5321
        %5354 = vst [vmem:[%s261 + $0xc8] sm:$0xff] %v5322
        %5355 = vst [vmem:[%s261 + $0xd0] sm:$0xff] %v5323
        %5356 = vst [vmem:[%s261 + $0xd8] sm:$0xff] %v5324
        %5357 = vst [vmem:[%s261 + $0xe0] sm:$0xff] %v5325
        %5358 = vst [vmem:[%s261 + $0xe8] sm:$0xff] %v5326
        %5359 = vst [vmem:[%s261 + $0xf0] sm:$0xff] %v5327
        %5360 = vst [vmem:[%s261 + $0xf8] sm:$0xff] %v5328
        %s5361 = sand.u32 %s141, 1
        %s5362 = scalar_lea.sflag [#allocation5], %s5361
        %s5363 = sand.u32 %s141, 1
        %s5364 = smul.addr %s5363, 256
        %s5365 = scalar_lea.vmem [#allocation8], %s5364
        // Predicated region
        $region49: #{tpu_custom_call.1} parent=39 // pred_check
          %p5366 = pneg %p151
        $region50: #{tpu_custom_call.1} parent=39 // pred_check_branch
          %5368 = sbr.rel (%p5366) target = $region52
        $region51: #{tpu_custom_call.1} parent=39 // pred_region
          %5370 = vsyncadd %s5362, 0
          %s5371 = smul.addr %s23, 32
          %s5372 = smul.addr %s5371, 8
          %s5373 = scalar_lea.hbm %s5, %s5372
          %s5374 = sshll.u32 %s5365, 4
          %s5375 = int_to_ptr.vmem [resolvable:$true] %s5374
          %s5376 = sshll.u32 %s5373, 4
          %s5377 = int_to_ptr.hbm [resolvable:$true] %s5376
          %5382 = dma.vmem_to_hbm [thread:$0]  %s5375, 4096, %s5377, %s5362, 128, 128, 8
        $region52: #{tpu_custom_call.1} parent=39 // pred_fallthru
          _
      $region40: #{tpu_custom_call.1} parent=5 // pred_fallthru
        _
      %p5383 = scmp.le.s32.totalorder 2, %s18
      // Predicated region
      $region53: #{tpu_custom_call.1} parent=5 // pred_check
        %p5384 = pneg %p5383
      $region54: #{tpu_custom_call.1} parent=5 // pred_check_branch
        %5386 = sbr.rel (%p5384) target = $region56
      $region55: #{tpu_custom_call.1} parent=5 // pred_region
        %s5387 = ssub.s32 %s18, 2
        // Predicated region
        $region57: #{tpu_custom_call.1} parent=55 // pred_check
          %p5388 = pneg %p157
        $region58: #{tpu_custom_call.1} parent=55 // pred_check_branch
          %5390 = sbr.rel (%p5388) target = $region60
        $region59: #{tpu_custom_call.1} parent=55 // pred_region
          %s5391 = sand.u32 %s142, 1
          %s5392 = scalar_lea.sflag [#allocation5], %s5391
          %s5393 = sand.u32 %s142, 1
          %s5394 = smul.addr %s5393, 256
          %s5395 = scalar_lea.vmem [#allocation8], %s5394
          %5397 = dma.done %s5392, 4096
        $region60: #{tpu_custom_call.1} parent=55 // pred_fallthru
          _
      $region56: #{tpu_custom_call.1} parent=5 // pred_fallthru
        _
    $region6: #{tpu_custom_call.1} parent=1 // loop_footer
      %s22 = sadd.s32 1, %s18
    $region7: #{tpu_custom_call.1} parent=1 // loop_footer_branch
      %17 = sbr.rel target = $region3
    $region8: #{tpu_custom_call.1} parent=1 // loop_exit
      _
    %5398 = vsyncpa [#allocation4], 1
    %s5399 = scalar_lea.sflag [#allocation4], 1
    %5400 = vsyncpa %s5399, 1
    %5401 = vsyncpa [#allocation7], 1
    %5402 = vsyncpa [#allocation5], 1
    %s5403 = scalar_lea.sflag [#allocation5], 1
    %5404 = vsyncpa %s5403, 1

</llo_original>
